<compile_context>
chip_gen: v7x
topology: tpu7x:2x2x1
jax: 0.10.0
libtpu: 0.0.40
codegen_flags: <defaults>
</compile_context>

<pallas_src>
import math
import functools

import jax
import jax.numpy as jnp
from jax import lax
from jax.experimental import pallas as pl
from jax.experimental.pallas import tpu as pltpu


_VMEM_LIMIT = 48 * 1024 * 1024  # explicit budget; safe on v5e/v6e/v7x


# ----------------------------- in-kernel helpers -----------------------------

def _layernorm(x, w, b, eps=1e-5):
    # x: (N, C) f32, w/b: (1, C) f32 -- matches torch.nn.LayerNorm(C), eps=1e-5
    mu = jnp.mean(x, axis=-1, keepdims=True)
    var = jnp.mean((x - mu) ** 2, axis=-1, keepdims=True)
    return (x - mu) * lax.rsqrt(var + eps) * w + b


def _erf(x):
    # Abramowitz & Stegun 7.1.26, |err| < 1.5e-7 (f32 resolution); realizes
    # torch.nn.GELU() (exact erf form) with ops guaranteed to lower on TPU.
    a1, a2, a3, a4, a5 = 0.254829592, -0.284496736, 1.421413741, -1.453152027, 1.061405429
    p = 0.3275911
    sgn = jnp.where(x >= 0.0, 1.0, -1.0).astype(x.dtype)
    ax = jnp.abs(x)
    t = 1.0 / (1.0 + p * ax)
    poly = ((((a5 * t + a4) * t + a3) * t + a2) * t + a1) * t
    return sgn * (1.0 - poly * jnp.exp(-ax * ax))


def _gelu_exact(x):
    return 0.5 * x * (1.0 + _erf(x * (1.0 / math.sqrt(2.0))))


# ------------------------------- Pallas kernels -------------------------------

def ln_qkv_kernel(x_ref, ln1w_ref, ln1b_ref, wqkv_ref, bqkv_ref, o_ref):
    # rows grid: LN1 -> fused q|k|v projection (bf16 out for the MXU downstream)
    h = _layernorm(x_ref[...], ln1w_ref[...], ln1b_ref[...])
    y = jnp.dot(h.astype(jnp.bfloat16), wqkv_ref[...],
                preferred_element_type=jnp.float32) + bqkv_ref[...]
    o_ref[...] = y.astype(jnp.bfloat16)


def attention_kernel(q_ref, k_ref, v_ref, o_ref, m_ref, l_ref, acc_ref):
    # flash-style causal attention; grid = (batch, q_tiles, kv_tiles)
    qi = pl.program_id(1)
    ki = pl.program_id(2)
    nk = pl.num_programs(2)

    @pl.when(ki == 0)
    def _():
        m_ref[...] = jnp.full_like(m_ref, -jnp.inf)
        l_ref[...] = jnp.zeros_like(l_ref)
        acc_ref[...] = jnp.zeros_like(acc_ref)

    q = q_ref[0]                    # (H, TQ, hd) bf16
    k = k_ref[0]                    # (H, TK, hd) bf16
    v = v_ref[0]
    _, tq, hd = q.shape
    tk = k.shape[1]
    scale = 1.0 / math.sqrt(hd)

    s = jnp.einsum('htd,hsd->hts', q, k,
                   preferred_element_type=jnp.float32) * scale
    row = qi * tq + lax.broadcasted_iota(jnp.int32, (tq, tk), 0)
    col = ki * tk + lax.broadcasted_iota(jnp.int32, (tq, tk), 1)
    s = jnp.where((row >= col)[None, :, :], s, -jnp.inf)

    m_prev = m_ref[...]
    m_new = jnp.maximum(m_prev, jnp.max(s, axis=-1, keepdims=True))
    alpha = jnp.exp(m_prev - m_new)                 # 0 at first step (m_prev=-inf)
    p = jnp.exp(s - m_new)                          # f32 softmax numerator
    l_ref[...] = alpha * l_ref[...] + jnp.sum(p, axis=-1, keepdims=True)
    acc_ref[...] = alpha * acc_ref[...] + jnp.einsum(
        'hts,hsd->htd', p.astype(v.dtype), v,
        preferred_element_type=jnp.float32)
    m_ref[...] = m_new

    @pl.when(ki == nk - 1)
    def _():
        o_ref[0] = (acc_ref[...] / l_ref[...]).astype(o_ref.dtype)


def proj_mlp_kernel(x_ref, att_ref, wp_ref, bp_ref, ln2w_ref, ln2b_ref,
                    w1_ref, b1_ref, w2_ref, b2_ref, o_ref,
                    xres_ref, h2_ref, acc_ref):
    # grid = (row_tiles, hidden_tiles); hidden (4C) axis is a K-tiled reduction.
    j = pl.program_id(1)
    nj = pl.num_programs(1)

    @pl.when(j == 0)
    def _():
        # attention output projection + residual, then LN2 (f32), cached in VMEM
        proj = jnp.dot(att_ref[...], wp_ref[...],
                       preferred_element_type=jnp.float32) + bp_ref[...]
        xres = x_ref[...] + proj
        xres_ref[...] = xres
        h2_ref[...] = _layernorm(xres, ln2w_ref[...], ln2b_ref[...]).astype(jnp.bfloat16)
        acc_ref[...] = jnp.zeros_like(acc_ref)

    h = jnp.dot(h2_ref[...], w1_ref[...],
                preferred_element_type=jnp.float32) + b1_ref[...]
    h = _gelu_exact(h)                              # f32 elementwise
    acc_ref[...] += jnp.dot(h.astype(jnp.bfloat16), w2_ref[...],
                            preferred_element_type=jnp.float32)

    @pl.when(j == nj - 1)
    def _():
        o_ref[...] = xres_ref[...] + acc_ref[...] + b2_ref[...]


def head_kernel(x_ref, lnw_ref, lnb_ref, wh_ref, o_ref):
    h = _layernorm(x_ref[...], lnw_ref[...], lnb_ref[...])
    o_ref[...] = jnp.dot(h.astype(jnp.bfloat16), wh_ref[...],
                         preferred_element_type=jnp.float32)


# ------------------------------- tiling helpers -------------------------------

def _round_up(x, m):
    return ((x + m - 1) // m) * m


def _row_tiling(rows, target):
    tm = min(target, rows)
    if tm < rows:
        tm = max(16, (tm // 16) * 16)      # bf16 blocks want 16-row multiples
        if tm > rows:
            tm = rows
    return tm, _round_up(rows, tm)


def _pick_tile(total, target, mult):
    t = min(target, total)
    if t == total:
        return total
    t = max(mult, (t // mult) * mult)
    if t >= total or total % t != 0:
        return total
    return t


def _pad_rows(a, rows_padded):
    r = a.shape[0]
    if r == rows_padded:
        return a
    return jnp.pad(a, ((0, rows_padded - r), (0, 0)))


# ------------------------------- kernel wrappers -------------------------------

def run_ln_qkv(x, ln1w, ln1b, wqkv, bqkv, tm):
    rp, c = x.shape
    c3 = wqkv.shape[1]
    return pl.pallas_call(
        ln_qkv_kernel,
        out_shape=jax.ShapeDtypeStruct((rp, c3), jnp.bfloat16),
        grid=(rp // tm,),
        in_specs=[
            pl.BlockSpec((tm, c), lambda i: (i, 0)),
            pl.BlockSpec((1, c), lambda i: (0, 0)),
            pl.BlockSpec((1, c), lambda i: (0, 0)),
            pl.BlockSpec((c, c3), lambda i: (0, 0)),
            pl.BlockSpec((1, c3), lambda i: (0, 0)),
        ],
        out_specs=pl.BlockSpec((tm, c3), lambda i: (i, 0)),
        compiler_params=pltpu.CompilerParams(
            dimension_semantics=("parallel",),
            vmem_limit_bytes=_VMEM_LIMIT),
    )(x, ln1w, ln1b, wqkv, bqkv)


def run_attention(q, k, v, q_tile, kv_tile):
    b, h, t, hd = q.shape
    tq = _pick_tile(t, q_tile, 16)
    tk = _pick_tile(t, kv_tile, 16)
    return pl.pallas_call(
        attention_kernel,
        out_shape=jax.ShapeDtypeStruct((b, h, t, hd), jnp.bfloat16),
        grid=(b, t // tq, t // tk),
        in_specs=[
            pl.BlockSpec((1, h, tq, hd), lambda bi, qi, ki: (bi, 0, qi, 0)),
            pl.BlockSpec((1, h, tk, hd), lambda bi, qi, ki: (bi, 0, ki, 0)),
            pl.BlockSpec((1, h, tk, hd), lambda bi, qi, ki: (bi, 0, ki, 0)),
        ],
        out_specs=pl.BlockSpec((1, h, tq, hd), lambda bi, qi, ki: (bi, 0, qi, 0)),
        scratch_shapes=[
            pltpu.VMEM((h, tq, 1), jnp.float32),     # running max
            pltpu.VMEM((h, tq, 1), jnp.float32),     # running denom
            pltpu.VMEM((h, tq, hd), jnp.float32),    # running numerator
        ],
        compiler_params=pltpu.CompilerParams(
            dimension_semantics=("parallel", "parallel", "arbitrary"),
            vmem_limit_bytes=_VMEM_LIMIT),
    )(q, k, v)


def run_proj_mlp(x, att, wp, bp, ln2w, ln2b, w1, b1, w2, b2, tm, mlp_tile):
    rp, c = x.shape
    h4 = w1.shape[1]
    th = _pick_tile(h4, mlp_tile, 128)
    return pl.pallas_call(
        proj_mlp_kernel,
        out_shape=jax.ShapeDtypeStruct((rp, c), jnp.float32),
        grid=(rp // tm, h4 // th),
        in_specs=[
            pl.BlockSpec((tm, c), lambda i, j: (i, 0)),    # residual stream (f32)
            pl.BlockSpec((tm, c), lambda i, j: (i, 0)),    # attn out (bf16)
            pl.BlockSpec((c, c), lambda i, j: (0, 0)),     # proj W
            pl.BlockSpec((1, c), lambda i, j: (0, 0)),     # proj b
            pl.BlockSpec((1, c), lambda i, j: (0, 0)),     # ln2 w
            pl.BlockSpec((1, c), lambda i, j: (0, 0)),     # ln2 b
            pl.BlockSpec((c, th), lambda i, j: (0, j)),    # fc1 W (hidden-tiled)
            pl.BlockSpec((1, th), lambda i, j: (0, j)),    # fc1 b
            pl.BlockSpec((th, c), lambda i, j: (j, 0)),    # fc2 W (hidden-tiled)
            pl.BlockSpec((1, c), lambda i, j: (0, 0)),     # fc2 b
        ],
        out_specs=pl.BlockSpec((tm, c), lambda i, j: (i, 0)),
        scratch_shapes=[
            pltpu.VMEM((tm, c), jnp.float32),     # x + attn-proj residual
            pltpu.VMEM((tm, c), jnp.bfloat16),    # LN2(x) matmul operand
            pltpu.VMEM((tm, c), jnp.float32),     # MLP accumulator
        ],
        input_output_aliases={0: 0},              # residual stream updated in place
        compiler_params=pltpu.CompilerParams(
            dimension_semantics=("parallel", "arbitrary"),
            vmem_limit_bytes=_VMEM_LIMIT),
    )(x, att, wp, bp, ln2w, ln2b, w1, b1, w2, b2)


def run_head(x, lnw, lnb, wh, tm):
    rp, c = x.shape
    vp = wh.shape[1]
    return pl.pallas_call(
        head_kernel,
        out_shape=jax.ShapeDtypeStruct((rp, vp), jnp.float32),
        grid=(rp // tm,),
        in_specs=[
            pl.BlockSpec((tm, c), lambda i: (i, 0)),
            pl.BlockSpec((1, c), lambda i: (0, 0)),
            pl.BlockSpec((1, c), lambda i: (0, 0)),
            pl.BlockSpec((c, vp), lambda i: (0, 0)),
        ],
        out_specs=pl.BlockSpec((tm, vp), lambda i: (i, 0)),
        compiler_params=pltpu.CompilerParams(
            dimension_semantics=("parallel",),
            vmem_limit_bytes=_VMEM_LIMIT),
    )(x, lnw, lnb, wh)


# ------------------------------- forward pass -------------------------------

def gpt_forward(idx, params, *, n_head, vocab_size,
                row_tile=256, q_tile=256, kv_tile=256, mlp_tile=512):
    bsz, t = idx.shape
    c = params['tok_emb'].shape[1]
    hd = c // n_head
    assert t <= params['pos_emb'].shape[1], "block size exhausted"

    # token-embedding gather + positional add in plain JAX.
    # TODO(synk): no clean Pallas gather path for the embedding lookup.
    tok = jnp.take(params['tok_emb'], idx, axis=0)              # (B, T, C)
    x = tok + params['pos_emb'][:, :t, :]                       # embd_pdrop = 0.0

    rows = bsz * t
    tm, rows_p = _row_tiling(rows, row_tile)
    xf = _pad_rows(x.reshape(rows, c), rows_p)                  # (Rp, C) f32

    def to_heads(a):   # (R, C) -> (B, H, T, hd)
        return a.reshape(bsz, t, n_head, hd).transpose(0, 2, 1, 3)

    for blk in params['blocks']:
        (ln1w, ln1b, wqkv, bqkv, wp, bp, ln2w, ln2b, w1, b1, w2, b2) = blk
        qkv = run_ln_qkv(xf, ln1w, ln1b, wqkv, bqkv, tm)[:rows]     # (R, 3C) bf16
        q, k, v = qkv[:, :c], qkv[:, c:2 * c], qkv[:, 2 * c:]
        att = run_attention(to_heads(q), to_heads(k), to_heads(v),
                            q_tile, kv_tile)                        # (B,H,T,hd) bf16
        att = att.transpose(0, 2, 1, 3).reshape(rows, c)            # (R, C) bf16
        att = _pad_rows(att, rows_p)
        xf = run_proj_mlp(xf, att, wp, bp, ln2w, ln2b, w1, b1, w2, b2,
                          tm, mlp_tile)                             # (Rp, C) f32

    logits = run_head(xf, params['ln_f_w'], params['ln_f_b'],
                      params['head_w'], tm)                         # (Rp, Vpad) f32
    logits = logits[:rows, :vocab_size].reshape(bsz, t, vocab_size)
    # TODO(synk): cross-entropy loss path (targets is not None) not implemented;
    # reference forward is exercised with targets=None.
    return logits, None


# ------------------------------- param init -------------------------------

def init_params(key, vocab_size, block_size, n_layer, n_head, n_embd):
    c = n_embd

    def nrm(k, shape):
        return 0.02 * jax.random.normal(k, shape, jnp.float32)   # N(0, 0.02)

    keys = jax.random.split(key, 2 + n_layer)
    vpad = _round_up(vocab_size, 128)                            # lane-dense head
    head_w = jnp.pad(nrm(keys[1], (c, vocab_size)),
                     ((0, 0), (0, vpad - vocab_size))).astype(jnp.bfloat16)

    params = {
        'tok_emb': nrm(keys[0], (vocab_size, c)),
        'pos_emb': jnp.zeros((1, block_size, c), jnp.float32),
        'ln_f_w': jnp.ones((1, c), jnp.float32),
        'ln_f_b': jnp.zeros((1, c), jnp.float32),
        'head_w': head_w,                                        # (C, Vpad) bf16, no bias
        'blocks': [],
    }
    for li in range(n_layer):
        bk = jax.random.split(keys[2 + li], 6)
        ones = jnp.ones((1, c), jnp.float32)
        zeros = jnp.zeros((1, c), jnp.float32)
        wqkv = jnp.concatenate([nrm(bk[0], (c, c)), nrm(bk[1], (c, c)),
                                nrm(bk[2], (c, c))], axis=1).astype(jnp.bfloat16)
        blk = (
            ones, zeros,                                          # ln1
            wqkv, jnp.zeros((1, 3 * c), jnp.float32),             # fused q|k|v
            nrm(bk[3], (c, c)).astype(jnp.bfloat16), zeros,       # attn proj
            ones, zeros,                                          # ln2
            nrm(bk[4], (c, 4 * c)).astype(jnp.bfloat16),          # mlp fc1
            jnp.zeros((1, 4 * c), jnp.float32),
            nrm(bk[5], (4 * c, c)).astype(jnp.bfloat16), zeros,   # mlp fc2
        )
        params['blocks'].append(blk)
    return params


# ------------------------------- main -------------------------------

if __name__ == "__main__":
    VOCAB = 64
    BLOCK_SIZE = 32
    N_LAYER = 2
    N_HEAD = 4
    N_EMBD = 64
    B, T = 2, 32

    root = jax.random.PRNGKey(0)
    k_params, k_idx = jax.random.split(root)
    params = init_params(k_params, VOCAB, BLOCK_SIZE, N_LAYER, N_HEAD, N_EMBD)
    idx = jax.random.randint(k_idx, (B, T), 0, VOCAB, dtype=jnp.int32)

    # Small tiles so this demo exercises multi-step grids (4 row tiles,
    # 2x2 q/kv tiles in the flash loop, 2 hidden K-tiles in the MLP).
    # Production sizing: row_tile=256, q_tile=kv_tile=128..512, mlp_tile=512.
    fwd = jax.jit(functools.partial(
        gpt_forward, n_head=N_HEAD, vocab_size=VOCAB,
        row_tile=16, q_tile=16, kv_tile=16, mlp_tile=128))

    logits, loss = fwd(idx, params)
    logits = jax.block_until_ready(logits)

    assert logits.shape == (B, T, VOCAB), logits.shape
    assert loss is None
    assert bool(jnp.all(jnp.isfinite(logits)))
    print("KERNEL_OK")
</pallas_src>

<mosaic_0001>
module attributes {stable_mosaic.version = 11 : i64} {
  func.func @ln_qkv_kernel(%arg0: i32, %arg1: memref<16x64xf32, #tpu.memory_space<vmem>>, %arg2: memref<1x64xf32, #tpu.memory_space<vmem>>, %arg3: memref<1x64xf32, #tpu.memory_space<vmem>>, %arg4: memref<64x192xbf16, #tpu.memory_space<vmem>>, %arg5: memref<1x192xf32, #tpu.memory_space<vmem>>, %arg6: memref<16x192xbf16, #tpu.memory_space<vmem>>) attributes {dimension_semantics = [#tpu.dimension_semantics<parallel>], iteration_bounds = array<i64: 4>, scalar_prefetch = 0 : i64, scratch_operands = 0 : i64, tpu.core_type = #tpu.core_type<tc>, window_params = [{transform_indices = @transform_0, window_bounds = array<i64: 16, 64>}, {pipeline_mode = #tpu.pipeline_mode<synchronous>, transform_indices = @transform_1, window_bounds = array<i64: 1, 64>}, {pipeline_mode = #tpu.pipeline_mode<synchronous>, transform_indices = @transform_2, window_bounds = array<i64: 1, 64>}, {pipeline_mode = #tpu.pipeline_mode<synchronous>, transform_indices = @transform_3, window_bounds = array<i64: 64, 192>}, {pipeline_mode = #tpu.pipeline_mode<synchronous>, transform_indices = @transform_4, window_bounds = array<i64: 1, 192>}, {transform_indices = @transform_5, window_bounds = array<i64: 16, 192>}]} {
    %c0 = arith.constant 0 : index
    %c0_0 = arith.constant 0 : index
    %0 = vector.load %arg1[%c0, %c0_0] : memref<16x64xf32, #tpu.memory_space<vmem>>, vector<16x64xf32>
    %c0_1 = arith.constant 0 : index
    %c0_2 = arith.constant 0 : index
    %1 = vector.load %arg2[%c0_1, %c0_2] : memref<1x64xf32, #tpu.memory_space<vmem>>, vector<1x64xf32>
    %c0_3 = arith.constant 0 : index
    %c0_4 = arith.constant 0 : index
    %2 = vector.load %arg3[%c0_3, %c0_4] : memref<1x64xf32, #tpu.memory_space<vmem>>, vector<1x64xf32>
    %cst = arith.constant dense<0.000000e+00> : vector<16xf32>
    %3 = vector.multi_reduction <add>, %0, %cst [1] : vector<16x64xf32> to vector<16xf32>
    %4 = vector.shape_cast %3 : vector<16xf32> to vector<16x1xf32>
    %cst_5 = arith.constant 6.400000e+01 : f32
    %5 = vector.broadcast %cst_5 : f32 to vector<16x1xf32>
    %6 = arith.divf %4, %5 : vector<16x1xf32>
    %7 = vector.broadcast %6 : vector<16x1xf32> to vector<16x64xf32>
    %8 = arith.subf %0, %7 : vector<16x64xf32>
    %9 = arith.mulf %8, %8 : vector<16x64xf32>
    %cst_6 = arith.constant dense<0.000000e+00> : vector<16xf32>
    %10 = vector.multi_reduction <add>, %9, %cst_6 [1] : vector<16x64xf32> to vector<16xf32>
    %11 = vector.shape_cast %10 : vector<16xf32> to vector<16x1xf32>
    %cst_7 = arith.constant 6.400000e+01 : f32
    %12 = vector.broadcast %cst_7 : f32 to vector<16x1xf32>
    %13 = arith.divf %11, %12 : vector<16x1xf32>
    %14 = vector.broadcast %6 : vector<16x1xf32> to vector<16x64xf32>
    %15 = arith.subf %0, %14 : vector<16x64xf32>
    %cst_8 = arith.constant 9.99999974E-6 : f32
    %16 = vector.broadcast %cst_8 : f32 to vector<16x1xf32>
    %17 = arith.addf %13, %16 : vector<16x1xf32>
    %18 = math.rsqrt %17 : vector<16x1xf32>
    %19 = vector.broadcast %18 : vector<16x1xf32> to vector<16x64xf32>
    %20 = arith.mulf %15, %19 : vector<16x64xf32>
    %21 = vector.broadcast %1 : vector<1x64xf32> to vector<16x64xf32>
    %22 = arith.mulf %20, %21 : vector<16x64xf32>
    %23 = vector.broadcast %2 : vector<1x64xf32> to vector<16x64xf32>
    %24 = arith.addf %22, %23 : vector<16x64xf32>
    %25 = arith.truncf %24 : vector<16x64xf32> to vector<16x64xbf16>
    %c0_9 = arith.constant 0 : index
    %c0_10 = arith.constant 0 : index
    %26 = vector.load %arg4[%c0_9, %c0_10] : memref<64x192xbf16, #tpu.memory_space<vmem>>, vector<64x192xbf16>
    %cst_11 = arith.constant dense<0.000000e+00> : vector<16x192xf32>
    %27 = tpu.matmul %25, %26, %cst_11 {dimension_numbers = #tpu.dot_dimension_numbers<[1], [0], [0], [1], [0, 0, 1, 1], [], []>} : vector<16x64xbf16>, vector<64x192xbf16>, vector<16x192xf32> -> vector<16x192xf32>
    %c0_12 = arith.constant 0 : index
    %c0_13 = arith.constant 0 : index
    %28 = vector.load %arg5[%c0_12, %c0_13] : memref<1x192xf32, #tpu.memory_space<vmem>>, vector<1x192xf32>
    %29 = vector.broadcast %28 : vector<1x192xf32> to vector<16x192xf32>
    %30 = arith.addf %27, %29 : vector<16x192xf32>
    %31 = arith.truncf %30 : vector<16x192xf32> to vector<16x192xbf16>
    %c0_14 = arith.constant 0 : index
    %c0_15 = arith.constant 0 : index
    %32 = vector.load %arg6[%c0_14, %c0_15] : memref<16x192xbf16, #tpu.memory_space<vmem>>, vector<16x192xbf16>
    tpu.vector_store %arg6[%c0_14, %c0_15], %31 {strides = array<i32>} : memref<16x192xbf16, #tpu.memory_space<vmem>>, vector<16x192xbf16>,
    return
  }
  func.func @transform_0(%arg0: i32) -> (i32, i32) {
    %c0_i32 = arith.constant 0 : i32
    %c0_i32_0 = arith.constant 0 : i32
    return %arg0, %c0_i32 : i32, i32
  }
  func.func @transform_1(%arg0: i32) -> (i32, i32) {
    %c0_i32 = arith.constant 0 : i32
    %c0_i32_0 = arith.constant 0 : i32
    %c0_i32_1 = arith.constant 0 : i32
    return %c0_i32, %c0_i32_0 : i32, i32
  }
  func.func @transform_2(%arg0: i32) -> (i32, i32) {
    %c0_i32 = arith.constant 0 : i32
    %c0_i32_0 = arith.constant 0 : i32
    %c0_i32_1 = arith.constant 0 : i32
    return %c0_i32, %c0_i32_0 : i32, i32
  }
  func.func @transform_3(%arg0: i32) -> (i32, i32) {
    %c0_i32 = arith.constant 0 : i32
    %c0_i32_0 = arith.constant 0 : i32
    %c0_i32_1 = arith.constant 0 : i32
    return %c0_i32, %c0_i32_0 : i32, i32
  }
  func.func @transform_4(%arg0: i32) -> (i32, i32) {
    %c0_i32 = arith.constant 0 : i32
    %c0_i32_0 = arith.constant 0 : i32
    %c0_i32_1 = arith.constant 0 : i32
    return %c0_i32, %c0_i32_0 : i32, i32
  }
  func.func @transform_5(%arg0: i32) -> (i32, i32) {
    %c0_i32 = arith.constant 0 : i32
    %c0_i32_0 = arith.constant 0 : i32
    return %arg0, %c0_i32 : i32, i32
  }
}

module attributes {stable_mosaic.version = 11 : i64} {
  func.func @attention_kernel(%arg0: i32, %arg1: i32, %arg2: i32, %arg3: memref<1x4x16x16xbf16, #tpu.memory_space<vmem>>, %arg4: memref<1x4x16x16xbf16, #tpu.memory_space<vmem>>, %arg5: memref<1x4x16x16xbf16, #tpu.memory_space<vmem>>, %arg6: memref<1x4x16x16xbf16, #tpu.memory_space<vmem>>, %arg7: memref<4x16x1xf32, #tpu.memory_space<vmem>>, %arg8: memref<4x16x1xf32, #tpu.memory_space<vmem>>, %arg9: memref<4x16x16xf32, #tpu.memory_space<vmem>>) attributes {dimension_semantics = [#tpu.dimension_semantics<parallel>, #tpu.dimension_semantics<parallel>, #tpu.dimension_semantics<arbitrary>], iteration_bounds = array<i64: 2, 2, 2>, scalar_prefetch = 0 : i64, scratch_operands = 3 : i64, tpu.core_type = #tpu.core_type<tc>, window_params = [{transform_indices = @transform_0, window_bounds = array<i64: 1, 4, 16, 16>}, {transform_indices = @transform_1, window_bounds = array<i64: 1, 4, 16, 16>}, {transform_indices = @transform_2, window_bounds = array<i64: 1, 4, 16, 16>}, {transform_indices = @transform_3, window_bounds = array<i64: 1, 4, 16, 16>}]} {
    %c0_i32 = arith.constant 0 : i32
    %0 = arith.cmpi eq, %arg2, %c0_i32 : i32
    %1 = arith.extui %0 : i1 to i32
    %c0_i32_0 = arith.constant 0 : i32
    %2 = arith.cmpi ne, %1, %c0_i32_0 : i32
    scf.if %2 {
      %cst_37 = arith.constant 0xFF800000 : f32
      %52 = vector.broadcast %cst_37 : f32 to vector<4x16x1xf32>
      %c0_38 = arith.constant 0 : index
      %c0_39 = arith.constant 0 : index
      %c0_40 = arith.constant 0 : index
      %53 = vector.load %arg7[%c0_38, %c0_39, %c0_40] : memref<4x16x1xf32, #tpu.memory_space<vmem>>, vector<4x16x1xf32>
      tpu.vector_store %arg7[%c0_38, %c0_39, %c0_40], %52 {strides = array<i32>} : memref<4x16x1xf32, #tpu.memory_space<vmem>>, vector<4x16x1xf32>,
      %cst_41 = arith.constant 0.000000e+00 : f32
      %54 = vector.broadcast %cst_41 : f32 to vector<4x16x1xf32>
      %c0_42 = arith.constant 0 : index
      %c0_43 = arith.constant 0 : index
      %c0_44 = arith.constant 0 : index
      %55 = vector.load %arg8[%c0_42, %c0_43, %c0_44] : memref<4x16x1xf32, #tpu.memory_space<vmem>>, vector<4x16x1xf32>
      tpu.vector_store %arg8[%c0_42, %c0_43, %c0_44], %54 {strides = array<i32>} : memref<4x16x1xf32, #tpu.memory_space<vmem>>, vector<4x16x1xf32>,
      %cst_45 = arith.constant 0.000000e+00 : f32
      %56 = vector.broadcast %cst_45 : f32 to vector<4x16x16xf32>
      %c0_46 = arith.constant 0 : index
      %c0_47 = arith.constant 0 : index
      %c0_48 = arith.constant 0 : index
      %57 = vector.load %arg9[%c0_46, %c0_47, %c0_48] : memref<4x16x16xf32, #tpu.memory_space<vmem>>, vector<4x16x16xf32>
      tpu.vector_store %arg9[%c0_46, %c0_47, %c0_48], %56 {strides = array<i32>} : memref<4x16x16xf32, #tpu.memory_space<vmem>>, vector<4x16x16xf32>,
    } else {
    }
    %c0 = arith.constant 0 : index
    %c0_1 = arith.constant 0 : index
    %c0_2 = arith.constant 0 : index
    %c0_3 = arith.constant 0 : index
    %3 = vector.load %arg3[%c0, %c0_1, %c0_2, %c0_3] : memref<1x4x16x16xbf16, #tpu.memory_space<vmem>>, vector<1x4x16x16xbf16>
    %4 = vector.shape_cast %3 : vector<1x4x16x16xbf16> to vector<4x16x16xbf16>
    %c0_4 = arith.constant 0 : index
    %c0_5 = arith.constant 0 : index
    %c0_6 = arith.constant 0 : index
    %c0_7 = arith.constant 0 : index
    %5 = vector.load %arg4[%c0_4, %c0_5, %c0_6, %c0_7] : memref<1x4x16x16xbf16, #tpu.memory_space<vmem>>, vector<1x4x16x16xbf16>
    %6 = vector.shape_cast %5 : vector<1x4x16x16xbf16> to vector<4x16x16xbf16>
    %c0_8 = arith.constant 0 : index
    %c0_9 = arith.constant 0 : index
    %c0_10 = arith.constant 0 : index
    %c0_11 = arith.constant 0 : index
    %7 = vector.load %arg5[%c0_8, %c0_9, %c0_10, %c0_11] : memref<1x4x16x16xbf16, #tpu.memory_space<vmem>>, vector<1x4x16x16xbf16>
    %8 = vector.shape_cast %7 : vector<1x4x16x16xbf16> to vector<4x16x16xbf16>
    "tpu.trace_start"() <{level = 10 : i32, message = "htd,hsd->hts"}> : () -> ()
    %cst = arith.constant dense<0.000000e+00> : vector<4x16x16xf32>
    %9 = tpu.matmul %4, %6, %cst {dimension_numbers = #tpu.dot_dimension_numbers<[2], [2], [1], [1], [0, 0, 0, 1, 1, 1], [0], [0]>} : vector<4x16x16xbf16>, vector<4x16x16xbf16>, vector<4x16x16xf32> -> vector<4x16x16xf32>
    "tpu.trace_stop"() : () -> ()
    %cst_12 = arith.constant 2.500000e-01 : f32
    %10 = vector.broadcast %cst_12 : f32 to vector<4x16x16xf32>
    %11 = arith.mulf %9, %10 : vector<4x16x16xf32>
    %c16_i32 = arith.constant 16 : i32
    %12 = arith.muli %arg1, %c16_i32 : i32
    %13 = tpu.iota {dimensions = array<i32: 0>} : vector<16x16xi32>
    %14 = vector.broadcast %12 : i32 to vector<16x16xi32>
    %15 = arith.addi %14, %13 : vector<16x16xi32>
    %c16_i32_13 = arith.constant 16 : i32
    %16 = arith.muli %arg2, %c16_i32_13 : i32
    %17 = tpu.iota {dimensions = array<i32: 1>} : vector<16x16xi32>
    %18 = vector.broadcast %16 : i32 to vector<16x16xi32>
    %19 = arith.addi %18, %17 : vector<16x16xi32>
    %20 = arith.cmpi sge, %15, %19 : vector<16x16xi32>
    %21 = vector.shape_cast %20 : vector<16x16xi1> to vector<1x16x16xi1>
    %cst_14 = arith.constant 0xFF800000 : f32
    %22 = vector.shape_cast %21 : vector<1x16x16xi1> to vector<1x16x16xi1>
    %23 = vector.broadcast %22 : vector<1x16x16xi1> to vector<4x16x16xi1>
    %24 = vector.broadcast %cst_14 : f32 to vector<4x16x16xf32>
    %25 = arith.select %23, %11, %24 : vector<4x16x16xi1>, vector<4x16x16xf32>
    %c0_15 = arith.constant 0 : index
    %c0_16 = arith.constant 0 : index
    %c0_17 = arith.constant 0 : index
    %26 = vector.load %arg7[%c0_15, %c0_16, %c0_17] : memref<4x16x1xf32, #tpu.memory_space<vmem>>, vector<4x16x1xf32>
    %cst_18 = arith.constant dense<0xFF800000> : vector<4x16xf32>
    %27 = vector.multi_reduction <maximumf>, %25, %cst_18 [2] : vector<4x16x16xf32> to vector<4x16xf32>
    %28 = vector.shape_cast %27 : vector<4x16xf32> to vector<4x16x1xf32>
    %29 = arith.maximumf %26, %28 : vector<4x16x1xf32>
    %30 = arith.subf %26, %29 : vector<4x16x1xf32>
    %31 = math.exp %30 : vector<4x16x1xf32>
    %32 = vector.broadcast %29 : vector<4x16x1xf32> to vector<4x16x16xf32>
    %33 = arith.subf %25, %32 : vector<4x16x16xf32>
    %34 = math.exp %33 : vector<4x16x16xf32>
    %c0_19 = arith.constant 0 : index
    %c0_20 = arith.constant 0 : index
    %c0_21 = arith.constant 0 : index
    %35 = vector.load %arg8[%c0_19, %c0_20, %c0_21] : memref<4x16x1xf32, #tpu.memory_space<vmem>>, vector<4x16x1xf32>
    %36 = arith.mulf %31, %35 : vector<4x16x1xf32>
    %cst_22 = arith.constant dense<0.000000e+00> : vector<4x16xf32>
    %37 = vector.multi_reduction <add>, %34, %cst_22 [2] : vector<4x16x16xf32> to vector<4x16xf32>
    %38 = vector.shape_cast %37 : vector<4x16xf32> to vector<4x16x1xf32>
    %39 = arith.addf %36, %38 : vector<4x16x1xf32>
    %c0_23 = arith.constant 0 : index
    %c0_24 = arith.constant 0 : index
    %c0_25 = arith.constant 0 : index
    %40 = vector.load %arg8[%c0_23, %c0_24, %c0_25] : memref<4x16x1xf32, #tpu.memory_space<vmem>>, vector<4x16x1xf32>
    tpu.vector_store %arg8[%c0_23, %c0_24, %c0_25], %39 {strides = array<i32>} : memref<4x16x1xf32, #tpu.memory_space<vmem>>, vector<4x16x1xf32>,
    %c0_26 = arith.constant 0 : index
    %c0_27 = arith.constant 0 : index
    %c0_28 = arith.constant 0 : index
    %41 = vector.load %arg9[%c0_26, %c0_27, %c0_28] : memref<4x16x16xf32, #tpu.memory_space<vmem>>, vector<4x16x16xf32>
    %42 = vector.broadcast %31 : vector<4x16x1xf32> to vector<4x16x16xf32>
    %43 = arith.mulf %42, %41 : vector<4x16x16xf32>
    %44 = arith.truncf %34 : vector<4x16x16xf32> to vector<4x16x16xbf16>
    "tpu.trace_start"() <{level = 10 : i32, message = "hts,hsd->htd"}> : () -> ()
    %cst_29 = arith.constant dense<0.000000e+00> : vector<4x16x16xf32>
    %45 = tpu.matmul %44, %8, %cst_29 {dimension_numbers = #tpu.dot_dimension_numbers<[2], [1], [1], [2], [0, 0, 0, 1, 1, 2], [0], [0]>} : vector<4x16x16xbf16>, vector<4x16x16xbf16>, vector<4x16x16xf32> -> vector<4x16x16xf32>
    "tpu.trace_stop"() : () -> ()
    %46 = arith.addf %43, %45 : vector<4x16x16xf32>
    %c0_30 = arith.constant 0 : index
    %c0_31 = arith.constant 0 : index
    %c0_32 = arith.constant 0 : index
    %47 = vector.load %arg9[%c0_30, %c0_31, %c0_32] : memref<4x16x16xf32, #tpu.memory_space<vmem>>, vector<4x16x16xf32>
    tpu.vector_store %arg9[%c0_30, %c0_31, %c0_32], %46 {strides = array<i32>} : memref<4x16x16xf32, #tpu.memory_space<vmem>>, vector<4x16x16xf32>,
    %c0_33 = arith.constant 0 : index
    %c0_34 = arith.constant 0 : index
    %c0_35 = arith.constant 0 : index
    %48 = vector.load %arg7[%c0_33, %c0_34, %c0_35] : memref<4x16x1xf32, #tpu.memory_space<vmem>>, vector<4x16x1xf32>
    tpu.vector_store %arg7[%c0_33, %c0_34, %c0_35], %29 {strides = array<i32>} : memref<4x16x1xf32, #tpu.memory_space<vmem>>, vector<4x16x1xf32>,
    %c1_i32 = arith.constant 1 : i32
    %49 = arith.cmpi eq, %arg2, %c1_i32 : i32
    %50 = arith.extui %49 : i1 to i32
    %c0_i32_36 = arith.constant 0 : i32
    %51 = arith.cmpi ne, %50, %c0_i32_36 : i32
    scf.if %51 {
      %c0_37 = arith.constant 0 : index
      %c0_38 = arith.constant 0 : index
      %c0_39 = arith.constant 0 : index
      %52 = vector.load %arg9[%c0_37, %c0_38, %c0_39] : memref<4x16x16xf32, #tpu.memory_space<vmem>>, vector<4x16x16xf32>
      %c0_40 = arith.constant 0 : index
      %c0_41 = arith.constant 0 : index
      %c0_42 = arith.constant 0 : index
      %53 = vector.load %arg8[%c0_40, %c0_41, %c0_42] : memref<4x16x1xf32, #tpu.memory_space<vmem>>, vector<4x16x1xf32>
      %54 = vector.broadcast %53 : vector<4x16x1xf32> to vector<4x16x16xf32>
      %55 = arith.divf %52, %54 : vector<4x16x16xf32>
      %56 = arith.truncf %55 : vector<4x16x16xf32> to vector<4x16x16xbf16>
      %c0_43 = arith.constant 0 : index
      %c0_44 = arith.constant 0 : index
      %c0_45 = arith.constant 0 : index
      %c0_46 = arith.constant 0 : index
      %57 = vector.load %arg6[%c0_43, %c0_44, %c0_45, %c0_46] : memref<1x4x16x16xbf16, #tpu.memory_space<vmem>>, vector<1x4x16x16xbf16>
      %58 = vector.shape_cast %57 : vector<1x4x16x16xbf16> to vector<4x16x16xbf16>
      %59 = vector.shape_cast %56 : vector<4x16x16xbf16> to vector<1x4x16x16xbf16>
      tpu.vector_store %arg6[%c0_43, %c0_44, %c0_45, %c0_46], %59 {strides = array<i32>} : memref<1x4x16x16xbf16, #tpu.memory_space<vmem>>, vector<1x4x16x16xbf16>,
    } else {
    }
    return
  }
  func.func @transform_0(%arg0: i32, %arg1: i32, %arg2: i32) -> (i32, i32, i32, i32) {
    %c0_i32 = arith.constant 0 : i32
    %c0_i32_0 = arith.constant 0 : i32
    %c0_i32_1 = arith.constant 0 : i32
    return %arg0, %c0_i32, %arg1, %c0_i32_0 : i32, i32, i32, i32
  }
  func.func @transform_1(%arg0: i32, %arg1: i32, %arg2: i32) -> (i32, i32, i32, i32) {
    %c0_i32 = arith.constant 0 : i32
    %c0_i32_0 = arith.constant 0 : i32
    %c0_i32_1 = arith.constant 0 : i32
    return %arg0, %c0_i32, %arg2, %c0_i32_0 : i32, i32, i32, i32
  }
  func.func @transform_2(%arg0: i32, %arg1: i32, %arg2: i32) -> (i32, i32, i32, i32) {
    %c0_i32 = arith.constant 0 : i32
    %c0_i32_0 = arith.constant 0 : i32
    %c0_i32_1 = arith.constant 0 : i32
    return %arg0, %c0_i32, %arg2, %c0_i32_0 : i32, i32, i32, i32
  }
  func.func @transform_3(%arg0: i32, %arg1: i32, %arg2: i32) -> (i32, i32, i32, i32) {
    %c0_i32 = arith.constant 0 : i32
    %c0_i32_0 = arith.constant 0 : i32
    %c0_i32_1 = arith.constant 0 : i32
    return %arg0, %c0_i32, %arg1, %c0_i32_0 : i32, i32, i32, i32
  }
}

module attributes {stable_mosaic.version = 11 : i64} {
  func.func @proj_mlp_kernel(%arg0: i32, %arg1: i32, %arg2: memref<16x64xf32, #tpu.memory_space<vmem>>, %arg3: memref<16x64xbf16, #tpu.memory_space<vmem>>, %arg4: memref<64x64xbf16, #tpu.memory_space<vmem>>, %arg5: memref<1x64xf32, #tpu.memory_space<vmem>>, %arg6: memref<1x64xf32, #tpu.memory_space<vmem>>, %arg7: memref<1x64xf32, #tpu.memory_space<vmem>>, %arg8: memref<64x128xbf16, #tpu.memory_space<vmem>>, %arg9: memref<1x128xf32, #tpu.memory_space<vmem>>, %arg10: memref<128x64xbf16, #tpu.memory_space<vmem>>, %arg11: memref<1x64xf32, #tpu.memory_space<vmem>>, %arg12: memref<16x64xf32, #tpu.memory_space<vmem>>, %arg13: memref<16x64xf32, #tpu.memory_space<vmem>>, %arg14: memref<16x64xbf16, #tpu.memory_space<vmem>>, %arg15: memref<16x64xf32, #tpu.memory_space<vmem>>) attributes {dimension_semantics = [#tpu.dimension_semantics<parallel>, #tpu.dimension_semantics<arbitrary>], iteration_bounds = array<i64: 4, 2>, scalar_prefetch = 0 : i64, scratch_operands = 3 : i64, tpu.core_type = #tpu.core_type<tc>, window_params = [{transform_indices = @transform_0, window_bounds = array<i64: 16, 64>}, {transform_indices = @transform_1, window_bounds = array<i64: 16, 64>}, {pipeline_mode = #tpu.pipeline_mode<synchronous>, transform_indices = @transform_2, window_bounds = array<i64: 64, 64>}, {pipeline_mode = #tpu.pipeline_mode<synchronous>, transform_indices = @transform_3, window_bounds = array<i64: 1, 64>}, {pipeline_mode = #tpu.pipeline_mode<synchronous>, transform_indices = @transform_4, window_bounds = array<i64: 1, 64>}, {pipeline_mode = #tpu.pipeline_mode<synchronous>, transform_indices = @transform_5, window_bounds = array<i64: 1, 64>}, {transform_indices = @transform_6, window_bounds = array<i64: 64, 128>}, {transform_indices = @transform_7, window_bounds = array<i64: 1, 128>}, {transform_indices = @transform_8, window_bounds = array<i64: 128, 64>}, {pipeline_mode = #tpu.pipeline_mode<synchronous>, transform_indices = @transform_9, window_bounds = array<i64: 1, 64>}, {transform_indices = @transform_10, window_bounds = array<i64: 16, 64>}]} {
    %c0_i32 = arith.constant 0 : i32
    %0 = arith.cmpi eq, %arg1, %c0_i32 : i32
    %1 = arith.extui %0 : i1 to i32
    %c0_i32_0 = arith.constant 0 : i32
    %2 = arith.cmpi ne, %1, %c0_i32_0 : i32
    scf.if %2 {
      %c0_30 = arith.constant 0 : index
      %c0_31 = arith.constant 0 : index
      %59 = vector.load %arg3[%c0_30, %c0_31] : memref<16x64xbf16, #tpu.memory_space<vmem>>, vector<16x64xbf16>
      %c0_32 = arith.constant 0 : index
      %c0_33 = arith.constant 0 : index
      %60 = vector.load %arg4[%c0_32, %c0_33] : memref<64x64xbf16, #tpu.memory_space<vmem>>, vector<64x64xbf16>
      %cst_34 = arith.constant dense<0.000000e+00> : vector<16x64xf32>
      %61 = tpu.matmul %59, %60, %cst_34 {dimension_numbers = #tpu.dot_dimension_numbers<[1], [0], [0], [1], [0, 0, 1, 1], [], []>} : vector<16x64xbf16>, vector<64x64xbf16>, vector<16x64xf32> -> vector<16x64xf32>
      %c0_35 = arith.constant 0 : index
      %c0_36 = arith.constant 0 : index
      %62 = vector.load %arg5[%c0_35, %c0_36] : memref<1x64xf32, #tpu.memory_space<vmem>>, vector<1x64xf32>
      %63 = vector.broadcast %62 : vector<1x64xf32> to vector<16x64xf32>
      %64 = arith.addf %61, %63 : vector<16x64xf32>
      %c0_37 = arith.constant 0 : index
      %c0_38 = arith.constant 0 : index
      %65 = vector.load %arg2[%c0_37, %c0_38] : memref<16x64xf32, #tpu.memory_space<vmem>>, vector<16x64xf32>
      %66 = arith.addf %65, %64 : vector<16x64xf32>
      %c0_39 = arith.constant 0 : index
      %c0_40 = arith.constant 0 : index
      %67 = vector.load %arg13[%c0_39, %c0_40] : memref<16x64xf32, #tpu.memory_space<vmem>>, vector<16x64xf32>
      tpu.vector_store %arg13[%c0_39, %c0_40], %66 {strides = array<i32>} : memref<16x64xf32, #tpu.memory_space<vmem>>, vector<16x64xf32>,
      %c0_41 = arith.constant 0 : index
      %c0_42 = arith.constant 0 : index
      %68 = vector.load %arg6[%c0_41, %c0_42] : memref<1x64xf32, #tpu.memory_space<vmem>>, vector<1x64xf32>
      %c0_43 = arith.constant 0 : index
      %c0_44 = arith.constant 0 : index
      %69 = vector.load %arg7[%c0_43, %c0_44] : memref<1x64xf32, #tpu.memory_space<vmem>>, vector<1x64xf32>
      %cst_45 = arith.constant dense<0.000000e+00> : vector<16xf32>
      %70 = vector.multi_reduction <add>, %66, %cst_45 [1] : vector<16x64xf32> to vector<16xf32>
      %71 = vector.shape_cast %70 : vector<16xf32> to vector<16x1xf32>
      %cst_46 = arith.constant 6.400000e+01 : f32
      %72 = vector.broadcast %cst_46 : f32 to vector<16x1xf32>
      %73 = arith.divf %71, %72 : vector<16x1xf32>
      %74 = vector.broadcast %73 : vector<16x1xf32> to vector<16x64xf32>
      %75 = arith.subf %66, %74 : vector<16x64xf32>
      %76 = arith.mulf %75, %75 : vector<16x64xf32>
      %cst_47 = arith.constant dense<0.000000e+00> : vector<16xf32>
      %77 = vector.multi_reduction <add>, %76, %cst_47 [1] : vector<16x64xf32> to vector<16xf32>
      %78 = vector.shape_cast %77 : vector<16xf32> to vector<16x1xf32>
      %cst_48 = arith.constant 6.400000e+01 : f32
      %79 = vector.broadcast %cst_48 : f32 to vector<16x1xf32>
      %80 = arith.divf %78, %79 : vector<16x1xf32>
      %81 = vector.broadcast %73 : vector<16x1xf32> to vector<16x64xf32>
      %82 = arith.subf %66, %81 : vector<16x64xf32>
      %cst_49 = arith.constant 9.99999974E-6 : f32
      %83 = vector.broadcast %cst_49 : f32 to vector<16x1xf32>
      %84 = arith.addf %80, %83 : vector<16x1xf32>
      %85 = math.rsqrt %84 : vector<16x1xf32>
      %86 = vector.broadcast %85 : vector<16x1xf32> to vector<16x64xf32>
      %87 = arith.mulf %82, %86 : vector<16x64xf32>
      %88 = vector.broadcast %68 : vector<1x64xf32> to vector<16x64xf32>
      %89 = arith.mulf %87, %88 : vector<16x64xf32>
      %90 = vector.broadcast %69 : vector<1x64xf32> to vector<16x64xf32>
      %91 = arith.addf %89, %90 : vector<16x64xf32>
      %92 = arith.truncf %91 : vector<16x64xf32> to vector<16x64xbf16>
      %c0_50 = arith.constant 0 : index
      %c0_51 = arith.constant 0 : index
      %93 = vector.load %arg14[%c0_50, %c0_51] : memref<16x64xbf16, #tpu.memory_space<vmem>>, vector<16x64xbf16>
      tpu.vector_store %arg14[%c0_50, %c0_51], %92 {strides = array<i32>} : memref<16x64xbf16, #tpu.memory_space<vmem>>, vector<16x64xbf16>,
      %cst_52 = arith.constant 0.000000e+00 : f32
      %94 = vector.broadcast %cst_52 : f32 to vector<16x64xf32>
      %c0_53 = arith.constant 0 : index
      %c0_54 = arith.constant 0 : index
      %95 = vector.load %arg15[%c0_53, %c0_54] : memref<16x64xf32, #tpu.memory_space<vmem>>, vector<16x64xf32>
      tpu.vector_store %arg15[%c0_53, %c0_54], %94 {strides = array<i32>} : memref<16x64xf32, #tpu.memory_space<vmem>>, vector<16x64xf32>,
    } else {
    }
    %c0 = arith.constant 0 : index
    %c0_1 = arith.constant 0 : index
    %3 = vector.load %arg14[%c0, %c0_1] : memref<16x64xbf16, #tpu.memory_space<vmem>>, vector<16x64xbf16>
    %c0_2 = arith.constant 0 : index
    %c0_3 = arith.constant 0 : index
    %4 = vector.load %arg8[%c0_2, %c0_3] : memref<64x128xbf16, #tpu.memory_space<vmem>>, vector<64x128xbf16>
    %cst = arith.constant dense<0.000000e+00> : vector<16x128xf32>
    %5 = tpu.matmul %3, %4, %cst {dimension_numbers = #tpu.dot_dimension_numbers<[1], [0], [0], [1], [0, 0, 1, 1], [], []>} : vector<16x64xbf16>, vector<64x128xbf16>, vector<16x128xf32> -> vector<16x128xf32>
    %c0_4 = arith.constant 0 : index
    %c0_5 = arith.constant 0 : index
    %6 = vector.load %arg9[%c0_4, %c0_5] : memref<1x128xf32, #tpu.memory_space<vmem>>, vector<1x128xf32>
    %7 = vector.broadcast %6 : vector<1x128xf32> to vector<16x128xf32>
    %8 = arith.addf %5, %7 : vector<16x128xf32>
    %cst_6 = arith.constant 5.000000e-01 : f32
    %9 = vector.broadcast %cst_6 : f32 to vector<16x128xf32>
    %10 = arith.mulf %9, %8 : vector<16x128xf32>
    %cst_7 = arith.constant 0.707106769 : f32
    %11 = vector.broadcast %cst_7 : f32 to vector<16x128xf32>
    %12 = arith.mulf %8, %11 : vector<16x128xf32>
    %cst_8 = arith.constant 0.000000e+00 : f32
    %13 = vector.broadcast %cst_8 : f32 to vector<16x128xf32>
    %14 = arith.cmpf oge, %12, %13 : vector<16x128xf32>
    %cst_9 = arith.constant 1.000000e+00 : f32
    %cst_10 = arith.constant -1.000000e+00 : f32
    %15 = vector.broadcast %cst_9 : f32 to vector<16x128xf32>
    %16 = vector.broadcast %cst_10 : f32 to vector<16x128xf32>
    %17 = arith.select %14, %15, %16 : vector<16x128xi1>, vector<16x128xf32>
    %18 = math.absf %12 : vector<16x128xf32>
    %cst_11 = arith.constant 0.327591091 : f32
    %19 = vector.broadcast %cst_11 : f32 to vector<16x128xf32>
    %20 = arith.mulf %19, %18 : vector<16x128xf32>
    %cst_12 = arith.constant 1.000000e+00 : f32
    %21 = vector.broadcast %cst_12 : f32 to vector<16x128xf32>
    %22 = arith.addf %21, %20 : vector<16x128xf32>
    %cst_13 = arith.constant 1.000000e+00 : f32
    %23 = vector.broadcast %cst_13 : f32 to vector<16x128xf32>
    %24 = arith.divf %23, %22 : vector<16x128xf32>
    %cst_14 = arith.constant 1.06140542 : f32
    %25 = vector.broadcast %cst_14 : f32 to vector<16x128xf32>
    %26 = arith.mulf %25, %24 : vector<16x128xf32>
    %cst_15 = arith.constant -1.45315206 : f32
    %27 = vector.broadcast %cst_15 : f32 to vector<16x128xf32>
    %28 = arith.addf %26, %27 : vector<16x128xf32>
    %29 = arith.mulf %28, %24 : vector<16x128xf32>
    %cst_16 = arith.constant 1.42141378 : f32
    %30 = vector.broadcast %cst_16 : f32 to vector<16x128xf32>
    %31 = arith.addf %29, %30 : vector<16x128xf32>
    %32 = arith.mulf %31, %24 : vector<16x128xf32>
    %cst_17 = arith.constant -0.284496725 : f32
    %33 = vector.broadcast %cst_17 : f32 to vector<16x128xf32>
    %34 = arith.addf %32, %33 : vector<16x128xf32>
    %35 = arith.mulf %34, %24 : vector<16x128xf32>
    %cst_18 = arith.constant 0.254829586 : f32
    %36 = vector.broadcast %cst_18 : f32 to vector<16x128xf32>
    %37 = arith.addf %35, %36 : vector<16x128xf32>
    %38 = arith.mulf %37, %24 : vector<16x128xf32>
    %cst_19 = arith.constant 0.000000e+00 : f32
    %39 = vector.broadcast %cst_19 : f32 to vector<16x128xf32>
    %40 = arith.subf %39, %18 : vector<16x128xf32>
    %41 = arith.mulf %40, %18 : vector<16x128xf32>
    %42 = math.exp %41 : vector<16x128xf32>
    %43 = arith.mulf %38, %42 : vector<16x128xf32>
    %cst_20 = arith.constant 1.000000e+00 : f32
    %44 = vector.broadcast %cst_20 : f32 to vector<16x128xf32>
    %45 = arith.subf %44, %43 : vector<16x128xf32>
    %46 = arith.mulf %17, %45 : vector<16x128xf32>
    %cst_21 = arith.constant 1.000000e+00 : f32
    %47 = vector.broadcast %cst_21 : f32 to vector<16x128xf32>
    %48 = arith.addf %47, %46 : vector<16x128xf32>
    %49 = arith.mulf %10, %48 : vector<16x128xf32>
    %c0_22 = arith.constant 0 : index
    %c0_23 = arith.constant 0 : index
    %50 = vector.load %arg15[%c0_22, %c0_23] : memref<16x64xf32, #tpu.memory_space<vmem>>, vector<16x64xf32>
    %51 = arith.truncf %49 : vector<16x128xf32> to vector<16x128xbf16>
    %c0_24 = arith.constant 0 : index
    %c0_25 = arith.constant 0 : index
    %52 = vector.load %arg10[%c0_24, %c0_25] : memref<128x64xbf16, #tpu.memory_space<vmem>>, vector<128x64xbf16>
    %cst_26 = arith.constant dense<0.000000e+00> : vector<16x64xf32>
    %53 = tpu.matmul %51, %52, %cst_26 {dimension_numbers = #tpu.dot_dimension_numbers<[1], [0], [0], [1], [0, 0, 1, 1], [], []>} : vector<16x128xbf16>, vector<128x64xbf16>, vector<16x64xf32> -> vector<16x64xf32>
    %54 = arith.addf %50, %53 : vector<16x64xf32>
    %c0_27 = arith.constant 0 : index
    %c0_28 = arith.constant 0 : index
    %55 = vector.load %arg15[%c0_27, %c0_28] : memref<16x64xf32, #tpu.memory_space<vmem>>, vector<16x64xf32>
    tpu.vector_store %arg15[%c0_27, %c0_28], %54 {strides = array<i32>} : memref<16x64xf32, #tpu.memory_space<vmem>>, vector<16x64xf32>,
    %c1_i32 = arith.constant 1 : i32
    %56 = arith.cmpi eq, %arg1, %c1_i32 : i32
    %57 = arith.extui %56 : i1 to i32
    %c0_i32_29 = arith.constant 0 : i32
    %58 = arith.cmpi ne, %57, %c0_i32_29 : i32
    scf.if %58 {
      %c0_30 = arith.constant 0 : index
      %c0_31 = arith.constant 0 : index
      %59 = vector.load %arg13[%c0_30, %c0_31] : memref<16x64xf32, #tpu.memory_space<vmem>>, vector<16x64xf32>
      %c0_32 = arith.constant 0 : index
      %c0_33 = arith.constant 0 : index
      %60 = vector.load %arg15[%c0_32, %c0_33] : memref<16x64xf32, #tpu.memory_space<vmem>>, vector<16x64xf32>
      %61 = arith.addf %59, %60 : vector<16x64xf32>
      %c0_34 = arith.constant 0 : index
      %c0_35 = arith.constant 0 : index
      %62 = vector.load %arg11[%c0_34, %c0_35] : memref<1x64xf32, #tpu.memory_space<vmem>>, vector<1x64xf32>
      %63 = vector.broadcast %62 : vector<1x64xf32> to vector<16x64xf32>
      %64 = arith.addf %61, %63 : vector<16x64xf32>
      %c0_36 = arith.constant 0 : index
      %c0_37 = arith.constant 0 : index
      %65 = vector.load %arg12[%c0_36, %c0_37] : memref<16x64xf32, #tpu.memory_space<vmem>>, vector<16x64xf32>
      tpu.vector_store %arg12[%c0_36, %c0_37], %64 {strides = array<i32>} : memref<16x64xf32, #tpu.memory_space<vmem>>, vector<16x64xf32>,
    } else {
    }
    return
  }
  func.func @transform_0(%arg0: i32, %arg1: i32) -> (i32, i32) {
    %c0_i32 = arith.constant 0 : i32
    %c0_i32_0 = arith.constant 0 : i32
    return %arg0, %c0_i32 : i32, i32
  }
  func.func @transform_1(%arg0: i32, %arg1: i32) -> (i32, i32) {
    %c0_i32 = arith.constant 0 : i32
    %c0_i32_0 = arith.constant 0 : i32
    return %arg0, %c0_i32 : i32, i32
  }
  func.func @transform_2(%arg0: i32, %arg1: i32) -> (i32, i32) {
    %c0_i32 = arith.constant 0 : i32
    %c0_i32_0 = arith.constant 0 : i32
    %c0_i32_1 = arith.constant 0 : i32
    return %c0_i32, %c0_i32_0 : i32, i32
  }
  func.func @transform_3(%arg0: i32, %arg1: i32) -> (i32, i32) {
    %c0_i32 = arith.constant 0 : i32
    %c0_i32_0 = arith.constant 0 : i32
    %c0_i32_1 = arith.constant 0 : i32
    return %c0_i32, %c0_i32_0 : i32, i32
  }
  func.func @transform_4(%arg0: i32, %arg1: i32) -> (i32, i32) {
    %c0_i32 = arith.constant 0 : i32
    %c0_i32_0 = arith.constant 0 : i32
    %c0_i32_1 = arith.constant 0 : i32
    return %c0_i32, %c0_i32_0 : i32, i32
  }
  func.func @transform_5(%arg0: i32, %arg1: i32) -> (i32, i32) {
    %c0_i32 = arith.constant 0 : i32
    %c0_i32_0 = arith.constant 0 : i32
    %c0_i32_1 = arith.constant 0 : i32
    return %c0_i32, %c0_i32_0 : i32, i32
  }
  func.func @transform_6(%arg0: i32, %arg1: i32) -> (i32, i32) {
    %c0_i32 = arith.constant 0 : i32
    %c0_i32_0 = arith.constant 0 : i32
    return %c0_i32, %arg1 : i32, i32
  }
  func.func @transform_7(%arg0: i32, %arg1: i32) -> (i32, i32) {
    %c0_i32 = arith.constant 0 : i32
    %c0_i32_0 = arith.constant 0 : i32
    return %c0_i32, %arg1 : i32, i32
  }
  func.func @transform_8(%arg0: i32, %arg1: i32) -> (i32, i32) {
    %c0_i32 = arith.constant 0 : i32
    %c0_i32_0 = arith.constant 0 : i32
    return %arg1, %c0_i32 : i32, i32
  }
  func.func @transform_9(%arg0: i32, %arg1: i32) -> (i32, i32) {
    %c0_i32 = arith.constant 0 : i32
    %c0_i32_0 = arith.constant 0 : i32
    %c0_i32_1 = arith.constant 0 : i32
    return %c0_i32, %c0_i32_0 : i32, i32
  }
  func.func @transform_10(%arg0: i32, %arg1: i32) -> (i32, i32) {
    %c0_i32 = arith.constant 0 : i32
    %c0_i32_0 = arith.constant 0 : i32
    return %arg0, %c0_i32 : i32, i32
  }
}

module attributes {stable_mosaic.version = 11 : i64} {
  func.func @head_kernel(%arg0: i32, %arg1: memref<16x64xf32, #tpu.memory_space<vmem>>, %arg2: memref<1x64xf32, #tpu.memory_space<vmem>>, %arg3: memref<1x64xf32, #tpu.memory_space<vmem>>, %arg4: memref<64x128xbf16, #tpu.memory_space<vmem>>, %arg5: memref<16x128xf32, #tpu.memory_space<vmem>>) attributes {dimension_semantics = [#tpu.dimension_semantics<parallel>], iteration_bounds = array<i64: 4>, scalar_prefetch = 0 : i64, scratch_operands = 0 : i64, tpu.core_type = #tpu.core_type<tc>, window_params = [{transform_indices = @transform_0, window_bounds = array<i64: 16, 64>}, {pipeline_mode = #tpu.pipeline_mode<synchronous>, transform_indices = @transform_1, window_bounds = array<i64: 1, 64>}, {pipeline_mode = #tpu.pipeline_mode<synchronous>, transform_indices = @transform_2, window_bounds = array<i64: 1, 64>}, {pipeline_mode = #tpu.pipeline_mode<synchronous>, transform_indices = @transform_3, window_bounds = array<i64: 64, 128>}, {transform_indices = @transform_4, window_bounds = array<i64: 16, 128>}]} {
    %c0 = arith.constant 0 : index
    %c0_0 = arith.constant 0 : index
    %0 = vector.load %arg1[%c0, %c0_0] : memref<16x64xf32, #tpu.memory_space<vmem>>, vector<16x64xf32>
    %c0_1 = arith.constant 0 : index
    %c0_2 = arith.constant 0 : index
    %1 = vector.load %arg2[%c0_1, %c0_2] : memref<1x64xf32, #tpu.memory_space<vmem>>, vector<1x64xf32>
    %c0_3 = arith.constant 0 : index
    %c0_4 = arith.constant 0 : index
    %2 = vector.load %arg3[%c0_3, %c0_4] : memref<1x64xf32, #tpu.memory_space<vmem>>, vector<1x64xf32>
    %cst = arith.constant dense<0.000000e+00> : vector<16xf32>
    %3 = vector.multi_reduction <add>, %0, %cst [1] : vector<16x64xf32> to vector<16xf32>
    %4 = vector.shape_cast %3 : vector<16xf32> to vector<16x1xf32>
    %cst_5 = arith.constant 6.400000e+01 : f32
    %5 = vector.broadcast %cst_5 : f32 to vector<16x1xf32>
    %6 = arith.divf %4, %5 : vector<16x1xf32>
    %7 = vector.broadcast %6 : vector<16x1xf32> to vector<16x64xf32>
    %8 = arith.subf %0, %7 : vector<16x64xf32>
    %9 = arith.mulf %8, %8 : vector<16x64xf32>
    %cst_6 = arith.constant dense<0.000000e+00> : vector<16xf32>
    %10 = vector.multi_reduction <add>, %9, %cst_6 [1] : vector<16x64xf32> to vector<16xf32>
    %11 = vector.shape_cast %10 : vector<16xf32> to vector<16x1xf32>
    %cst_7 = arith.constant 6.400000e+01 : f32
    %12 = vector.broadcast %cst_7 : f32 to vector<16x1xf32>
    %13 = arith.divf %11, %12 : vector<16x1xf32>
    %14 = vector.broadcast %6 : vector<16x1xf32> to vector<16x64xf32>
    %15 = arith.subf %0, %14 : vector<16x64xf32>
    %cst_8 = arith.constant 9.99999974E-6 : f32
    %16 = vector.broadcast %cst_8 : f32 to vector<16x1xf32>
    %17 = arith.addf %13, %16 : vector<16x1xf32>
    %18 = math.rsqrt %17 : vector<16x1xf32>
    %19 = vector.broadcast %18 : vector<16x1xf32> to vector<16x64xf32>
    %20 = arith.mulf %15, %19 : vector<16x64xf32>
    %21 = vector.broadcast %1 : vector<1x64xf32> to vector<16x64xf32>
    %22 = arith.mulf %20, %21 : vector<16x64xf32>
    %23 = vector.broadcast %2 : vector<1x64xf32> to vector<16x64xf32>
    %24 = arith.addf %22, %23 : vector<16x64xf32>
    %25 = arith.truncf %24 : vector<16x64xf32> to vector<16x64xbf16>
    %c0_9 = arith.constant 0 : index
    %c0_10 = arith.constant 0 : index
    %26 = vector.load %arg4[%c0_9, %c0_10] : memref<64x128xbf16, #tpu.memory_space<vmem>>, vector<64x128xbf16>
    %cst_11 = arith.constant dense<0.000000e+00> : vector<16x128xf32>
    %27 = tpu.matmul %25, %26, %cst_11 {dimension_numbers = #tpu.dot_dimension_numbers<[1], [0], [0], [1], [0, 0, 1, 1], [], []>} : vector<16x64xbf16>, vector<64x128xbf16>, vector<16x128xf32> -> vector<16x128xf32>
    %c0_12 = arith.constant 0 : index
    %c0_13 = arith.constant 0 : index
    %28 = vector.load %arg5[%c0_12, %c0_13] : memref<16x128xf32, #tpu.memory_space<vmem>>, vector<16x128xf32>
    tpu.vector_store %arg5[%c0_12, %c0_13], %27 {strides = array<i32>} : memref<16x128xf32, #tpu.memory_space<vmem>>, vector<16x128xf32>,
    return
  }
  func.func @transform_0(%arg0: i32) -> (i32, i32) {
    %c0_i32 = arith.constant 0 : i32
    %c0_i32_0 = arith.constant 0 : i32
    return %arg0, %c0_i32 : i32, i32
  }
  func.func @transform_1(%arg0: i32) -> (i32, i32) {
    %c0_i32 = arith.constant 0 : i32
    %c0_i32_0 = arith.constant 0 : i32
    %c0_i32_1 = arith.constant 0 : i32
    return %c0_i32, %c0_i32_0 : i32, i32
  }
  func.func @transform_2(%arg0: i32) -> (i32, i32) {
    %c0_i32 = arith.constant 0 : i32
    %c0_i32_0 = arith.constant 0 : i32
    %c0_i32_1 = arith.constant 0 : i32
    return %c0_i32, %c0_i32_0 : i32, i32
  }
  func.func @transform_3(%arg0: i32) -> (i32, i32) {
    %c0_i32 = arith.constant 0 : i32
    %c0_i32_0 = arith.constant 0 : i32
    %c0_i32_1 = arith.constant 0 : i32
    return %c0_i32, %c0_i32_0 : i32, i32
  }
  func.func @transform_4(%arg0: i32) -> (i32, i32) {
    %c0_i32 = arith.constant 0 : i32
    %c0_i32_0 = arith.constant 0 : i32
    return %arg0, %c0_i32 : i32, i32
  }
}

</mosaic_0001>

<llo_original>
// kernel: gpt_forward.7
$region0: #{gpt_forward.7}
  #allocation0 [shape = 'u32[]', space=smem, size = 0x4, offset = 0x4, fixed_abs, tag = 'smem constant byte address 0x4 - core index']
  #allocation1 [shape = 'u32[144,128]{1,0:T(1,128)}', space=vmem, size = 0x12000, scoped, tag = 'internal scratch']
  %s0 = inlined_call_operand.vmem [shape: f32[64,64], index: 0, kind: input, shape index: {}]
  %s1 = inlined_call_operand.vmem [shape: f32[1,64], index: 1, kind: input, shape index: {}]
  %s2 = inlined_call_operand.vmem [shape: f32[1,64], index: 2, kind: input, shape index: {}]
  %s3 = inlined_call_operand.vmem [shape: bf16[64,192], index: 3, kind: input, shape index: {}]
  %s4 = inlined_call_operand.vmem [shape: f32[1,192], index: 4, kind: input, shape index: {}]
  %s5 = inlined_call_operand.vmem [shape: bf16[64,192], index: 5, kind: output, shape index: {}]
  %s6 = sld [smem:[#allocation0]]
  $region53: #{gpt_forward.7} parent=0
    _
  %s8 = ssub.s32 1, %s6
  %s9 = scalar_select 0, %s8, %s6
  loop: start=0, step=1, limit=6
  $region2: #{gpt_forward.7} parent=0 // loop_pre_header
    _
  $region3: #{gpt_forward.7} parent=0 // loop_header
    %s11 = sphi 0, %s15
    %p12 = scmp.ge.s32.totalorder %s11, 6
    %s21 = sphi 0, %s23
    %s24 = sphi 0, %s21
    %s25 = sphi 0, %s24
    %s41 = sphi 0, %s25
    %s45 = sphi 0, %s45
    %s47 = sphi 0, %s45
    %s48 = sphi 0, %s47
    %s62 = sphi 0, %s48
    %s66 = sphi 0, %s66
    %s68 = sphi 0, %s66
    %s69 = sphi 0, %s68
    %s83 = sphi 0, %s69
    %s87 = sphi 0, %s87
    %s89 = sphi 0, %s87
    %s90 = sphi 0, %s89
    %s104 = sphi 0, %s90
    %s108 = sphi 0, %s108
    %s110 = sphi 0, %s108
    %s111 = sphi 0, %s110
    %s125 = sphi 0, %s111
    %s131 = sphi 0, %s133
    %s134 = sphi 0, %s131
    %s135 = sphi 0, %s134
    %s151 = sphi 0, %s135
  $region4: #{gpt_forward.7} parent=0 // loop_header_branch
    %14 = sbr.rel (%p12) target = $region8
  $region5: #{gpt_forward.7} parent=0 // loop_body
    %s16 = ssub.s32 %s11, 1
    %s17 = ssub.s32 %s11, 2
    %s18 = sadd.s32 %s11, 1
    %s19 = ssub.s32 %s11, %s18
    %p20 = scmp.eq.s32.totalorder %s19, 0
    %s22 = sadd.s32 %s21, 1
    %s23 = scalar_select %p20, %s21, %s22
    %p26 = pneg %p20
    %p27 = scmp.eq.s32.totalorder %s11, 3
    %p28 = por %p26, %p27
    %p29 = scmp.ne.s32.totalorder %s21, %s24
    %p30 = scmp.eq.s32.totalorder %s11, 0
    %p31 = por %p29, %p30
    %p32 = scmp.ne.s32.totalorder %s21, %s24
    %p33 = scmp.eq.s32.totalorder %s16, 3
    %p34 = por %p32, %p33
    %p35 = scmp.ne.s32.totalorder %s24, %s25
    %p36 = scmp.eq.s32.totalorder %s16, 0
    %p37 = por %p35, %p36
    %p38 = scmp.ne.s32.totalorder %s24, %s25
    %p39 = scmp.eq.s32.totalorder %s17, 3
    %p40 = por %p38, %p39
    %p42 = scmp.ne.s32.totalorder %s25, %s41
    %p43 = scmp.eq.s32.totalorder %s17, 0
    %p44 = por %p42, %p43
    %s46 = sadd.s32 %s45, 1
    %p49 = scmp.eq.s32.totalorder %s11, 3
    %p50 = scmp.ne.s32.totalorder %s45, %s47
    %p51 = scmp.eq.s32.totalorder %s11, 0
    %p52 = por %p50, %p51
    %p53 = scmp.ne.s32.totalorder %s45, %s47
    %p54 = scmp.eq.s32.totalorder %s16, 3
    %p55 = por %p53, %p54
    %p56 = scmp.ne.s32.totalorder %s47, %s48
    %p57 = scmp.eq.s32.totalorder %s16, 0
    %p58 = por %p56, %p57
    %p59 = scmp.ne.s32.totalorder %s47, %s48
    %p60 = scmp.eq.s32.totalorder %s17, 3
    %p61 = por %p59, %p60
    %p63 = scmp.ne.s32.totalorder %s48, %s62
    %p64 = scmp.eq.s32.totalorder %s17, 0
    %p65 = por %p63, %p64
    %s67 = sadd.s32 %s66, 1
    %p70 = scmp.eq.s32.totalorder %s11, 3
    %p71 = scmp.ne.s32.totalorder %s66, %s68
    %p72 = scmp.eq.s32.totalorder %s11, 0
    %p73 = por %p71, %p72
    %p74 = scmp.ne.s32.totalorder %s66, %s68
    %p75 = scmp.eq.s32.totalorder %s16, 3
    %p76 = por %p74, %p75
    %p77 = scmp.ne.s32.totalorder %s68, %s69
    %p78 = scmp.eq.s32.totalorder %s16, 0
    %p79 = por %p77, %p78
    %p80 = scmp.ne.s32.totalorder %s68, %s69
    %p81 = scmp.eq.s32.totalorder %s17, 3
    %p82 = por %p80, %p81
    %p84 = scmp.ne.s32.totalorder %s69, %s83
    %p85 = scmp.eq.s32.totalorder %s17, 0
    %p86 = por %p84, %p85
    %s88 = sadd.s32 %s87, 1
    %p91 = scmp.eq.s32.totalorder %s11, 3
    %p92 = scmp.ne.s32.totalorder %s87, %s89
    %p93 = scmp.eq.s32.totalorder %s11, 0
    %p94 = por %p92, %p93
    %p95 = scmp.ne.s32.totalorder %s87, %s89
    %p96 = scmp.eq.s32.totalorder %s16, 3
    %p97 = por %p95, %p96
    %p98 = scmp.ne.s32.totalorder %s89, %s90
    %p99 = scmp.eq.s32.totalorder %s16, 0
    %p100 = por %p98, %p99
    %p101 = scmp.ne.s32.totalorder %s89, %s90
    %p102 = scmp.eq.s32.totalorder %s17, 3
    %p103 = por %p101, %p102
    %p105 = scmp.ne.s32.totalorder %s90, %s104
    %p106 = scmp.eq.s32.totalorder %s17, 0
    %p107 = por %p105, %p106
    %s109 = sadd.s32 %s108, 1
    %p112 = scmp.eq.s32.totalorder %s11, 3
    %p113 = scmp.ne.s32.totalorder %s108, %s110
    %p114 = scmp.eq.s32.totalorder %s11, 0
    %p115 = por %p113, %p114
    %p116 = scmp.ne.s32.totalorder %s108, %s110
    %p117 = scmp.eq.s32.totalorder %s16, 3
    %p118 = por %p116, %p117
    %p119 = scmp.ne.s32.totalorder %s110, %s111
    %p120 = scmp.eq.s32.totalorder %s16, 0
    %p121 = por %p119, %p120
    %p122 = scmp.ne.s32.totalorder %s110, %s111
    %p123 = scmp.eq.s32.totalorder %s17, 3
    %p124 = por %p122, %p123
    %p126 = scmp.ne.s32.totalorder %s111, %s125
    %p127 = scmp.eq.s32.totalorder %s17, 0
    %p128 = por %p126, %p127
    %s129 = ssub.s32 %s11, %s18
    %p130 = scmp.eq.s32.totalorder %s129, 0
    %s132 = sadd.s32 %s131, 1
    %s133 = scalar_select %p130, %s131, %s132
    %p136 = pneg %p130
    %p137 = scmp.eq.s32.totalorder %s11, 3
    %p138 = por %p136, %p137
    %p139 = scmp.ne.s32.totalorder %s131, %s134
    %p140 = scmp.eq.s32.totalorder %s11, 0
    %p141 = por %p139, %p140
    %p142 = scmp.ne.s32.totalorder %s131, %s134
    %p143 = scmp.eq.s32.totalorder %s16, 3
    %p144 = por %p142, %p143
    %p145 = scmp.ne.s32.totalorder %s134, %s135
    %p146 = scmp.eq.s32.totalorder %s16, 0
    %p147 = por %p145, %p146
    %p148 = scmp.ne.s32.totalorder %s134, %s135
    %p149 = scmp.eq.s32.totalorder %s17, 3
    %p150 = por %p148, %p149
    %p152 = scmp.ne.s32.totalorder %s135, %s151
    %p153 = scmp.eq.s32.totalorder %s17, 0
    %p154 = por %p152, %p153
    %p155 = scmp.le.s32.totalorder 1, %s11
    %p156 = scmp.lt.s32.totalorder %s11, 5
    %p157 = pnand %p155, %p156
    %p158 = pneg %p157
    // Predicated region
    $region9: #{gpt_forward.7} parent=5 // pred_check
      _
    $region10: #{gpt_forward.7} parent=5 // pred_check_branch
      %160 = sbr.rel (%p157) target = $region12
    $region11: #{gpt_forward.7} parent=5 // pred_region
      %s161 = ssub.s32 %s11, 1
      // Predicated region
      $region13: #{gpt_forward.7} parent=11 // pred_check
        %p162 = pneg %p58
      $region14: #{gpt_forward.7} parent=11 // pred_check_branch
        %164 = sbr.rel (%p162) target = $region16
      $region15: #{gpt_forward.7} parent=11 // pred_region
        _
      $region16: #{gpt_forward.7} parent=11 // pred_fallthru
        _
      // Predicated region
      $region17: #{gpt_forward.7} parent=11 // pred_check
        %p165 = pneg %p79
      $region18: #{gpt_forward.7} parent=11 // pred_check_branch
        %167 = sbr.rel (%p165) target = $region20
      $region19: #{gpt_forward.7} parent=11 // pred_region
        _
      $region20: #{gpt_forward.7} parent=11 // pred_fallthru
        _
      // Predicated region
      $region21: #{gpt_forward.7} parent=11 // pred_check
        %p168 = pneg %p100
      $region22: #{gpt_forward.7} parent=11 // pred_check_branch
        %170 = sbr.rel (%p168) target = $region24
      $region23: #{gpt_forward.7} parent=11 // pred_region
        _
      $region24: #{gpt_forward.7} parent=11 // pred_fallthru
        _
      // Predicated region
      $region25: #{gpt_forward.7} parent=11 // pred_check
        %p171 = pneg %p121
      $region26: #{gpt_forward.7} parent=11 // pred_check_branch
        %173 = sbr.rel (%p171) target = $region28
      $region27: #{gpt_forward.7} parent=11 // pred_region
        _
      $region28: #{gpt_forward.7} parent=11 // pred_fallthru
        _
    $region12: #{gpt_forward.7} parent=5 // pred_fallthru
      _
    %p174 = scmp.lt.s32.totalorder %s11, 4
    // Predicated region
    $region29: #{gpt_forward.7} parent=5 // pred_check
      %p175 = pneg %p174
    $region30: #{gpt_forward.7} parent=5 // pred_check_branch
      %177 = sbr.rel (%p175) target = $region32
    $region31: #{gpt_forward.7} parent=5 // pred_region
      // Predicated region
      $region33: #{gpt_forward.7} parent=31 // pred_check
        %p178 = pneg %p31
      $region34: #{gpt_forward.7} parent=31 // pred_check_branch
        %180 = sbr.rel (%p178) target = $region36
      $region35: #{gpt_forward.7} parent=31 // pred_region
        %s181 = smul.u32 2, %s11
        %p182 = scmp.lt.s32.totalorder %s181, 7
        %s183 = scalar_select %p182, %s181, 7
        %s184 = smul.addr %s183, 8
        %s185 = scalar_lea.vmem %s0, %s184
        %s186 = smul.u32 2, %s11
      $region36: #{gpt_forward.7} parent=31 // pred_fallthru
        _
    $region32: #{gpt_forward.7} parent=5 // pred_fallthru
      _
    %p187 = scmp.le.s32.totalorder 1, %s11
    %p188 = scmp.lt.s32.totalorder %s11, 5
    %p189 = pnand %p187, %p188
    %p190 = pneg %p189
    // Predicated region
    $region37: #{gpt_forward.7} parent=5 // pred_check
      _
    $region38: #{gpt_forward.7} parent=5 // pred_check_branch
      %192 = sbr.rel (%p189) target = $region40
    $region39: #{gpt_forward.7} parent=5 // pred_region
      %s193 = ssub.s32 %s11, 1
      %s194 = smul.u32 2, %s16
      %p195 = scmp.lt.s32.totalorder %s194, 7
      %s196 = scalar_select %p195, %s194, 7
      %s197 = smul.addr %s196, 8
      %s198 = scalar_lea.vmem %s0, %s197
      %p199 = pneg %p37
      %p200 = pneg %p34
      %p201 = pneg %p58
      %p202 = pneg %p55
      %p203 = pneg %p79
      %p204 = pneg %p76
      %p205 = pneg %p100
      %p206 = pneg %p97
      %p207 = pneg %p121
      %p208 = pneg %p118
      %p209 = pneg %p147
      %p210 = pneg %p144
      %s211 = smul.u32 2, %s16
      %p212 = scmp.lt.s32.totalorder %s211, 7
      %s213 = scalar_select %p212, %s211, 7
      %s214 = smul.addr %s213, 2
      %s215 = smul.addr %s214, 4
      %s216 = scalar_lea.vmem %s5, %s215
      %s217 = smul.u32 2, %s16
      %p218 = scmp.lt.s32.totalorder %s217, 7
      %s219 = scalar_select %p218, %s217, 7
      %s220 = smul.addr %s219, 8
      %s221 = scalar_lea.vmem %s0, %s220
      %s222 = smul.u32 2, %s16
      %s223 = smul.u32 2, %s16
      %p224 = scmp.lt.s32.totalorder %s223, 7
      %s225 = scalar_select %p224, %s223, 7
      %s226 = smul.addr %s225, 2
      %s227 = smul.addr %s226, 4
      %s228 = scalar_lea.vmem %s5, %s227
      %s229 = smul.u32 2, %s16
      %v231 = vld [vmem:[%s221] sm:$0xff]
      %v232 = vld [vmem:[%s221 + $0x8] sm:$0xff]
      %v233 = vld [vmem:[%s1] sm:$0x1]
      %v234 = vld [vmem:[%s2] sm:$0x1]
      %vm235 = vcmask 523264
      %v236 = vsel %vm235, %v231, 0.0
      %237 = vadd.xlane.f32.xlu0 %v236
      %v238 = vpop.xlane.xlu0 %237
      %v239 = vsel %vm235, %v232, 0.0
      %240 = vadd.xlane.f32.xlu0 %v239
      %v241 = vpop.xlane.xlu0 %240
      %v242 = vrcp.pop 64.0
      %v243 = vmul.f32 %v238, %v242
      %v244 = vmul.f32 %v241, %v242
      %v245 = vsub.f32 %v231, %v243
      %v246 = vsub.f32 %v232, %v244
      %v247 = vmul.f32 %v245, %v245
      %v248 = vmul.f32 %v246, %v246
      %v249 = vsel %vm235, %v247, 0.0
      %250 = vadd.xlane.f32.xlu0 %v249
      %v251 = vpop.xlane.xlu0 %250
      %v252 = vsel %vm235, %v248, 0.0
      %253 = vadd.xlane.f32.xlu0 %v252
      %v254 = vpop.xlane.xlu0 %253
      %v255 = vmul.f32 %v251, %v242
      %v256 = vmul.f32 %v254, %v242
      %v257 = vadd.f32 %v255, 1e-05
      %v258 = vadd.f32 %v256, 1e-05
      %v259 = vrsqrt.pop %v257
      %v260 = vrsqrt.pop %v258
      %v261 = vmul.f32 %v245, %v259
      %v262 = vmul.f32 %v246, %v260
      %v264 = vlaneseq
      %v265 = vshrl.u32 %v264, 7
      %v266 = vsub.s32 0, %v265
      %v267 = vrot.slane %v233, %v266
      %v269 = vmul.f32 %v261, %v267
      %v270 = vmul.f32 %v262, %v267
      %v272 = vlaneseq
      %v273 = vshrl.u32 %v272, 7
      %v274 = vsub.s32 0, %v273
      %v275 = vrot.slane %v234, %v274
      %v277 = vadd.f32 %v269, %v275
      %v278 = vadd.f32 %v270, %v275
      %v279 = vpack.c.bf16 %v278, %v277
      %v280 = vld [vmem:[%s3] sm:$0xff]
      %v281 = vld [vmem:[%s3 + $0x8] sm:$0xff]
      %v282 = vld [vmem:[%s3 + $0x10] sm:$0xff]
      %v283 = vld [vmem:[%s3 + $0x18] sm:$0xff]
      %v284 = vld [vmem:[%s3 + $0x20] sm:$0xff]
      %v285 = vld [vmem:[%s3 + $0x28] sm:$0xff]
      %v286 = vld [vmem:[%s3 + $0x30] sm:$0xff]
      %v287 = vld [vmem:[%s3 + $0x38] sm:$0xff]
      %v288 = vld [vmem:[%s4] sm:$0x3]
      %v290 = vlaneseq
      %v291 = vshrl.u32 %v290, 7
      %v292 = vsub.s32 0, %v291
      %v293 = vrot.slane %v288, %v292
      %v294 = vlaneseq
      %v295 = vshrl.u32 %v294, 7
      %v296 = vsub.s32 1, %v295
      %v297 = vrot.slane %v288, %v296
      %v308 = vunpack.c.l.b16 %v280
      %v309 = vunpack.c.h.b16 %v280
      %v310 = vunpack.c.l.b16 %v281
      %v311 = vunpack.c.h.b16 %v281
      %v312 = vunpack.c.l.b16 %v282
      %v313 = vunpack.c.h.b16 %v282
      %v314 = vunpack.c.l.b16 %v283
      %v315 = vunpack.c.h.b16 %v283
      %v316 = vunpack.c.l.b16 %v284
      %v317 = vunpack.c.h.b16 %v284
      %v318 = vunpack.c.l.b16 %v285
      %v319 = vunpack.c.h.b16 %v285
      %v320 = vunpack.c.l.b16 %v286
      %v321 = vunpack.c.h.b16 %v286
      %v322 = vunpack.c.l.b16 %v287
      %v323 = vunpack.c.h.b16 %v287
      %v324 = vpack.c.b16 %v310, %v308
      %v325 = vpack.c.b16 %v311, %v309
      %v326 = vpack.c.b16 %v314, %v312
      %v327 = vpack.c.b16 %v315, %v313
      %v328 = vpack.c.b16 %v318, %v316
      %v329 = vpack.c.b16 %v319, %v317
      %v330 = vpack.c.b16 %v322, %v320
      %v331 = vpack.c.b16 %v323, %v321
      %v341 = vsel %vm235, %v279, 0
      %343 = vmatprep.subr.bf16.mxu0 %v325
      %344 = vmatpush1.bf16.msra.mxu0 %v324
      %345 = vmatprep.subr.bf16.mxu0 %v327
      %346 = vmatpush1.bf16.msra.mxu0 %v326
      %347 = vmatprep.subr.bf16.mxu0 %v329
      %348 = vmatpush1.bf16.msra.mxu0 %v328
      %349 = vmatprep.subr.bf16.mxu0 %v331
      %350 = vmatpush1.bf16.msra.mxu0 %v330
      %351 = vmatprep.subr.bf16.mxu0 0
      %352 = vmatpush1.bf16.msra.mxu0 0
      %353 = vmatprep.subr.bf16.mxu0 0
      %354 = vmatpush1.bf16.msra.mxu0 0
      %355 = vmatprep.subr.bf16.mxu0 0
      %356 = vmatpush1.bf16.msra.mxu0 0
      %357 = vmatprep.subr.bf16.mxu0 0
      %358 = vmatpush1.bf16.msra.mxu0 0
      %359 = vmatprep.subr.bf16.mxu0 0
      %360 = vmatpush1.bf16.msra.mxu0 0
      %361 = vmatprep.subr.bf16.mxu0 0
      %362 = vmatpush1.bf16.msra.mxu0 0
      %363 = vmatprep.subr.bf16.mxu0 0
      %364 = vmatpush1.bf16.msra.mxu0 0
      %365 = vmatprep.subr.bf16.mxu0 0
      %366 = vmatpush1.bf16.msra.mxu0 0
      %367 = vmatprep.subr.bf16.mxu0 0
      %368 = vmatpush1.bf16.msra.mxu0 0
      %369 = vmatprep.subr.bf16.mxu0 0
      %370 = vmatpush1.bf16.msra.mxu0 0
      %371 = vmatprep.subr.bf16.mxu0 0
      %372 = vmatpush1.bf16.msra.mxu0 0
      %373 = vmatprep.subr.bf16.mxu0 0
      %374 = vmatpush1.bf16.msra.mxu0 0
      %375 = vmatprep.mubr.bf16.mxu0 0
      %376 = vmatmul.mubr.bf16.gmra.mrb[0].mxu0 %v341
      %v377 = vpop.f32.mrb[0].mxu0
      %v378 = vadd.f32 %v293, %v377
      %v379 = vpop.f32.mrb[0].mxu0
      %v380 = vadd.f32 %v297, %v379
      %v381 = vpop.f32.mrb[0].mxu0
      %v382 = vadd.f32 %v293, %v381
      %v383 = vpop.f32.mrb[0].mxu0
      %v384 = vadd.f32 %v297, %v383
      %385 = vdwg.mxu0
      %v386 = vpack.c.bf16 %v382, %v378
      %v387 = vpack.c.bf16 %v384, %v380
      %v390 = vunpack.c.l.b16 %v386
      %v391 = vunpack.c.l.b16 %v387
      %v392 = vunpack.c.h.b16 %v386
      %v393 = vunpack.c.h.b16 %v387
      %v394 = vpack.c.b16 %v391, %v390
      %v395 = vpack.c.b16 %v393, %v392
      %vm398 = vcmask 1043456
      %vm399 = vcmask 523268
      %vm400 = vmor %vm399, %vm398
      %401 = vst.msk [vmem:[%s228] sm:$0xff] %vm400, %v394
      %402 = vst.msk [vmem:[%s228 + $0x8] sm:$0xff] %vm400, %v395
      %s403 = smul.u32 2, %s16
      %p404 = scmp.lt.s32.totalorder %s403, 7
      %s405 = scalar_select %p404, %s403, 7
      %s406 = smul.addr %s405, 2
      %s407 = smul.addr %s406, 4
      %s408 = scalar_lea.vmem %s5, %s407
      // Predicated region
      $region41: #{gpt_forward.7} parent=39 // pred_check
        %p409 = pneg %p144
      $region42: #{gpt_forward.7} parent=39 // pred_check_branch
        %411 = sbr.rel (%p409) target = $region44
      $region43: #{gpt_forward.7} parent=39 // pred_region
        %s412 = smul.u32 2, %s16
      $region44: #{gpt_forward.7} parent=39 // pred_fallthru
        _
    $region40: #{gpt_forward.7} parent=5 // pred_fallthru
      _
    %p413 = scmp.le.s32.totalorder 2, %s11
    // Predicated region
    $region45: #{gpt_forward.7} parent=5 // pred_check
      %p414 = pneg %p413
    $region46: #{gpt_forward.7} parent=5 // pred_check_branch
      %416 = sbr.rel (%p414) target = $region48
    $region47: #{gpt_forward.7} parent=5 // pred_region
      %s417 = ssub.s32 %s11, 2
      // Predicated region
      $region49: #{gpt_forward.7} parent=47 // pred_check
        %p418 = pneg %p150
      $region50: #{gpt_forward.7} parent=47 // pred_check_branch
        %420 = sbr.rel (%p418) target = $region52
      $region51: #{gpt_forward.7} parent=47 // pred_region
        %s421 = smul.u32 2, %s17
        %p422 = scmp.lt.s32.totalorder %s421, 7
        %s423 = scalar_select %p422, %s421, 7
        %s424 = smul.addr %s423, 2
        %s425 = smul.addr %s424, 4
        %s426 = scalar_lea.vmem %s5, %s425
      $region52: #{gpt_forward.7} parent=47 // pred_fallthru
        _
    $region48: #{gpt_forward.7} parent=5 // pred_fallthru
      _
  $region6: #{gpt_forward.7} parent=0 // loop_footer
    %s15 = sadd.s32 1, %s11
  $region7: #{gpt_forward.7} parent=0 // loop_footer_branch
    %10 = sbr.rel target = $region3
  $region8: #{gpt_forward.7} parent=0 // loop_exit
    _

// kernel: gpt_forward.8
$region0: #{gpt_forward.8}
  #allocation0 [shape = 'u32[]', space=smem, size = 0x4, offset = 0x4, fixed_abs, tag = 'smem constant byte address 0x4 - core index']
  #allocation1 [shape = 'u32[144,128]{1,0:T(1,128)}', space=vmem, size = 0x12000, scoped, tag = 'internal scratch']
  #allocation2 [shape = 'f32[4,16,1]{2,1,0:T(8,128)}', space=vmem, size = 0x8000, scoped, tag = 'scratch operand']
  #allocation3 [shape = 'f32[4,16,1]{2,1,0:T(8,128)}', space=vmem, size = 0x8000, scoped, tag = 'scratch operand']
  #allocation4 [shape = 'f32[4,16,16]{2,1,0:T(8,128)}', space=vmem, size = 0x8000, scoped, tag = 'scratch operand']
  %s0 = inlined_call_operand.vmem [shape: bf16[2,4,32,16], index: 0, kind: input, shape index: {}]
  %s1 = inlined_call_operand.vmem [shape: bf16[2,4,32,16], index: 1, kind: input, shape index: {}]
  %s2 = inlined_call_operand.vmem [shape: bf16[2,4,32,16], index: 2, kind: input, shape index: {}]
  %s3 = inlined_call_operand.vmem [shape: bf16[2,4,32,16], index: 3, kind: output, shape index: {}]
  %s4 = sld [smem:[#allocation0]]
  $region213: #{gpt_forward.8} parent=0
    _
  %s6 = ssub.s32 1, %s4
  %s7 = scalar_select 0, %s6, %s4
  $region1: #{gpt_forward.8} parent=0
    #allocation5 [shape = 'u8[32768]{0}', space=vmem, size = 0x8000, scoped, tag = 'input window, operand 0']
    #allocation6 [shape = 'u8[32768]{0}', space=vmem, size = 0x8000, scoped, tag = 'input window, operand 1']
    #allocation7 [shape = 'u8[32768]{0}', space=vmem, size = 0x8000, scoped, tag = 'input window, operand 2']
    #allocation8 [shape = 'u8[32768]{0}', space=vmem, size = 0x8000, scoped, tag = 'output window, operand 0']
    loop: start=0, step=1, limit=10
    $region2: #{gpt_forward.8} parent=1 // loop_pre_header
      _
    $region3: #{gpt_forward.8} parent=1 // loop_header
      %s9 = sphi 0, %s13
      %p10 = scmp.ge.s32.totalorder %s9, 10
      %s16 = sphi 0, %s35
      %s17 = sphi 0, %s31
      %s18 = sphi 0, %s27
      %s19 = sphi 0, %s16
      %s20 = sphi 0, %s17
      %s21 = sphi 0, %s18
      %s22 = sphi 0, %s19
      %s23 = sphi 0, %s20
      %s24 = sphi 0, %s21
      %s40 = sphi 0, %s42
      %s43 = sphi 0, %s40
      %s44 = sphi 0, %s43
      %s60 = sphi 0, %s44
      %s68 = sphi 0, %s70
      %s71 = sphi 0, %s68
      %s72 = sphi 0, %s71
      %s88 = sphi 0, %s72
      %s96 = sphi 0, %s98
      %s99 = sphi 0, %s96
      %s100 = sphi 0, %s99
      %s116 = sphi 0, %s100
      %s124 = sphi 0, %s126
      %s127 = sphi 0, %s124
      %s128 = sphi 0, %s127
      %s144 = sphi 0, %s128
    $region4: #{gpt_forward.8} parent=1 // loop_header_branch
      %12 = sbr.rel (%p10) target = $region8
    $region5: #{gpt_forward.8} parent=1 // loop_body
      %s14 = ssub.s32 %s9, 1
      %s15 = ssub.s32 %s9, 2
      %s25 = sadd.s32 1, %s18
      %p26 = scmp.ge.s32.totalorder %s25, 2
      %s27 = scalar_select %p26, 0, %s25
      %s28 = sadd.s32 1, %s17
      %s29 = scalar_select %p26, %s28, %s17
      %p30 = scmp.ge.s32.totalorder %s29, 2
      %s31 = scalar_select %p30, 0, %s29
      %s32 = sadd.s32 1, %s16
      %s33 = scalar_select %p30, %s32, %s16
      %p34 = scmp.ge.s32.totalorder %s33, 2
      %s35 = scalar_select %p34, 0, %s33
      %s36 = ssub.s32 %s16, %s35
      %s37 = ssub.s32 %s17, %s31
      %s38 = sor.u32 %s36, %s37
      %p39 = scmp.eq.s32.totalorder %s38, 0
      %s41 = sadd.s32 %s40, 1
      %s42 = scalar_select %p39, %s40, %s41
      %p45 = pneg %p39
      %p46 = scmp.eq.s32.totalorder %s9, 7
      %p47 = por %p45, %p46
      %p48 = scmp.ne.s32.totalorder %s40, %s43
      %p49 = scmp.eq.s32.totalorder %s9, 0
      %p50 = por %p48, %p49
      %p51 = scmp.ne.s32.totalorder %s40, %s43
      %p52 = scmp.eq.s32.totalorder %s14, 7
      %p53 = por %p51, %p52
      %p54 = scmp.ne.s32.totalorder %s43, %s44
      %p55 = scmp.eq.s32.totalorder %s14, 0
      %p56 = por %p54, %p55
      %p57 = scmp.ne.s32.totalorder %s43, %s44
      %p58 = scmp.eq.s32.totalorder %s15, 7
      %p59 = por %p57, %p58
      %p61 = scmp.ne.s32.totalorder %s44, %s60
      %p62 = scmp.eq.s32.totalorder %s15, 0
      %p63 = por %p61, %p62
      %s64 = ssub.s32 %s16, %s35
      %s65 = ssub.s32 %s18, %s27
      %s66 = sor.u32 %s64, %s65
      %p67 = scmp.eq.s32.totalorder %s66, 0
      %s69 = sadd.s32 %s68, 1
      %s70 = scalar_select %p67, %s68, %s69
      %p73 = pneg %p67
      %p74 = scmp.eq.s32.totalorder %s9, 7
      %p75 = por %p73, %p74
      %p76 = scmp.ne.s32.totalorder %s68, %s71
      %p77 = scmp.eq.s32.totalorder %s9, 0
      %p78 = por %p76, %p77
      %p79 = scmp.ne.s32.totalorder %s68, %s71
      %p80 = scmp.eq.s32.totalorder %s14, 7
      %p81 = por %p79, %p80
      %p82 = scmp.ne.s32.totalorder %s71, %s72
      %p83 = scmp.eq.s32.totalorder %s14, 0
      %p84 = por %p82, %p83
      %p85 = scmp.ne.s32.totalorder %s71, %s72
      %p86 = scmp.eq.s32.totalorder %s15, 7
      %p87 = por %p85, %p86
      %p89 = scmp.ne.s32.totalorder %s72, %s88
      %p90 = scmp.eq.s32.totalorder %s15, 0
      %p91 = por %p89, %p90
      %s92 = ssub.s32 %s16, %s35
      %s93 = ssub.s32 %s18, %s27
      %s94 = sor.u32 %s92, %s93
      %p95 = scmp.eq.s32.totalorder %s94, 0
      %s97 = sadd.s32 %s96, 1
      %s98 = scalar_select %p95, %s96, %s97
      %p101 = pneg %p95
      %p102 = scmp.eq.s32.totalorder %s9, 7
      %p103 = por %p101, %p102
      %p104 = scmp.ne.s32.totalorder %s96, %s99
      %p105 = scmp.eq.s32.totalorder %s9, 0
      %p106 = por %p104, %p105
      %p107 = scmp.ne.s32.totalorder %s96, %s99
      %p108 = scmp.eq.s32.totalorder %s14, 7
      %p109 = por %p107, %p108
      %p110 = scmp.ne.s32.totalorder %s99, %s100
      %p111 = scmp.eq.s32.totalorder %s14, 0
      %p112 = por %p110, %p111
      %p113 = scmp.ne.s32.totalorder %s99, %s100
      %p114 = scmp.eq.s32.totalorder %s15, 7
      %p115 = por %p113, %p114
      %p117 = scmp.ne.s32.totalorder %s100, %s116
      %p118 = scmp.eq.s32.totalorder %s15, 0
      %p119 = por %p117, %p118
      %s120 = ssub.s32 %s16, %s35
      %s121 = ssub.s32 %s17, %s31
      %s122 = sor.u32 %s120, %s121
      %p123 = scmp.eq.s32.totalorder %s122, 0
      %s125 = sadd.s32 %s124, 1
      %s126 = scalar_select %p123, %s124, %s125
      %p129 = pneg %p123
      %p130 = scmp.eq.s32.totalorder %s9, 7
      %p131 = por %p129, %p130
      %p132 = scmp.ne.s32.totalorder %s124, %s127
      %p133 = scmp.eq.s32.totalorder %s9, 0
      %p134 = por %p132, %p133
      %p135 = scmp.ne.s32.totalorder %s124, %s127
      %p136 = scmp.eq.s32.totalorder %s14, 7
      %p137 = por %p135, %p136
      %p138 = scmp.ne.s32.totalorder %s127, %s128
      %p139 = scmp.eq.s32.totalorder %s14, 0
      %p140 = por %p138, %p139
      %p141 = scmp.ne.s32.totalorder %s127, %s128
      %p142 = scmp.eq.s32.totalorder %s15, 7
      %p143 = por %p141, %p142
      %p145 = scmp.ne.s32.totalorder %s128, %s144
      %p146 = scmp.eq.s32.totalorder %s15, 0
      %p147 = por %p145, %p146
      %p148 = scmp.le.s32.totalorder 1, %s9
      %p149 = scmp.lt.s32.totalorder %s9, 9
      %p150 = pnand %p148, %p149
      %p151 = pneg %p150
      // Predicated region
      $region9: #{gpt_forward.8} parent=5 // pred_check
        _
      $region10: #{gpt_forward.8} parent=5 // pred_check_branch
        %153 = sbr.rel (%p150) target = $region12
      $region11: #{gpt_forward.8} parent=5 // pred_region
        %s154 = ssub.s32 %s9, 1
      $region12: #{gpt_forward.8} parent=5 // pred_fallthru
        _
      %p155 = scmp.lt.s32.totalorder %s9, 8
      // Predicated region
      $region13: #{gpt_forward.8} parent=5 // pred_check
        %p156 = pneg %p155
      $region14: #{gpt_forward.8} parent=5 // pred_check_branch
        %158 = sbr.rel (%p156) target = $region16
      $region15: #{gpt_forward.8} parent=5 // pred_region
        // Predicated region
        $region17: #{gpt_forward.8} parent=15 // pred_check
          %p159 = pneg %p50
        $region18: #{gpt_forward.8} parent=15 // pred_check_branch
          %161 = sbr.rel (%p159) target = $region20
        $region19: #{gpt_forward.8} parent=15 // pred_region
          %s162 = sand.u32 %s40, 1
          %s163 = sand.u32 %s40, 1
          %s164 = smul.addr %s163, 32
          %s165 = scalar_lea.vmem [#allocation5], %s164
          %s166 = smul.u32 2, %s17
          %s167 = smul.addr %s16, 16
          %s168 = sadd.s32 %s166, %s167
          %s169 = smul.addr %s168, 4
          %s170 = scalar_lea.vmem %s0, %s169
          // Predicated region
          $region21: #{gpt_forward.8} parent=19 // pred_check
            _
          $region22: #{gpt_forward.8} parent=19 // pred_check_branch
            %172 = sbr.rel (0) target = $region24
          $region23: #{gpt_forward.8} parent=19 // pred_region
            // Predicated region
            $region25: #{gpt_forward.8} parent=23 // pred_check
              _
            $region26: #{gpt_forward.8} parent=23 // pred_check_branch
              %174 = sbr.rel target = $region28
            $region27: #{gpt_forward.8} parent=23 // pred_region
              // Predicated region
              $region40: #{gpt_forward.8} parent=27 // pred_check
                _
              $region41: #{gpt_forward.8} parent=27 // pred_check_branch
                %203 = sbr.rel (0) target = $region43
              $region42: #{gpt_forward.8} parent=27 // pred_region
                loop: start=0, step=1, limit=1
                $region44: #{gpt_forward.8} parent=42 // loop_pre_header
                  _
                $region45: #{gpt_forward.8} parent=42 // loop_header
                  %s205 = sphi 0, %s209
                  %p206 = scmp.ge.s32.totalorder %s205, 1
                  %s210 = sphi %s170, %s170
                  %s211 = sphi %s165, %s165
                $region46: #{gpt_forward.8} parent=42 // loop_header_branch
                  %208 = sbr.rel (%p206) target = $region50
                $region47: #{gpt_forward.8} parent=42 // loop_body
                  _
                $region48: #{gpt_forward.8} parent=42 // loop_footer
                  %s209 = sadd.s32 1, %s205
                $region49: #{gpt_forward.8} parent=42 // loop_footer_branch
                  %204 = sbr.rel target = $region45
                $region50: #{gpt_forward.8} parent=42 // loop_exit
                  _
                loop: start=0, step=1, limit=1
                $region51: #{gpt_forward.8} parent=42 // loop_pre_header
                  _
                $region52: #{gpt_forward.8} parent=42 // loop_header
                  %s214 = sphi 0, %s218
                  %p215 = scmp.ge.s32.totalorder %s214, 1
                  %s219 = sphi %s170, %s170
                  %s220 = sphi %s165, %s165
                $region53: #{gpt_forward.8} parent=42 // loop_header_branch
                  %217 = sbr.rel (%p215) target = $region57
                $region54: #{gpt_forward.8} parent=42 // loop_body
                  %v221 = vld [vmem:[%s219] sm:$0xf]
                  %222 = vst [vmem:[%s220] sm:$0xf] %v221
                  %v223 = vld [vmem:[%s219 + $0x4] sm:$0xf]
                  %224 = vst [vmem:[%s220 + $0x4] sm:$0xf] %v223
                  %v225 = vld [vmem:[%s219 + $0x10] sm:$0xf]
                  %226 = vst [vmem:[%s220 + $0x8] sm:$0xf] %v225
                  %v227 = vld [vmem:[%s219 + $0x14] sm:$0xf]
                  %228 = vst [vmem:[%s220 + $0xc] sm:$0xf] %v227
                  %v229 = vld [vmem:[%s219 + $0x20] sm:$0xf]
                  %230 = vst [vmem:[%s220 + $0x10] sm:$0xf] %v229
                  %v231 = vld [vmem:[%s219 + $0x24] sm:$0xf]
                  %232 = vst [vmem:[%s220 + $0x14] sm:$0xf] %v231
                  %v233 = vld [vmem:[%s219 + $0x30] sm:$0xf]
                  %234 = vst [vmem:[%s220 + $0x18] sm:$0xf] %v233
                  %v235 = vld [vmem:[%s219 + $0x34] sm:$0xf]
                  %236 = vst [vmem:[%s220 + $0x1c] sm:$0xf] %v235
                $region55: #{gpt_forward.8} parent=42 // loop_footer
                  %s218 = sadd.s32 1, %s214
                $region56: #{gpt_forward.8} parent=42 // loop_footer_branch
                  %213 = sbr.rel target = $region52
                $region57: #{gpt_forward.8} parent=42 // loop_exit
                  _
              $region43: #{gpt_forward.8} parent=27 // pred_fallthru
                _
            $region28: #{gpt_forward.8} parent=23 // pred_fallthru
              _
            // Predicated region
            $region29: #{gpt_forward.8} parent=23 // pred_check
              _
            $region30: #{gpt_forward.8} parent=23 // pred_check_branch
              %176 = sbr.rel (0) target = $region32
            $region31: #{gpt_forward.8} parent=23 // pred_region
              loop: start=0, step=1, limit=1
              $region33: #{gpt_forward.8} parent=31 // loop_pre_header
                _
              $region34: #{gpt_forward.8} parent=31 // loop_header
                %s179 = sphi 0, %s183
                %p180 = scmp.ge.s32.totalorder %s179, 1
                %s184 = sphi %s170, %s170
                %s185 = sphi %s165, %s165
              $region35: #{gpt_forward.8} parent=31 // loop_header_branch
                %182 = sbr.rel (%p180) target = $region39
              $region36: #{gpt_forward.8} parent=31 // loop_body
                %v186 = vld [vmem:[%s184] sm:$0xf]
                %187 = vst [vmem:[%s185] sm:$0xf] %v186
                %v188 = vld [vmem:[%s184 + $0x4] sm:$0xf]
                %189 = vst [vmem:[%s185 + $0x4] sm:$0xf] %v188
                %v190 = vld [vmem:[%s184 + $0x10] sm:$0xf]
                %191 = vst [vmem:[%s185 + $0x8] sm:$0xf] %v190
                %v192 = vld [vmem:[%s184 + $0x14] sm:$0xf]
                %193 = vst [vmem:[%s185 + $0xc] sm:$0xf] %v192
                %v194 = vld [vmem:[%s184 + $0x20] sm:$0xf]
                %195 = vst [vmem:[%s185 + $0x10] sm:$0xf] %v194
                %v196 = vld [vmem:[%s184 + $0x24] sm:$0xf]
                %197 = vst [vmem:[%s185 + $0x14] sm:$0xf] %v196
                %v198 = vld [vmem:[%s184 + $0x30] sm:$0xf]
                %199 = vst [vmem:[%s185 + $0x18] sm:$0xf] %v198
                %v200 = vld [vmem:[%s184 + $0x34] sm:$0xf]
                %201 = vst [vmem:[%s185 + $0x1c] sm:$0xf] %v200
              $region37: #{gpt_forward.8} parent=31 // loop_footer
                %s183 = sadd.s32 1, %s179
              $region38: #{gpt_forward.8} parent=31 // loop_footer_branch
                %178 = sbr.rel target = $region34
              $region39: #{gpt_forward.8} parent=31 // loop_exit
                _
            $region32: #{gpt_forward.8} parent=23 // pred_fallthru
              _
          $region24: #{gpt_forward.8} parent=19 // pred_fallthru
            _
          %237 = vnop
        $region20: #{gpt_forward.8} parent=15 // pred_fallthru
          _
        // Predicated region
        $region58: #{gpt_forward.8} parent=15 // pred_check
          %p238 = pneg %p78
        $region59: #{gpt_forward.8} parent=15 // pred_check_branch
          %240 = sbr.rel (%p238) target = $region61
        $region60: #{gpt_forward.8} parent=15 // pred_region
          %s241 = sand.u32 %s68, 1
          %s242 = sand.u32 %s68, 1
          %s243 = smul.addr %s242, 32
          %s244 = scalar_lea.vmem [#allocation6], %s243
          %s245 = smul.u32 2, %s18
          %s246 = smul.addr %s16, 16
          %s247 = sadd.s32 %s245, %s246
          %s248 = smul.addr %s247, 4
          %s249 = scalar_lea.vmem %s1, %s248
          // Predicated region
          $region62: #{gpt_forward.8} parent=60 // pred_check
            _
          $region63: #{gpt_forward.8} parent=60 // pred_check_branch
            %251 = sbr.rel (0) target = $region65
          $region64: #{gpt_forward.8} parent=60 // pred_region
            // Predicated region
            $region66: #{gpt_forward.8} parent=64 // pred_check
              _
            $region67: #{gpt_forward.8} parent=64 // pred_check_branch
              %253 = sbr.rel target = $region69
            $region68: #{gpt_forward.8} parent=64 // pred_region
              // Predicated region
              $region81: #{gpt_forward.8} parent=68 // pred_check
                _
              $region82: #{gpt_forward.8} parent=68 // pred_check_branch
                %282 = sbr.rel (0) target = $region84
              $region83: #{gpt_forward.8} parent=68 // pred_region
                loop: start=0, step=1, limit=1
                $region85: #{gpt_forward.8} parent=83 // loop_pre_header
                  _
                $region86: #{gpt_forward.8} parent=83 // loop_header
                  %s284 = sphi 0, %s288
                  %p285 = scmp.ge.s32.totalorder %s284, 1
                  %s289 = sphi %s249, %s249
                  %s290 = sphi %s244, %s244
                $region87: #{gpt_forward.8} parent=83 // loop_header_branch
                  %287 = sbr.rel (%p285) target = $region91
                $region88: #{gpt_forward.8} parent=83 // loop_body
                  _
                $region89: #{gpt_forward.8} parent=83 // loop_footer
                  %s288 = sadd.s32 1, %s284
                $region90: #{gpt_forward.8} parent=83 // loop_footer_branch
                  %283 = sbr.rel target = $region86
                $region91: #{gpt_forward.8} parent=83 // loop_exit
                  _
                loop: start=0, step=1, limit=1
                $region92: #{gpt_forward.8} parent=83 // loop_pre_header
                  _
                $region93: #{gpt_forward.8} parent=83 // loop_header
                  %s293 = sphi 0, %s297
                  %p294 = scmp.ge.s32.totalorder %s293, 1
                  %s298 = sphi %s249, %s249
                  %s299 = sphi %s244, %s244
                $region94: #{gpt_forward.8} parent=83 // loop_header_branch
                  %296 = sbr.rel (%p294) target = $region98
                $region95: #{gpt_forward.8} parent=83 // loop_body
                  %v300 = vld [vmem:[%s298] sm:$0xf]
                  %301 = vst [vmem:[%s299] sm:$0xf] %v300
                  %v302 = vld [vmem:[%s298 + $0x4] sm:$0xf]
                  %303 = vst [vmem:[%s299 + $0x4] sm:$0xf] %v302
                  %v304 = vld [vmem:[%s298 + $0x10] sm:$0xf]
                  %305 = vst [vmem:[%s299 + $0x8] sm:$0xf] %v304
                  %v306 = vld [vmem:[%s298 + $0x14] sm:$0xf]
                  %307 = vst [vmem:[%s299 + $0xc] sm:$0xf] %v306
                  %v308 = vld [vmem:[%s298 + $0x20] sm:$0xf]
                  %309 = vst [vmem:[%s299 + $0x10] sm:$0xf] %v308
                  %v310 = vld [vmem:[%s298 + $0x24] sm:$0xf]
                  %311 = vst [vmem:[%s299 + $0x14] sm:$0xf] %v310
                  %v312 = vld [vmem:[%s298 + $0x30] sm:$0xf]
                  %313 = vst [vmem:[%s299 + $0x18] sm:$0xf] %v312
                  %v314 = vld [vmem:[%s298 + $0x34] sm:$0xf]
                  %315 = vst [vmem:[%s299 + $0x1c] sm:$0xf] %v314
                $region96: #{gpt_forward.8} parent=83 // loop_footer
                  %s297 = sadd.s32 1, %s293
                $region97: #{gpt_forward.8} parent=83 // loop_footer_branch
                  %292 = sbr.rel target = $region93
                $region98: #{gpt_forward.8} parent=83 // loop_exit
                  _
              $region84: #{gpt_forward.8} parent=68 // pred_fallthru
                _
            $region69: #{gpt_forward.8} parent=64 // pred_fallthru
              _
            // Predicated region
            $region70: #{gpt_forward.8} parent=64 // pred_check
              _
            $region71: #{gpt_forward.8} parent=64 // pred_check_branch
              %255 = sbr.rel (0) target = $region73
            $region72: #{gpt_forward.8} parent=64 // pred_region
              loop: start=0, step=1, limit=1
              $region74: #{gpt_forward.8} parent=72 // loop_pre_header
                _
              $region75: #{gpt_forward.8} parent=72 // loop_header
                %s258 = sphi 0, %s262
                %p259 = scmp.ge.s32.totalorder %s258, 1
                %s263 = sphi %s249, %s249
                %s264 = sphi %s244, %s244
              $region76: #{gpt_forward.8} parent=72 // loop_header_branch
                %261 = sbr.rel (%p259) target = $region80
              $region77: #{gpt_forward.8} parent=72 // loop_body
                %v265 = vld [vmem:[%s263] sm:$0xf]
                %266 = vst [vmem:[%s264] sm:$0xf] %v265
                %v267 = vld [vmem:[%s263 + $0x4] sm:$0xf]
                %268 = vst [vmem:[%s264 + $0x4] sm:$0xf] %v267
                %v269 = vld [vmem:[%s263 + $0x10] sm:$0xf]
                %270 = vst [vmem:[%s264 + $0x8] sm:$0xf] %v269
                %v271 = vld [vmem:[%s263 + $0x14] sm:$0xf]
                %272 = vst [vmem:[%s264 + $0xc] sm:$0xf] %v271
                %v273 = vld [vmem:[%s263 + $0x20] sm:$0xf]
                %274 = vst [vmem:[%s264 + $0x10] sm:$0xf] %v273
                %v275 = vld [vmem:[%s263 + $0x24] sm:$0xf]
                %276 = vst [vmem:[%s264 + $0x14] sm:$0xf] %v275
                %v277 = vld [vmem:[%s263 + $0x30] sm:$0xf]
                %278 = vst [vmem:[%s264 + $0x18] sm:$0xf] %v277
                %v279 = vld [vmem:[%s263 + $0x34] sm:$0xf]
                %280 = vst [vmem:[%s264 + $0x1c] sm:$0xf] %v279
              $region78: #{gpt_forward.8} parent=72 // loop_footer
                %s262 = sadd.s32 1, %s258
              $region79: #{gpt_forward.8} parent=72 // loop_footer_branch
                %257 = sbr.rel target = $region75
              $region80: #{gpt_forward.8} parent=72 // loop_exit
                _
            $region73: #{gpt_forward.8} parent=64 // pred_fallthru
              _
          $region65: #{gpt_forward.8} parent=60 // pred_fallthru
            _
          %316 = vnop
        $region61: #{gpt_forward.8} parent=15 // pred_fallthru
          _
        // Predicated region
        $region99: #{gpt_forward.8} parent=15 // pred_check
          %p317 = pneg %p106
        $region100: #{gpt_forward.8} parent=15 // pred_check_branch
          %319 = sbr.rel (%p317) target = $region102
        $region101: #{gpt_forward.8} parent=15 // pred_region
          %s320 = sand.u32 %s96, 1
          %s321 = sand.u32 %s96, 1
          %s322 = smul.addr %s321, 32
          %s323 = scalar_lea.vmem [#allocation7], %s322
          %s324 = smul.u32 2, %s18
          %s325 = smul.addr %s16, 16
          %s326 = sadd.s32 %s324, %s325
          %s327 = smul.addr %s326, 4
          %s328 = scalar_lea.vmem %s2, %s327
          // Predicated region
          $region103: #{gpt_forward.8} parent=101 // pred_check
            _
          $region104: #{gpt_forward.8} parent=101 // pred_check_branch
            %330 = sbr.rel (0) target = $region106
          $region105: #{gpt_forward.8} parent=101 // pred_region
            // Predicated region
            $region107: #{gpt_forward.8} parent=105 // pred_check
              _
            $region108: #{gpt_forward.8} parent=105 // pred_check_branch
              %332 = sbr.rel target = $region110
            $region109: #{gpt_forward.8} parent=105 // pred_region
              // Predicated region
              $region122: #{gpt_forward.8} parent=109 // pred_check
                _
              $region123: #{gpt_forward.8} parent=109 // pred_check_branch
                %361 = sbr.rel (0) target = $region125
              $region124: #{gpt_forward.8} parent=109 // pred_region
                loop: start=0, step=1, limit=1
                $region126: #{gpt_forward.8} parent=124 // loop_pre_header
                  _
                $region127: #{gpt_forward.8} parent=124 // loop_header
                  %s363 = sphi 0, %s367
                  %p364 = scmp.ge.s32.totalorder %s363, 1
                  %s368 = sphi %s328, %s328
                  %s369 = sphi %s323, %s323
                $region128: #{gpt_forward.8} parent=124 // loop_header_branch
                  %366 = sbr.rel (%p364) target = $region132
                $region129: #{gpt_forward.8} parent=124 // loop_body
                  _
                $region130: #{gpt_forward.8} parent=124 // loop_footer
                  %s367 = sadd.s32 1, %s363
                $region131: #{gpt_forward.8} parent=124 // loop_footer_branch
                  %362 = sbr.rel target = $region127
                $region132: #{gpt_forward.8} parent=124 // loop_exit
                  _
                loop: start=0, step=1, limit=1
                $region133: #{gpt_forward.8} parent=124 // loop_pre_header
                  _
                $region134: #{gpt_forward.8} parent=124 // loop_header
                  %s372 = sphi 0, %s376
                  %p373 = scmp.ge.s32.totalorder %s372, 1
                  %s377 = sphi %s328, %s328
                  %s378 = sphi %s323, %s323
                $region135: #{gpt_forward.8} parent=124 // loop_header_branch
                  %375 = sbr.rel (%p373) target = $region139
                $region136: #{gpt_forward.8} parent=124 // loop_body
                  %v379 = vld [vmem:[%s377] sm:$0xf]
                  %380 = vst [vmem:[%s378] sm:$0xf] %v379
                  %v381 = vld [vmem:[%s377 + $0x4] sm:$0xf]
                  %382 = vst [vmem:[%s378 + $0x4] sm:$0xf] %v381
                  %v383 = vld [vmem:[%s377 + $0x10] sm:$0xf]
                  %384 = vst [vmem:[%s378 + $0x8] sm:$0xf] %v383
                  %v385 = vld [vmem:[%s377 + $0x14] sm:$0xf]
                  %386 = vst [vmem:[%s378 + $0xc] sm:$0xf] %v385
                  %v387 = vld [vmem:[%s377 + $0x20] sm:$0xf]
                  %388 = vst [vmem:[%s378 + $0x10] sm:$0xf] %v387
                  %v389 = vld [vmem:[%s377 + $0x24] sm:$0xf]
                  %390 = vst [vmem:[%s378 + $0x14] sm:$0xf] %v389
                  %v391 = vld [vmem:[%s377 + $0x30] sm:$0xf]
                  %392 = vst [vmem:[%s378 + $0x18] sm:$0xf] %v391
                  %v393 = vld [vmem:[%s377 + $0x34] sm:$0xf]
                  %394 = vst [vmem:[%s378 + $0x1c] sm:$0xf] %v393
                $region137: #{gpt_forward.8} parent=124 // loop_footer
                  %s376 = sadd.s32 1, %s372
                $region138: #{gpt_forward.8} parent=124 // loop_footer_branch
                  %371 = sbr.rel target = $region134
                $region139: #{gpt_forward.8} parent=124 // loop_exit
                  _
              $region125: #{gpt_forward.8} parent=109 // pred_fallthru
                _
            $region110: #{gpt_forward.8} parent=105 // pred_fallthru
              _
            // Predicated region
            $region111: #{gpt_forward.8} parent=105 // pred_check
              _
            $region112: #{gpt_forward.8} parent=105 // pred_check_branch
              %334 = sbr.rel (0) target = $region114
            $region113: #{gpt_forward.8} parent=105 // pred_region
              loop: start=0, step=1, limit=1
              $region115: #{gpt_forward.8} parent=113 // loop_pre_header
                _
              $region116: #{gpt_forward.8} parent=113 // loop_header
                %s337 = sphi 0, %s341
                %p338 = scmp.ge.s32.totalorder %s337, 1
                %s342 = sphi %s328, %s328
                %s343 = sphi %s323, %s323
              $region117: #{gpt_forward.8} parent=113 // loop_header_branch
                %340 = sbr.rel (%p338) target = $region121
              $region118: #{gpt_forward.8} parent=113 // loop_body
                %v344 = vld [vmem:[%s342] sm:$0xf]
                %345 = vst [vmem:[%s343] sm:$0xf] %v344
                %v346 = vld [vmem:[%s342 + $0x4] sm:$0xf]
                %347 = vst [vmem:[%s343 + $0x4] sm:$0xf] %v346
                %v348 = vld [vmem:[%s342 + $0x10] sm:$0xf]
                %349 = vst [vmem:[%s343 + $0x8] sm:$0xf] %v348
                %v350 = vld [vmem:[%s342 + $0x14] sm:$0xf]
                %351 = vst [vmem:[%s343 + $0xc] sm:$0xf] %v350
                %v352 = vld [vmem:[%s342 + $0x20] sm:$0xf]
                %353 = vst [vmem:[%s343 + $0x10] sm:$0xf] %v352
                %v354 = vld [vmem:[%s342 + $0x24] sm:$0xf]
                %355 = vst [vmem:[%s343 + $0x14] sm:$0xf] %v354
                %v356 = vld [vmem:[%s342 + $0x30] sm:$0xf]
                %357 = vst [vmem:[%s343 + $0x18] sm:$0xf] %v356
                %v358 = vld [vmem:[%s342 + $0x34] sm:$0xf]
                %359 = vst [vmem:[%s343 + $0x1c] sm:$0xf] %v358
              $region119: #{gpt_forward.8} parent=113 // loop_footer
                %s341 = sadd.s32 1, %s337
              $region120: #{gpt_forward.8} parent=113 // loop_footer_branch
                %336 = sbr.rel target = $region116
              $region121: #{gpt_forward.8} parent=113 // loop_exit
                _
            $region114: #{gpt_forward.8} parent=105 // pred_fallthru
              _
          $region106: #{gpt_forward.8} parent=101 // pred_fallthru
            _
          %395 = vnop
        $region102: #{gpt_forward.8} parent=15 // pred_fallthru
          _
      $region16: #{gpt_forward.8} parent=5 // pred_fallthru
        _
      %p396 = scmp.le.s32.totalorder 1, %s9
      %p397 = scmp.lt.s32.totalorder %s9, 9
      %p398 = pnand %p396, %p397
      %p399 = pneg %p398
      // Predicated region
      $region140: #{gpt_forward.8} parent=5 // pred_check
        _
      $region141: #{gpt_forward.8} parent=5 // pred_check_branch
        %401 = sbr.rel (%p398) target = $region143
      $region142: #{gpt_forward.8} parent=5 // pred_region
        %s402 = ssub.s32 %s9, 1
        %s403 = sand.u32 %s43, 1
        %s404 = sand.u32 %s43, 1
        %s405 = smul.addr %s404, 32
        %s406 = scalar_lea.vmem [#allocation5], %s405
        // Predicated region
        $region144: #{gpt_forward.8} parent=142 // pred_check
          %p407 = pneg %p56
        $region145: #{gpt_forward.8} parent=142 // pred_check_branch
          %409 = sbr.rel (%p407) target = $region147
        $region146: #{gpt_forward.8} parent=142 // pred_region
          _
        $region147: #{gpt_forward.8} parent=142 // pred_fallthru
          _
        %s410 = sand.u32 %s71, 1
        %s411 = sand.u32 %s71, 1
        %s412 = smul.addr %s411, 32
        %s413 = scalar_lea.vmem [#allocation6], %s412
        // Predicated region
        $region148: #{gpt_forward.8} parent=142 // pred_check
          %p414 = pneg %p84
        $region149: #{gpt_forward.8} parent=142 // pred_check_branch
          %416 = sbr.rel (%p414) target = $region151
        $region150: #{gpt_forward.8} parent=142 // pred_region
          _
        $region151: #{gpt_forward.8} parent=142 // pred_fallthru
          _
        %s417 = sand.u32 %s99, 1
        %s418 = sand.u32 %s99, 1
        %s419 = smul.addr %s418, 32
        %s420 = scalar_lea.vmem [#allocation7], %s419
        // Predicated region
        $region152: #{gpt_forward.8} parent=142 // pred_check
          %p421 = pneg %p112
        $region153: #{gpt_forward.8} parent=142 // pred_check_branch
          %423 = sbr.rel (%p421) target = $region155
        $region154: #{gpt_forward.8} parent=142 // pred_region
          _
        $region155: #{gpt_forward.8} parent=142 // pred_fallthru
          _
        %s424 = sand.u32 %s43, 1
        %s425 = sand.u32 %s43, 1
        %s426 = smul.addr %s425, 32
        %s427 = scalar_lea.vmem [#allocation5], %s426
        %p428 = pneg %p56
        %p429 = pneg %p53
        %s430 = sand.u32 %s71, 1
        %s431 = sand.u32 %s71, 1
        %s432 = smul.addr %s431, 32
        %s433 = scalar_lea.vmem [#allocation6], %s432
        %p434 = pneg %p84
        %p435 = pneg %p81
        %s436 = sand.u32 %s99, 1
        %s437 = sand.u32 %s99, 1
        %s438 = smul.addr %s437, 32
        %s439 = scalar_lea.vmem [#allocation7], %s438
        %p440 = pneg %p112
        %p441 = pneg %p109
        %p442 = pneg %p140
        %p443 = pneg %p137
        %s444 = sand.u32 %s127, 1
        %s445 = sand.u32 %s127, 1
        %s446 = smul.addr %s445, 32
        %s447 = scalar_lea.vmem [#allocation8], %s446
        %s448 = smul.u32 2, %s20
        %s449 = smul.u32 2, %s21
        %s450 = smul.u32 2, %s21
        %s451 = smul.u32 2, %s20
        %p453 = scmp.eq.s32.totalorder %s21, 0
        // Predicated region
        $region156: #{gpt_forward.8} parent=142 // pred_check
          %p454 = pneg %p453
        $region157: #{gpt_forward.8} parent=142 // pred_check_branch
          %456 = sbr.rel (%p454) target = $region159
        $region158: #{gpt_forward.8} parent=142 // pred_region
          %vm457 = vcmask 7168
          %458 = vst.msk [vmem:[#allocation2] sm:$0xff] %vm457, -inf
          %459 = vst.msk [vmem:[#allocation2 + $0x8] sm:$0xff] %vm457, -inf
          %460 = vst.msk [vmem:[#allocation2 + $0x10] sm:$0xff] %vm457, -inf
          %461 = vst.msk [vmem:[#allocation2 + $0x18] sm:$0xff] %vm457, -inf
          %462 = vst.msk [vmem:[#allocation2 + $0x20] sm:$0xff] %vm457, -inf
          %463 = vst.msk [vmem:[#allocation2 + $0x28] sm:$0xff] %vm457, -inf
          %464 = vst.msk [vmem:[#allocation2 + $0x30] sm:$0xff] %vm457, -inf
          %465 = vst.msk [vmem:[#allocation2 + $0x38] sm:$0xff] %vm457, -inf
          %466 = vst.msk [vmem:[#allocation3] sm:$0xff] %vm457, 0.0
          %467 = vst.msk [vmem:[#allocation3 + $0x8] sm:$0xff] %vm457, 0.0
          %468 = vst.msk [vmem:[#allocation3 + $0x10] sm:$0xff] %vm457, 0.0
          %469 = vst.msk [vmem:[#allocation3 + $0x18] sm:$0xff] %vm457, 0.0
          %470 = vst.msk [vmem:[#allocation3 + $0x20] sm:$0xff] %vm457, 0.0
          %471 = vst.msk [vmem:[#allocation3 + $0x28] sm:$0xff] %vm457, 0.0
          %472 = vst.msk [vmem:[#allocation3 + $0x30] sm:$0xff] %vm457, 0.0
          %473 = vst.msk [vmem:[#allocation3 + $0x38] sm:$0xff] %vm457, 0.0
          %vm474 = vcmask 130048
          %475 = vst.msk [vmem:[#allocation4] sm:$0xff] %vm474, 0.0
          %476 = vst.msk [vmem:[#allocation4 + $0x8] sm:$0xff] %vm474, 0.0
          %477 = vst.msk [vmem:[#allocation4 + $0x10] sm:$0xff] %vm474, 0.0
          %478 = vst.msk [vmem:[#allocation4 + $0x18] sm:$0xff] %vm474, 0.0
          %479 = vst.msk [vmem:[#allocation4 + $0x20] sm:$0xff] %vm474, 0.0
          %480 = vst.msk [vmem:[#allocation4 + $0x28] sm:$0xff] %vm474, 0.0
          %481 = vst.msk [vmem:[#allocation4 + $0x30] sm:$0xff] %vm474, 0.0
          %482 = vst.msk [vmem:[#allocation4 + $0x38] sm:$0xff] %vm474, 0.0
        $region159: #{gpt_forward.8} parent=142 // pred_fallthru
          _
        %v483 = vld [vmem:[%s406] sm:$0xf]
        %v484 = vld [vmem:[%s406 + $0x4] sm:$0xf]
        %v485 = vld [vmem:[%s406 + $0x8] sm:$0xf]
        %v486 = vld [vmem:[%s406 + $0xc] sm:$0xf]
        %v487 = vld [vmem:[%s406 + $0x10] sm:$0xf]
        %v488 = vld [vmem:[%s406 + $0x14] sm:$0xf]
        %v489 = vld [vmem:[%s406 + $0x18] sm:$0xf]
        %v490 = vld [vmem:[%s406 + $0x1c] sm:$0xf]
        %v491 = vld [vmem:[%s413] sm:$0xf]
        %v492 = vld [vmem:[%s413 + $0x4] sm:$0xf]
        %v493 = vld [vmem:[%s413 + $0x8] sm:$0xf]
        %v494 = vld [vmem:[%s413 + $0xc] sm:$0xf]
        %v495 = vld [vmem:[%s413 + $0x10] sm:$0xf]
        %v496 = vld [vmem:[%s413 + $0x14] sm:$0xf]
        %v497 = vld [vmem:[%s413 + $0x18] sm:$0xf]
        %v498 = vld [vmem:[%s413 + $0x1c] sm:$0xf]
        %v499 = vld [vmem:[%s420] sm:$0xf]
        %v500 = vld [vmem:[%s420 + $0x4] sm:$0xf]
        %v501 = vld [vmem:[%s420 + $0x8] sm:$0xf]
        %v502 = vld [vmem:[%s420 + $0xc] sm:$0xf]
        %v503 = vld [vmem:[%s420 + $0x10] sm:$0xf]
        %v504 = vld [vmem:[%s420 + $0x14] sm:$0xf]
        %v505 = vld [vmem:[%s420 + $0x18] sm:$0xf]
        %v506 = vld [vmem:[%s420 + $0x1c] sm:$0xf]
        %v509 = vunpack.c.l.b16 %v483
        %v510 = vunpack.c.l.b16 %v484
        %v511 = vpack.c.b16 %v510, %v509
        %v514 = vunpack.c.l.b16 %v491
        %v515 = vunpack.c.l.b16 %v492
        %v516 = vpack.c.b16 %v515, %v514
        %vm517 = vcmask 130048
        %v519 = vsel %vm517, %v511, 0
        %v522 = vsel %vm517, %v516, 0
        %524 = vmatprep.subr.bf16.mxu0 0
        %525 = vmatpush1.bf16.xpose.msra.mxu0 %v522
        %526 = vmatprep.subr.bf16.mxu0 0
        %527 = vmatpush1.bf16.xpose.msra.mxu0 0
        %528 = vmatprep.subr.bf16.mxu0 0
        %529 = vmatpush1.bf16.xpose.msra.mxu0 0
        %530 = vmatprep.subr.bf16.mxu0 0
        %531 = vmatpush1.bf16.xpose.msra.mxu0 0
        %532 = vmatprep.subr.bf16.mxu0 0
        %533 = vmatpush1.bf16.xpose.msra.mxu0 0
        %534 = vmatprep.subr.bf16.mxu0 0
        %535 = vmatpush1.bf16.xpose.msra.mxu0 0
        %536 = vmatprep.subr.bf16.mxu0 0
        %537 = vmatpush1.bf16.xpose.msra.mxu0 0
        %538 = vmatprep.subr.bf16.mxu0 0
        %539 = vmatpush1.bf16.xpose.msra.mxu0 0
        %540 = vmatprep.subr.bf16.mxu0 0
        %541 = vmatpush1.bf16.xpose.msra.mxu0 0
        %542 = vmatprep.subr.bf16.mxu0 0
        %543 = vmatpush1.bf16.xpose.msra.mxu0 0
        %544 = vmatprep.subr.bf16.mxu0 0
        %545 = vmatpush1.bf16.xpose.msra.mxu0 0
        %546 = vmatprep.subr.bf16.mxu0 0
        %547 = vmatpush1.bf16.xpose.msra.mxu0 0
        %548 = vmatprep.subr.bf16.mxu0 0
        %549 = vmatpush1.bf16.xpose.msra.mxu0 0
        %550 = vmatprep.subr.bf16.mxu0 0
        %551 = vmatpush1.bf16.xpose.msra.mxu0 0
        %552 = vmatprep.subr.bf16.mxu0 0
        %553 = vmatpush1.bf16.xpose.msra.mxu0 0
        %554 = vmatprep.subr.bf16.mxu0 0
        %555 = vmatpush1.bf16.xpose.msra.mxu0 0
        %556 = vmatprep.mubr.bf16.mxu0 0
        %557 = vmatmul.mubr.bf16.gmra.mrb[0].mxu0 %v519
        %v558 = vpop.f32.mrb[0].mxu0
        %v559 = vadd.f32 0.0, %v558
        %v560 = vpop.f32.mrb[0].mxu0
        %v561 = vpop.f32.mrb[0].mxu0
        %v562 = vadd.f32 0.0, %v561
        %v563 = vpop.f32.mrb[0].mxu0
        %564 = vdwg.mxu0
        %v567 = vunpack.c.l.b16 %v485
        %v568 = vunpack.c.l.b16 %v486
        %v569 = vpack.c.b16 %v568, %v567
        %v572 = vunpack.c.l.b16 %v493
        %v573 = vunpack.c.l.b16 %v494
        %v574 = vpack.c.b16 %v573, %v572
        %v576 = vsel %vm517, %v569, 0
        %v579 = vsel %vm517, %v574, 0
        %581 = vmatprep.subr.bf16.mxu0 0
        %582 = vmatpush1.bf16.xpose.msra.mxu0 %v579
        %583 = vmatprep.subr.bf16.mxu0 0
        %584 = vmatpush1.bf16.xpose.msra.mxu0 0
        %585 = vmatprep.subr.bf16.mxu0 0
        %586 = vmatpush1.bf16.xpose.msra.mxu0 0
        %587 = vmatprep.subr.bf16.mxu0 0
        %588 = vmatpush1.bf16.xpose.msra.mxu0 0
        %589 = vmatprep.subr.bf16.mxu0 0
        %590 = vmatpush1.bf16.xpose.msra.mxu0 0
        %591 = vmatprep.subr.bf16.mxu0 0
        %592 = vmatpush1.bf16.xpose.msra.mxu0 0
        %593 = vmatprep.subr.bf16.mxu0 0
        %594 = vmatpush1.bf16.xpose.msra.mxu0 0
        %595 = vmatprep.subr.bf16.mxu0 0
        %596 = vmatpush1.bf16.xpose.msra.mxu0 0
        %597 = vmatprep.subr.bf16.mxu0 0
        %598 = vmatpush1.bf16.xpose.msra.mxu0 0
        %599 = vmatprep.subr.bf16.mxu0 0
        %600 = vmatpush1.bf16.xpose.msra.mxu0 0
        %601 = vmatprep.subr.bf16.mxu0 0
        %602 = vmatpush1.bf16.xpose.msra.mxu0 0
        %603 = vmatprep.subr.bf16.mxu0 0
        %604 = vmatpush1.bf16.xpose.msra.mxu0 0
        %605 = vmatprep.subr.bf16.mxu0 0
        %606 = vmatpush1.bf16.xpose.msra.mxu0 0
        %607 = vmatprep.subr.bf16.mxu0 0
        %608 = vmatpush1.bf16.xpose.msra.mxu0 0
        %609 = vmatprep.subr.bf16.mxu0 0
        %610 = vmatpush1.bf16.xpose.msra.mxu0 0
        %611 = vmatprep.subr.bf16.mxu0 0
        %612 = vmatpush1.bf16.xpose.msra.mxu0 0
        %613 = vmatprep.mubr.bf16.mxu0 0
        %614 = vmatmul.mubr.bf16.gmra.mrb[0].mxu0 %v576
        %v615 = vpop.f32.mrb[0].mxu0
        %v616 = vadd.f32 0.0, %v615
        %v617 = vpop.f32.mrb[0].mxu0
        %v618 = vpop.f32.mrb[0].mxu0
        %v619 = vadd.f32 0.0, %v618
        %v620 = vpop.f32.mrb[0].mxu0
        %621 = vdwg.mxu0
        %v624 = vunpack.c.l.b16 %v487
        %v625 = vunpack.c.l.b16 %v488
        %v626 = vpack.c.b16 %v625, %v624
        %v629 = vunpack.c.l.b16 %v495
        %v630 = vunpack.c.l.b16 %v496
        %v631 = vpack.c.b16 %v630, %v629
        %v633 = vsel %vm517, %v626, 0
        %v636 = vsel %vm517, %v631, 0
        %638 = vmatprep.subr.bf16.mxu0 0
        %639 = vmatpush1.bf16.xpose.msra.mxu0 %v636
        %640 = vmatprep.subr.bf16.mxu0 0
        %641 = vmatpush1.bf16.xpose.msra.mxu0 0
        %642 = vmatprep.subr.bf16.mxu0 0
        %643 = vmatpush1.bf16.xpose.msra.mxu0 0
        %644 = vmatprep.subr.bf16.mxu0 0
        %645 = vmatpush1.bf16.xpose.msra.mxu0 0
        %646 = vmatprep.subr.bf16.mxu0 0
        %647 = vmatpush1.bf16.xpose.msra.mxu0 0
        %648 = vmatprep.subr.bf16.mxu0 0
        %649 = vmatpush1.bf16.xpose.msra.mxu0 0
        %650 = vmatprep.subr.bf16.mxu0 0
        %651 = vmatpush1.bf16.xpose.msra.mxu0 0
        %652 = vmatprep.subr.bf16.mxu0 0
        %653 = vmatpush1.bf16.xpose.msra.mxu0 0
        %654 = vmatprep.subr.bf16.mxu0 0
        %655 = vmatpush1.bf16.xpose.msra.mxu0 0
        %656 = vmatprep.subr.bf16.mxu0 0
        %657 = vmatpush1.bf16.xpose.msra.mxu0 0
        %658 = vmatprep.subr.bf16.mxu0 0
        %659 = vmatpush1.bf16.xpose.msra.mxu0 0
        %660 = vmatprep.subr.bf16.mxu0 0
        %661 = vmatpush1.bf16.xpose.msra.mxu0 0
        %662 = vmatprep.subr.bf16.mxu0 0
        %663 = vmatpush1.bf16.xpose.msra.mxu0 0
        %664 = vmatprep.subr.bf16.mxu0 0
        %665 = vmatpush1.bf16.xpose.msra.mxu0 0
        %666 = vmatprep.subr.bf16.mxu0 0
        %667 = vmatpush1.bf16.xpose.msra.mxu0 0
        %668 = vmatprep.subr.bf16.mxu0 0
        %669 = vmatpush1.bf16.xpose.msra.mxu0 0
        %670 = vmatprep.mubr.bf16.mxu0 0
        %671 = vmatmul.mubr.bf16.gmra.mrb[0].mxu0 %v633
        %v672 = vpop.f32.mrb[0].mxu0
        %v673 = vadd.f32 0.0, %v672
        %v674 = vpop.f32.mrb[0].mxu0
        %v675 = vpop.f32.mrb[0].mxu0
        %v676 = vadd.f32 0.0, %v675
        %v677 = vpop.f32.mrb[0].mxu0
        %678 = vdwg.mxu0
        %v681 = vunpack.c.l.b16 %v489
        %v682 = vunpack.c.l.b16 %v490
        %v683 = vpack.c.b16 %v682, %v681
        %v686 = vunpack.c.l.b16 %v497
        %v687 = vunpack.c.l.b16 %v498
        %v688 = vpack.c.b16 %v687, %v686
        %v690 = vsel %vm517, %v683, 0
        %v693 = vsel %vm517, %v688, 0
        %695 = vmatprep.subr.bf16.mxu0 0
        %696 = vmatpush1.bf16.xpose.msra.mxu0 %v693
        %697 = vmatprep.subr.bf16.mxu0 0
        %698 = vmatpush1.bf16.xpose.msra.mxu0 0
        %699 = vmatprep.subr.bf16.mxu0 0
        %700 = vmatpush1.bf16.xpose.msra.mxu0 0
        %701 = vmatprep.subr.bf16.mxu0 0
        %702 = vmatpush1.bf16.xpose.msra.mxu0 0
        %703 = vmatprep.subr.bf16.mxu0 0
        %704 = vmatpush1.bf16.xpose.msra.mxu0 0
        %705 = vmatprep.subr.bf16.mxu0 0
        %706 = vmatpush1.bf16.xpose.msra.mxu0 0
        %707 = vmatprep.subr.bf16.mxu0 0
        %708 = vmatpush1.bf16.xpose.msra.mxu0 0
        %709 = vmatprep.subr.bf16.mxu0 0
        %710 = vmatpush1.bf16.xpose.msra.mxu0 0
        %711 = vmatprep.subr.bf16.mxu0 0
        %712 = vmatpush1.bf16.xpose.msra.mxu0 0
        %713 = vmatprep.subr.bf16.mxu0 0
        %714 = vmatpush1.bf16.xpose.msra.mxu0 0
        %715 = vmatprep.subr.bf16.mxu0 0
        %716 = vmatpush1.bf16.xpose.msra.mxu0 0
        %717 = vmatprep.subr.bf16.mxu0 0
        %718 = vmatpush1.bf16.xpose.msra.mxu0 0
        %719 = vmatprep.subr.bf16.mxu0 0
        %720 = vmatpush1.bf16.xpose.msra.mxu0 0
        %721 = vmatprep.subr.bf16.mxu0 0
        %722 = vmatpush1.bf16.xpose.msra.mxu0 0
        %723 = vmatprep.subr.bf16.mxu0 0
        %724 = vmatpush1.bf16.xpose.msra.mxu0 0
        %725 = vmatprep.subr.bf16.mxu0 0
        %726 = vmatpush1.bf16.xpose.msra.mxu0 0
        %727 = vmatprep.mubr.bf16.mxu0 0
        %728 = vmatmul.mubr.bf16.gmra.mrb[0].mxu0 %v690
        %v729 = vpop.f32.mrb[0].mxu0
        %v730 = vadd.f32 0.0, %v729
        %v731 = vpop.f32.mrb[0].mxu0
        %v732 = vpop.f32.mrb[0].mxu0
        %v733 = vadd.f32 0.0, %v732
        %v734 = vpop.f32.mrb[0].mxu0
        %735 = vdwg.mxu0
        %v736 = vmul.f32 %v559, 0.25
        %v737 = vmul.f32 %v562, 0.25
        %v738 = vmul.f32 %v616, 0.25
        %v739 = vmul.f32 %v619, 0.25
        %v740 = vmul.f32 %v673, 0.25
        %v741 = vmul.f32 %v676, 0.25
        %v742 = vmul.f32 %v730, 0.25
        %v743 = vmul.f32 %v733, 0.25
        %s744 = smul.u32 %s20, 16
        %v745 = vlaneseq
        %v746 = vshrl.u32 %v745, 7
        %v747 = vadd.s32 %v746, 8
        %v748 = vstv %s744
        %v749 = vadd.s32 %v748, %v746
        %v750 = vadd.s32 %v748, %v747
        %s751 = smul.u32 %s21, 16
        %v752 = vlaneseq
        %v753 = vand.u32 %v752, 127
        %v754 = vstv %s751
        %v755 = vadd.s32 %v754, %v753
        %vm756 = vcmp.ge.s32.totalorder %v749, %v755
        %vm757 = vcmp.ge.s32.totalorder %v750, %v755
        %v758 = vsel %vm756, 1, 0
        %v759 = vsel %vm757, 1, 0
        %vm760 = vcmp.eq.s32.totalorder %v758, 1
        %vm761 = vcmp.eq.s32.totalorder %v759, 1
        %v762 = vsel %vm760, %v736, -inf
        %v763 = vsel %vm761, %v737, -inf
        %v764 = vsel %vm760, %v738, -inf
        %v765 = vsel %vm761, %v739, -inf
        %v766 = vsel %vm760, %v740, -inf
        %v767 = vsel %vm761, %v741, -inf
        %v768 = vsel %vm760, %v742, -inf
        %v769 = vsel %vm761, %v743, -inf
        %v770 = vld [vmem:[#allocation2] sm:$0xff]
        %v771 = vld [vmem:[#allocation2 + $0x8] sm:$0xff]
        %v772 = vld [vmem:[#allocation2 + $0x10] sm:$0xff]
        %v773 = vld [vmem:[#allocation2 + $0x18] sm:$0xff]
        %v774 = vld [vmem:[#allocation2 + $0x20] sm:$0xff]
        %v775 = vld [vmem:[#allocation2 + $0x28] sm:$0xff]
        %v776 = vld [vmem:[#allocation2 + $0x30] sm:$0xff]
        %v777 = vld [vmem:[#allocation2 + $0x38] sm:$0xff]
        %v778 = vsel %vm517, %v762, -inf
        %779 = vmax.xlane.f32.xlu0 %v778
        %v780 = vpop.xlane.xlu0 %779
        %v781 = vsel %vm517, %v763, -inf
        %782 = vmax.xlane.f32.xlu0 %v781
        %v783 = vpop.xlane.xlu0 %782
        %v784 = vsel %vm517, %v764, -inf
        %785 = vmax.xlane.f32.xlu0 %v784
        %v786 = vpop.xlane.xlu0 %785
        %v787 = vsel %vm517, %v765, -inf
        %788 = vmax.xlane.f32.xlu0 %v787
        %v789 = vpop.xlane.xlu0 %788
        %v790 = vsel %vm517, %v766, -inf
        %791 = vmax.xlane.f32.xlu0 %v790
        %v792 = vpop.xlane.xlu0 %791
        %v793 = vsel %vm517, %v767, -inf
        %794 = vmax.xlane.f32.xlu0 %v793
        %v795 = vpop.xlane.xlu0 %794
        %v796 = vsel %vm517, %v768, -inf
        %797 = vmax.xlane.f32.xlu0 %v796
        %v798 = vpop.xlane.xlu0 %797
        %v799 = vsel %vm517, %v769, -inf
        %800 = vmax.xlane.f32.xlu0 %v799
        %v801 = vpop.xlane.xlu0 %800
        %v802 = vmax.f32 %v770, %v780
        %v803 = vmax.f32 %v771, %v783
        %v804 = vmax.f32 %v772, %v786
        %v805 = vmax.f32 %v773, %v789
        %v806 = vmax.f32 %v774, %v792
        %v807 = vmax.f32 %v775, %v795
        %v808 = vmax.f32 %v776, %v798
        %v809 = vmax.f32 %v777, %v801
        %v810 = vsub.f32 %v770, %v802
        %v811 = vsub.f32 %v771, %v803
        %v812 = vsub.f32 %v772, %v804
        %v813 = vsub.f32 %v773, %v805
        %v814 = vsub.f32 %v774, %v806
        %v815 = vsub.f32 %v775, %v807
        %v816 = vsub.f32 %v776, %v808
        %v817 = vsub.f32 %v777, %v809
        %v818 = vmul.f32 %v810, 1.442695
        %v819 = vpow.pop %v818
        %v820 = vmul.f32 %v811, 1.442695
        %v821 = vpow.pop %v820
        %v822 = vmul.f32 %v812, 1.442695
        %v823 = vpow.pop %v822
        %v824 = vmul.f32 %v813, 1.442695
        %v825 = vpow.pop %v824
        %v826 = vmul.f32 %v814, 1.442695
        %v827 = vpow.pop %v826
        %v828 = vmul.f32 %v815, 1.442695
        %v829 = vpow.pop %v828
        %v830 = vmul.f32 %v816, 1.442695
        %v831 = vpow.pop %v830
        %v832 = vmul.f32 %v817, 1.442695
        %v833 = vpow.pop %v832
        %835 = vset.pattern.permute.xlu0 0
        %836 = vperm.xlu0 %835, %v802
        %v837 = vpop.permute.xlu0 %836
        %840 = vset.pattern.permute.xlu0 0
        %841 = vperm.xlu0 %840, %v803
        %v842 = vpop.permute.xlu0 %841
        %845 = vset.pattern.permute.xlu0 0
        %846 = vperm.xlu0 %845, %v804
        %v847 = vpop.permute.xlu0 %846
        %850 = vset.pattern.permute.xlu0 0
        %851 = vperm.xlu0 %850, %v805
        %v852 = vpop.permute.xlu0 %851
        %855 = vset.pattern.permute.xlu0 0
        %856 = vperm.xlu0 %855, %v806
        %v857 = vpop.permute.xlu0 %856
        %860 = vset.pattern.permute.xlu0 0
        %861 = vperm.xlu0 %860, %v807
        %v862 = vpop.permute.xlu0 %861
        %865 = vset.pattern.permute.xlu0 0
        %866 = vperm.xlu0 %865, %v808
        %v867 = vpop.permute.xlu0 %866
        %870 = vset.pattern.permute.xlu0 0
        %871 = vperm.xlu0 %870, %v809
        %v872 = vpop.permute.xlu0 %871
        %v874 = vsub.f32 %v762, %v837
        %v875 = vsub.f32 %v763, %v842
        %v876 = vsub.f32 %v764, %v847
        %v877 = vsub.f32 %v765, %v852
        %v878 = vsub.f32 %v766, %v857
        %v879 = vsub.f32 %v767, %v862
        %v880 = vsub.f32 %v768, %v867
        %v881 = vsub.f32 %v769, %v872
        %v882 = vmul.f32 %v874, 1.442695
        %v883 = vpow.pop %v882
        %v884 = vmul.f32 %v875, 1.442695
        %v885 = vpow.pop %v884
        %v886 = vmul.f32 %v876, 1.442695
        %v887 = vpow.pop %v886
        %v888 = vmul.f32 %v877, 1.442695
        %v889 = vpow.pop %v888
        %v890 = vmul.f32 %v878, 1.442695
        %v891 = vpow.pop %v890
        %v892 = vmul.f32 %v879, 1.442695
        %v893 = vpow.pop %v892
        %v894 = vmul.f32 %v880, 1.442695
        %v895 = vpow.pop %v894
        %v896 = vmul.f32 %v881, 1.442695
        %v897 = vpow.pop %v896
        %v898 = vld [vmem:[#allocation3] sm:$0xff]
        %v899 = vld [vmem:[#allocation3 + $0x8] sm:$0xff]
        %v900 = vld [vmem:[#allocation3 + $0x10] sm:$0xff]
        %v901 = vld [vmem:[#allocation3 + $0x18] sm:$0xff]
        %v902 = vld [vmem:[#allocation3 + $0x20] sm:$0xff]
        %v903 = vld [vmem:[#allocation3 + $0x28] sm:$0xff]
        %v904 = vld [vmem:[#allocation3 + $0x30] sm:$0xff]
        %v905 = vld [vmem:[#allocation3 + $0x38] sm:$0xff]
        %v906 = vmul.f32 %v819, %v898
        %v907 = vmul.f32 %v821, %v899
        %v908 = vmul.f32 %v823, %v900
        %v909 = vmul.f32 %v825, %v901
        %v910 = vmul.f32 %v827, %v902
        %v911 = vmul.f32 %v829, %v903
        %v912 = vmul.f32 %v831, %v904
        %v913 = vmul.f32 %v833, %v905
        %v914 = vsel %vm517, %v883, 0.0
        %915 = vadd.xlane.f32.xlu0 %v914
        %v916 = vpop.xlane.xlu0 %915
        %v917 = vsel %vm517, %v885, 0.0
        %918 = vadd.xlane.f32.xlu0 %v917
        %v919 = vpop.xlane.xlu0 %918
        %v920 = vsel %vm517, %v887, 0.0
        %921 = vadd.xlane.f32.xlu0 %v920
        %v922 = vpop.xlane.xlu0 %921
        %v923 = vsel %vm517, %v889, 0.0
        %924 = vadd.xlane.f32.xlu0 %v923
        %v925 = vpop.xlane.xlu0 %924
        %v926 = vsel %vm517, %v891, 0.0
        %927 = vadd.xlane.f32.xlu0 %v926
        %v928 = vpop.xlane.xlu0 %927
        %v929 = vsel %vm517, %v893, 0.0
        %930 = vadd.xlane.f32.xlu0 %v929
        %v931 = vpop.xlane.xlu0 %930
        %v932 = vsel %vm517, %v895, 0.0
        %933 = vadd.xlane.f32.xlu0 %v932
        %v934 = vpop.xlane.xlu0 %933
        %v935 = vsel %vm517, %v897, 0.0
        %936 = vadd.xlane.f32.xlu0 %v935
        %v937 = vpop.xlane.xlu0 %936
        %v938 = vadd.f32 %v906, %v916
        %v939 = vadd.f32 %v907, %v919
        %v940 = vadd.f32 %v908, %v922
        %v941 = vadd.f32 %v909, %v925
        %v942 = vadd.f32 %v910, %v928
        %v943 = vadd.f32 %v911, %v931
        %v944 = vadd.f32 %v912, %v934
        %v945 = vadd.f32 %v913, %v937
        %vm946 = vcmask 7168
        %947 = vst.msk [vmem:[#allocation3] sm:$0xff] %vm946, %v938
        %948 = vst.msk [vmem:[#allocation3 + $0x8] sm:$0xff] %vm946, %v939
        %949 = vst.msk [vmem:[#allocation3 + $0x10] sm:$0xff] %vm946, %v940
        %950 = vst.msk [vmem:[#allocation3 + $0x18] sm:$0xff] %vm946, %v941
        %951 = vst.msk [vmem:[#allocation3 + $0x20] sm:$0xff] %vm946, %v942
        %952 = vst.msk [vmem:[#allocation3 + $0x28] sm:$0xff] %vm946, %v943
        %953 = vst.msk [vmem:[#allocation3 + $0x30] sm:$0xff] %vm946, %v944
        %954 = vst.msk [vmem:[#allocation3 + $0x38] sm:$0xff] %vm946, %v945
        %v955 = vld [vmem:[#allocation4] sm:$0xff]
        %v956 = vld [vmem:[#allocation4 + $0x8] sm:$0xff]
        %v957 = vld [vmem:[#allocation4 + $0x10] sm:$0xff]
        %v958 = vld [vmem:[#allocation4 + $0x18] sm:$0xff]
        %v959 = vld [vmem:[#allocation4 + $0x20] sm:$0xff]
        %v960 = vld [vmem:[#allocation4 + $0x28] sm:$0xff]
        %v961 = vld [vmem:[#allocation4 + $0x30] sm:$0xff]
        %v962 = vld [vmem:[#allocation4 + $0x38] sm:$0xff]
        %964 = vset.pattern.permute.xlu0 0
        %965 = vperm.xlu0 %964, %v819
        %v966 = vpop.permute.xlu0 %965
        %969 = vset.pattern.permute.xlu0 0
        %970 = vperm.xlu0 %969, %v821
        %v971 = vpop.permute.xlu0 %970
        %974 = vset.pattern.permute.xlu0 0
        %975 = vperm.xlu0 %974, %v823
        %v976 = vpop.permute.xlu0 %975
        %979 = vset.pattern.permute.xlu0 0
        %980 = vperm.xlu0 %979, %v825
        %v981 = vpop.permute.xlu0 %980
        %984 = vset.pattern.permute.xlu0 0
        %985 = vperm.xlu0 %984, %v827
        %v986 = vpop.permute.xlu0 %985
        %989 = vset.pattern.permute.xlu0 0
        %990 = vperm.xlu0 %989, %v829
        %v991 = vpop.permute.xlu0 %990
        %994 = vset.pattern.permute.xlu0 0
        %995 = vperm.xlu0 %994, %v831
        %v996 = vpop.permute.xlu0 %995
        %999 = vset.pattern.permute.xlu0 0
        %1000 = vperm.xlu0 %999, %v833
        %v1001 = vpop.permute.xlu0 %1000
        %v1003 = vmul.f32 %v966, %v955
        %v1004 = vmul.f32 %v971, %v956
        %v1005 = vmul.f32 %v976, %v957
        %v1006 = vmul.f32 %v981, %v958
        %v1007 = vmul.f32 %v986, %v959
        %v1008 = vmul.f32 %v991, %v960
        %v1009 = vmul.f32 %v996, %v961
        %v1010 = vmul.f32 %v1001, %v962
        %v1011 = vpack.c.bf16 %v885, %v883
        %v1012 = vpack.c.bf16 %v889, %v887
        %v1013 = vpack.c.bf16 %v893, %v891
        %v1014 = vpack.c.bf16 %v897, %v895
        %v1017 = vunpack.c.l.b16 %v499
        %v1018 = vunpack.c.l.b16 %v500
        %v1019 = vpack.c.b16 %v1018, %v1017
        %v1022 = vsel %vm517, %v1011, 0
        %1024 = vmatprep.subr.bf16.mxu0 0
        %1025 = vmatpush1.bf16.msra.mxu0 %v1019
        %1026 = vmatprep.subr.bf16.mxu0 0
        %1027 = vmatpush1.bf16.msra.mxu0 0
        %1028 = vmatprep.subr.bf16.mxu0 0
        %1029 = vmatpush1.bf16.msra.mxu0 0
        %1030 = vmatprep.subr.bf16.mxu0 0
        %1031 = vmatpush1.bf16.msra.mxu0 0
        %1032 = vmatprep.subr.bf16.mxu0 0
        %1033 = vmatpush1.bf16.msra.mxu0 0
        %1034 = vmatprep.subr.bf16.mxu0 0
        %1035 = vmatpush1.bf16.msra.mxu0 0
        %1036 = vmatprep.subr.bf16.mxu0 0
        %1037 = vmatpush1.bf16.msra.mxu0 0
        %1038 = vmatprep.subr.bf16.mxu0 0
        %1039 = vmatpush1.bf16.msra.mxu0 0
        %1040 = vmatprep.subr.bf16.mxu0 0
        %1041 = vmatpush1.bf16.msra.mxu0 0
        %1042 = vmatprep.subr.bf16.mxu0 0
        %1043 = vmatpush1.bf16.msra.mxu0 0
        %1044 = vmatprep.subr.bf16.mxu0 0
        %1045 = vmatpush1.bf16.msra.mxu0 0
        %1046 = vmatprep.subr.bf16.mxu0 0
        %1047 = vmatpush1.bf16.msra.mxu0 0
        %1048 = vmatprep.subr.bf16.mxu0 0
        %1049 = vmatpush1.bf16.msra.mxu0 0
        %1050 = vmatprep.subr.bf16.mxu0 0
        %1051 = vmatpush1.bf16.msra.mxu0 0
        %1052 = vmatprep.subr.bf16.mxu0 0
        %1053 = vmatpush1.bf16.msra.mxu0 0
        %1054 = vmatprep.subr.bf16.mxu0 0
        %1055 = vmatpush1.bf16.msra.mxu0 0
        %1056 = vmatprep.mubr.bf16.mxu0 0
        %1057 = vmatmul.mubr.bf16.gmra.mrb[0].mxu0 %v1022
        %v1058 = vpop.f32.mrb[0].mxu0
        %v1059 = vadd.f32 0.0, %v1058
        %v1060 = vpop.f32.mrb[0].mxu0
        %v1061 = vpop.f32.mrb[0].mxu0
        %v1062 = vadd.f32 0.0, %v1061
        %v1063 = vpop.f32.mrb[0].mxu0
        %1064 = vdwg.mxu0
        %v1067 = vunpack.c.l.b16 %v501
        %v1068 = vunpack.c.l.b16 %v502
        %v1069 = vpack.c.b16 %v1068, %v1067
        %v1072 = vsel %vm517, %v1012, 0
        %1074 = vmatprep.subr.bf16.mxu0 0
        %1075 = vmatpush1.bf16.msra.mxu0 %v1069
        %1076 = vmatprep.subr.bf16.mxu0 0
        %1077 = vmatpush1.bf16.msra.mxu0 0
        %1078 = vmatprep.subr.bf16.mxu0 0
        %1079 = vmatpush1.bf16.msra.mxu0 0
        %1080 = vmatprep.subr.bf16.mxu0 0
        %1081 = vmatpush1.bf16.msra.mxu0 0
        %1082 = vmatprep.subr.bf16.mxu0 0
        %1083 = vmatpush1.bf16.msra.mxu0 0
        %1084 = vmatprep.subr.bf16.mxu0 0
        %1085 = vmatpush1.bf16.msra.mxu0 0
        %1086 = vmatprep.subr.bf16.mxu0 0
        %1087 = vmatpush1.bf16.msra.mxu0 0
        %1088 = vmatprep.subr.bf16.mxu0 0
        %1089 = vmatpush1.bf16.msra.mxu0 0
        %1090 = vmatprep.subr.bf16.mxu0 0
        %1091 = vmatpush1.bf16.msra.mxu0 0
        %1092 = vmatprep.subr.bf16.mxu0 0
        %1093 = vmatpush1.bf16.msra.mxu0 0
        %1094 = vmatprep.subr.bf16.mxu0 0
        %1095 = vmatpush1.bf16.msra.mxu0 0
        %1096 = vmatprep.subr.bf16.mxu0 0
        %1097 = vmatpush1.bf16.msra.mxu0 0
        %1098 = vmatprep.subr.bf16.mxu0 0
        %1099 = vmatpush1.bf16.msra.mxu0 0
        %1100 = vmatprep.subr.bf16.mxu0 0
        %1101 = vmatpush1.bf16.msra.mxu0 0
        %1102 = vmatprep.subr.bf16.mxu0 0
        %1103 = vmatpush1.bf16.msra.mxu0 0
        %1104 = vmatprep.subr.bf16.mxu0 0
        %1105 = vmatpush1.bf16.msra.mxu0 0
        %1106 = vmatprep.mubr.bf16.mxu0 0
        %1107 = vmatmul.mubr.bf16.gmra.mrb[0].mxu0 %v1072
        %v1108 = vpop.f32.mrb[0].mxu0
        %v1109 = vadd.f32 0.0, %v1108
        %v1110 = vpop.f32.mrb[0].mxu0
        %v1111 = vpop.f32.mrb[0].mxu0
        %v1112 = vadd.f32 0.0, %v1111
        %v1113 = vpop.f32.mrb[0].mxu0
        %1114 = vdwg.mxu0
        %v1117 = vunpack.c.l.b16 %v503
        %v1118 = vunpack.c.l.b16 %v504
        %v1119 = vpack.c.b16 %v1118, %v1117
        %v1122 = vsel %vm517, %v1013, 0
        %1124 = vmatprep.subr.bf16.mxu0 0
        %1125 = vmatpush1.bf16.msra.mxu0 %v1119
        %1126 = vmatprep.subr.bf16.mxu0 0
        %1127 = vmatpush1.bf16.msra.mxu0 0
        %1128 = vmatprep.subr.bf16.mxu0 0
        %1129 = vmatpush1.bf16.msra.mxu0 0
        %1130 = vmatprep.subr.bf16.mxu0 0
        %1131 = vmatpush1.bf16.msra.mxu0 0
        %1132 = vmatprep.subr.bf16.mxu0 0
        %1133 = vmatpush1.bf16.msra.mxu0 0
        %1134 = vmatprep.subr.bf16.mxu0 0
        %1135 = vmatpush1.bf16.msra.mxu0 0
        %1136 = vmatprep.subr.bf16.mxu0 0
        %1137 = vmatpush1.bf16.msra.mxu0 0
        %1138 = vmatprep.subr.bf16.mxu0 0
        %1139 = vmatpush1.bf16.msra.mxu0 0
        %1140 = vmatprep.subr.bf16.mxu0 0
        %1141 = vmatpush1.bf16.msra.mxu0 0
        %1142 = vmatprep.subr.bf16.mxu0 0
        %1143 = vmatpush1.bf16.msra.mxu0 0
        %1144 = vmatprep.subr.bf16.mxu0 0
        %1145 = vmatpush1.bf16.msra.mxu0 0
        %1146 = vmatprep.subr.bf16.mxu0 0
        %1147 = vmatpush1.bf16.msra.mxu0 0
        %1148 = vmatprep.subr.bf16.mxu0 0
        %1149 = vmatpush1.bf16.msra.mxu0 0
        %1150 = vmatprep.subr.bf16.mxu0 0
        %1151 = vmatpush1.bf16.msra.mxu0 0
        %1152 = vmatprep.subr.bf16.mxu0 0
        %1153 = vmatpush1.bf16.msra.mxu0 0
        %1154 = vmatprep.subr.bf16.mxu0 0
        %1155 = vmatpush1.bf16.msra.mxu0 0
        %1156 = vmatprep.mubr.bf16.mxu0 0
        %1157 = vmatmul.mubr.bf16.gmra.mrb[0].mxu0 %v1122
        %v1158 = vpop.f32.mrb[0].mxu0
        %v1159 = vadd.f32 0.0, %v1158
        %v1160 = vpop.f32.mrb[0].mxu0
        %v1161 = vpop.f32.mrb[0].mxu0
        %v1162 = vadd.f32 0.0, %v1161
        %v1163 = vpop.f32.mrb[0].mxu0
        %1164 = vdwg.mxu0
        %v1167 = vunpack.c.l.b16 %v505
        %v1168 = vunpack.c.l.b16 %v506
        %v1169 = vpack.c.b16 %v1168, %v1167
        %v1172 = vsel %vm517, %v1014, 0
        %1174 = vmatprep.subr.bf16.mxu0 0
        %1175 = vmatpush1.bf16.msra.mxu0 %v1169
        %1176 = vmatprep.subr.bf16.mxu0 0
        %1177 = vmatpush1.bf16.msra.mxu0 0
        %1178 = vmatprep.subr.bf16.mxu0 0
        %1179 = vmatpush1.bf16.msra.mxu0 0
        %1180 = vmatprep.subr.bf16.mxu0 0
        %1181 = vmatpush1.bf16.msra.mxu0 0
        %1182 = vmatprep.subr.bf16.mxu0 0
        %1183 = vmatpush1.bf16.msra.mxu0 0
        %1184 = vmatprep.subr.bf16.mxu0 0
        %1185 = vmatpush1.bf16.msra.mxu0 0
        %1186 = vmatprep.subr.bf16.mxu0 0
        %1187 = vmatpush1.bf16.msra.mxu0 0
        %1188 = vmatprep.subr.bf16.mxu0 0
        %1189 = vmatpush1.bf16.msra.mxu0 0
        %1190 = vmatprep.subr.bf16.mxu0 0
        %1191 = vmatpush1.bf16.msra.mxu0 0
        %1192 = vmatprep.subr.bf16.mxu0 0
        %1193 = vmatpush1.bf16.msra.mxu0 0
        %1194 = vmatprep.subr.bf16.mxu0 0
        %1195 = vmatpush1.bf16.msra.mxu0 0
        %1196 = vmatprep.subr.bf16.mxu0 0
        %1197 = vmatpush1.bf16.msra.mxu0 0
        %1198 = vmatprep.subr.bf16.mxu0 0
        %1199 = vmatpush1.bf16.msra.mxu0 0
        %1200 = vmatprep.subr.bf16.mxu0 0
        %1201 = vmatpush1.bf16.msra.mxu0 0
        %1202 = vmatprep.subr.bf16.mxu0 0
        %1203 = vmatpush1.bf16.msra.mxu0 0
        %1204 = vmatprep.subr.bf16.mxu0 0
        %1205 = vmatpush1.bf16.msra.mxu0 0
        %1206 = vmatprep.mubr.bf16.mxu0 0
        %1207 = vmatmul.mubr.bf16.gmra.mrb[0].mxu0 %v1172
        %v1208 = vpop.f32.mrb[0].mxu0
        %v1209 = vadd.f32 0.0, %v1208
        %v1210 = vpop.f32.mrb[0].mxu0
        %v1211 = vpop.f32.mrb[0].mxu0
        %v1212 = vadd.f32 0.0, %v1211
        %v1213 = vpop.f32.mrb[0].mxu0
        %1214 = vdwg.mxu0
        %v1215 = vadd.f32 %v1003, %v1059
        %v1216 = vadd.f32 %v1004, %v1062
        %v1217 = vadd.f32 %v1005, %v1109
        %v1218 = vadd.f32 %v1006, %v1112
        %v1219 = vadd.f32 %v1007, %v1159
        %v1220 = vadd.f32 %v1008, %v1162
        %v1221 = vadd.f32 %v1009, %v1209
        %v1222 = vadd.f32 %v1010, %v1212
        %1223 = vst.msk [vmem:[#allocation4] sm:$0xff] %vm517, %v1215
        %1224 = vst.msk [vmem:[#allocation4 + $0x8] sm:$0xff] %vm517, %v1216
        %1225 = vst.msk [vmem:[#allocation4 + $0x10] sm:$0xff] %vm517, %v1217
        %1226 = vst.msk [vmem:[#allocation4 + $0x18] sm:$0xff] %vm517, %v1218
        %1227 = vst.msk [vmem:[#allocation4 + $0x20] sm:$0xff] %vm517, %v1219
        %1228 = vst.msk [vmem:[#allocation4 + $0x28] sm:$0xff] %vm517, %v1220
        %1229 = vst.msk [vmem:[#allocation4 + $0x30] sm:$0xff] %vm517, %v1221
        %1230 = vst.msk [vmem:[#allocation4 + $0x38] sm:$0xff] %vm517, %v1222
        %1231 = vst.msk [vmem:[#allocation2] sm:$0xff] %vm946, %v802
        %1232 = vst.msk [vmem:[#allocation2 + $0x8] sm:$0xff] %vm946, %v803
        %1233 = vst.msk [vmem:[#allocation2 + $0x10] sm:$0xff] %vm946, %v804
        %1234 = vst.msk [vmem:[#allocation2 + $0x18] sm:$0xff] %vm946, %v805
        %1235 = vst.msk [vmem:[#allocation2 + $0x20] sm:$0xff] %vm946, %v806
        %1236 = vst.msk [vmem:[#allocation2 + $0x28] sm:$0xff] %vm946, %v807
        %1237 = vst.msk [vmem:[#allocation2 + $0x30] sm:$0xff] %vm946, %v808
        %1238 = vst.msk [vmem:[#allocation2 + $0x38] sm:$0xff] %vm946, %v809
        %p1239 = scmp.eq.s32.totalorder %s21, 1
        // Predicated region
        $region160: #{gpt_forward.8} parent=142 // pred_check
          %p1240 = pneg %p1239
        $region161: #{gpt_forward.8} parent=142 // pred_check_branch
          %1242 = sbr.rel (%p1240) target = $region163
        $region162: #{gpt_forward.8} parent=142 // pred_region
          %v1243 = vld [vmem:[#allocation4] sm:$0xff]
          %v1244 = vld [vmem:[#allocation4 + $0x8] sm:$0xff]
          %v1245 = vld [vmem:[#allocation4 + $0x10] sm:$0xff]
          %v1246 = vld [vmem:[#allocation4 + $0x18] sm:$0xff]
          %v1247 = vld [vmem:[#allocation4 + $0x20] sm:$0xff]
          %v1248 = vld [vmem:[#allocation4 + $0x28] sm:$0xff]
          %v1249 = vld [vmem:[#allocation4 + $0x30] sm:$0xff]
          %v1250 = vld [vmem:[#allocation4 + $0x38] sm:$0xff]
          %v1251 = vld [vmem:[#allocation3] sm:$0xff]
          %v1252 = vld [vmem:[#allocation3 + $0x8] sm:$0xff]
          %v1253 = vld [vmem:[#allocation3 + $0x10] sm:$0xff]
          %v1254 = vld [vmem:[#allocation3 + $0x18] sm:$0xff]
          %v1255 = vld [vmem:[#allocation3 + $0x20] sm:$0xff]
          %v1256 = vld [vmem:[#allocation3 + $0x28] sm:$0xff]
          %v1257 = vld [vmem:[#allocation3 + $0x30] sm:$0xff]
          %v1258 = vld [vmem:[#allocation3 + $0x38] sm:$0xff]
          %1260 = vset.pattern.permute.xlu0 0
          %1261 = vperm.xlu0 %1260, %v1251
          %v1262 = vpop.permute.xlu0 %1261
          %1265 = vset.pattern.permute.xlu0 0
          %1266 = vperm.xlu0 %1265, %v1252
          %v1267 = vpop.permute.xlu0 %1266
          %1270 = vset.pattern.permute.xlu0 0
          %1271 = vperm.xlu0 %1270, %v1253
          %v1272 = vpop.permute.xlu0 %1271
          %1275 = vset.pattern.permute.xlu0 0
          %1276 = vperm.xlu0 %1275, %v1254
          %v1277 = vpop.permute.xlu0 %1276
          %1280 = vset.pattern.permute.xlu0 0
          %1281 = vperm.xlu0 %1280, %v1255
          %v1282 = vpop.permute.xlu0 %1281
          %1285 = vset.pattern.permute.xlu0 0
          %1286 = vperm.xlu0 %1285, %v1256
          %v1287 = vpop.permute.xlu0 %1286
          %1290 = vset.pattern.permute.xlu0 0
          %1291 = vperm.xlu0 %1290, %v1257
          %v1292 = vpop.permute.xlu0 %1291
          %1295 = vset.pattern.permute.xlu0 0
          %1296 = vperm.xlu0 %1295, %v1258
          %v1297 = vpop.permute.xlu0 %1296
          %v1299 = vrcp.pop %v1262
          %v1300 = vmul.f32 %v1243, %v1299
          %v1301 = vrcp.pop %v1267
          %v1302 = vmul.f32 %v1244, %v1301
          %v1303 = vrcp.pop %v1272
          %v1304 = vmul.f32 %v1245, %v1303
          %v1305 = vrcp.pop %v1277
          %v1306 = vmul.f32 %v1246, %v1305
          %v1307 = vrcp.pop %v1282
          %v1308 = vmul.f32 %v1247, %v1307
          %v1309 = vrcp.pop %v1287
          %v1310 = vmul.f32 %v1248, %v1309
          %v1311 = vrcp.pop %v1292
          %v1312 = vmul.f32 %v1249, %v1311
          %v1313 = vrcp.pop %v1297
          %v1314 = vmul.f32 %v1250, %v1313
          %v1315 = vpack.c.bf16 %v1302, %v1300
          %v1316 = vpack.c.bf16 %v1306, %v1304
          %v1317 = vpack.c.bf16 %v1310, %v1308
          %v1318 = vpack.c.bf16 %v1314, %v1312
          %v1323 = vunpack.c.l.b16 %v1315
          %v1324 = vunpack.c.h.b16 %v1315
          %v1325 = vunpack.c.l.b16 %v1316
          %v1326 = vunpack.c.h.b16 %v1316
          %v1327 = vunpack.c.l.b16 %v1317
          %v1328 = vunpack.c.h.b16 %v1317
          %v1329 = vunpack.c.l.b16 %v1318
          %v1330 = vunpack.c.h.b16 %v1318
          %v1331 = vpack.c.b16 %v1323, %v1323
          %v1332 = vpack.c.b16 %v1324, %v1324
          %v1333 = vpack.c.b16 %v1325, %v1325
          %v1334 = vpack.c.b16 %v1326, %v1326
          %v1335 = vpack.c.b16 %v1327, %v1327
          %v1336 = vpack.c.b16 %v1328, %v1328
          %v1337 = vpack.c.b16 %v1329, %v1329
          %v1338 = vpack.c.b16 %v1330, %v1330
          %vm1347 = vcmask 125952
          %1348 = vst.msk [vmem:[%s447] sm:$0xf] %vm1347, %v1331
          %1349 = vst.msk [vmem:[%s447 + $0x4] sm:$0xf] %vm1347, %v1332
          %1350 = vst.msk [vmem:[%s447 + $0x8] sm:$0xf] %vm1347, %v1333
          %1351 = vst.msk [vmem:[%s447 + $0xc] sm:$0xf] %vm1347, %v1334
          %1352 = vst.msk [vmem:[%s447 + $0x10] sm:$0xf] %vm1347, %v1335
          %1353 = vst.msk [vmem:[%s447 + $0x14] sm:$0xf] %vm1347, %v1336
          %1354 = vst.msk [vmem:[%s447 + $0x18] sm:$0xf] %vm1347, %v1337
          %1355 = vst.msk [vmem:[%s447 + $0x1c] sm:$0xf] %vm1347, %v1338
        $region163: #{gpt_forward.8} parent=142 // pred_fallthru
          _
        %s1356 = sand.u32 %s127, 1
        %s1357 = sand.u32 %s127, 1
        %s1358 = smul.addr %s1357, 32
        %s1359 = scalar_lea.vmem [#allocation8], %s1358
        // Predicated region
        $region164: #{gpt_forward.8} parent=142 // pred_check
          %p1360 = pneg %p137
        $region165: #{gpt_forward.8} parent=142 // pred_check_branch
          %1362 = sbr.rel (%p1360) target = $region167
        $region166: #{gpt_forward.8} parent=142 // pred_region
          %s1363 = smul.u32 2, %s20
          %s1364 = smul.addr %s19, 16
          %s1365 = sadd.s32 %s1363, %s1364
          %s1366 = smul.addr %s1365, 4
          %s1367 = scalar_lea.vmem %s3, %s1366
          // Predicated region
          $region168: #{gpt_forward.8} parent=166 // pred_check
            _
          $region169: #{gpt_forward.8} parent=166 // pred_check_branch
            %1369 = sbr.rel (0) target = $region171
          $region170: #{gpt_forward.8} parent=166 // pred_region
            // Predicated region
            $region172: #{gpt_forward.8} parent=170 // pred_check
              _
            $region173: #{gpt_forward.8} parent=170 // pred_check_branch
              %1371 = sbr.rel target = $region175
            $region174: #{gpt_forward.8} parent=170 // pred_region
              // Predicated region
              $region187: #{gpt_forward.8} parent=174 // pred_check
                _
              $region188: #{gpt_forward.8} parent=174 // pred_check_branch
                %1400 = sbr.rel (0) target = $region190
              $region189: #{gpt_forward.8} parent=174 // pred_region
                loop: start=0, step=1, limit=1
                $region191: #{gpt_forward.8} parent=189 // loop_pre_header
                  _
                $region192: #{gpt_forward.8} parent=189 // loop_header
                  %s1402 = sphi 0, %s1406
                  %p1403 = scmp.ge.s32.totalorder %s1402, 1
                  %s1407 = sphi %s1359, %s1359
                  %s1408 = sphi %s1367, %s1367
                $region193: #{gpt_forward.8} parent=189 // loop_header_branch
                  %1405 = sbr.rel (%p1403) target = $region197
                $region194: #{gpt_forward.8} parent=189 // loop_body
                  _
                $region195: #{gpt_forward.8} parent=189 // loop_footer
                  %s1406 = sadd.s32 1, %s1402
                $region196: #{gpt_forward.8} parent=189 // loop_footer_branch
                  %1401 = sbr.rel target = $region192
                $region197: #{gpt_forward.8} parent=189 // loop_exit
                  _
                loop: start=0, step=1, limit=1
                $region198: #{gpt_forward.8} parent=189 // loop_pre_header
                  _
                $region199: #{gpt_forward.8} parent=189 // loop_header
                  %s1411 = sphi 0, %s1415
                  %p1412 = scmp.ge.s32.totalorder %s1411, 1
                  %s1416 = sphi %s1359, %s1359
                  %s1417 = sphi %s1367, %s1367
                $region200: #{gpt_forward.8} parent=189 // loop_header_branch
                  %1414 = sbr.rel (%p1412) target = $region204
                $region201: #{gpt_forward.8} parent=189 // loop_body
                  %v1418 = vld [vmem:[%s1416] sm:$0xf]
                  %1419 = vst [vmem:[%s1417] sm:$0xf] %v1418
                  %v1420 = vld [vmem:[%s1416 + $0x4] sm:$0xf]
                  %1421 = vst [vmem:[%s1417 + $0x4] sm:$0xf] %v1420
                  %v1422 = vld [vmem:[%s1416 + $0x8] sm:$0xf]
                  %1423 = vst [vmem:[%s1417 + $0x10] sm:$0xf] %v1422
                  %v1424 = vld [vmem:[%s1416 + $0xc] sm:$0xf]
                  %1425 = vst [vmem:[%s1417 + $0x14] sm:$0xf] %v1424
                  %v1426 = vld [vmem:[%s1416 + $0x10] sm:$0xf]
                  %1427 = vst [vmem:[%s1417 + $0x20] sm:$0xf] %v1426
                  %v1428 = vld [vmem:[%s1416 + $0x14] sm:$0xf]
                  %1429 = vst [vmem:[%s1417 + $0x24] sm:$0xf] %v1428
                  %v1430 = vld [vmem:[%s1416 + $0x18] sm:$0xf]
                  %1431 = vst [vmem:[%s1417 + $0x30] sm:$0xf] %v1430
                  %v1432 = vld [vmem:[%s1416 + $0x1c] sm:$0xf]
                  %1433 = vst [vmem:[%s1417 + $0x34] sm:$0xf] %v1432
                $region202: #{gpt_forward.8} parent=189 // loop_footer
                  %s1415 = sadd.s32 1, %s1411
                $region203: #{gpt_forward.8} parent=189 // loop_footer_branch
                  %1410 = sbr.rel target = $region199
                $region204: #{gpt_forward.8} parent=189 // loop_exit
                  _
              $region190: #{gpt_forward.8} parent=174 // pred_fallthru
                _
            $region175: #{gpt_forward.8} parent=170 // pred_fallthru
              _
            // Predicated region
            $region176: #{gpt_forward.8} parent=170 // pred_check
              _
            $region177: #{gpt_forward.8} parent=170 // pred_check_branch
              %1373 = sbr.rel (0) target = $region179
            $region178: #{gpt_forward.8} parent=170 // pred_region
              loop: start=0, step=1, limit=1
              $region180: #{gpt_forward.8} parent=178 // loop_pre_header
                _
              $region181: #{gpt_forward.8} parent=178 // loop_header
                %s1376 = sphi 0, %s1380
                %p1377 = scmp.ge.s32.totalorder %s1376, 1
                %s1381 = sphi %s1359, %s1359
                %s1382 = sphi %s1367, %s1367
              $region182: #{gpt_forward.8} parent=178 // loop_header_branch
                %1379 = sbr.rel (%p1377) target = $region186
              $region183: #{gpt_forward.8} parent=178 // loop_body
                %v1383 = vld [vmem:[%s1381] sm:$0xf]
                %1384 = vst [vmem:[%s1382] sm:$0xf] %v1383
                %v1385 = vld [vmem:[%s1381 + $0x4] sm:$0xf]
                %1386 = vst [vmem:[%s1382 + $0x4] sm:$0xf] %v1385
                %v1387 = vld [vmem:[%s1381 + $0x8] sm:$0xf]
                %1388 = vst [vmem:[%s1382 + $0x10] sm:$0xf] %v1387
                %v1389 = vld [vmem:[%s1381 + $0xc] sm:$0xf]
                %1390 = vst [vmem:[%s1382 + $0x14] sm:$0xf] %v1389
                %v1391 = vld [vmem:[%s1381 + $0x10] sm:$0xf]
                %1392 = vst [vmem:[%s1382 + $0x20] sm:$0xf] %v1391
                %v1393 = vld [vmem:[%s1381 + $0x14] sm:$0xf]
                %1394 = vst [vmem:[%s1382 + $0x24] sm:$0xf] %v1393
                %v1395 = vld [vmem:[%s1381 + $0x18] sm:$0xf]
                %1396 = vst [vmem:[%s1382 + $0x30] sm:$0xf] %v1395
                %v1397 = vld [vmem:[%s1381 + $0x1c] sm:$0xf]
                %1398 = vst [vmem:[%s1382 + $0x34] sm:$0xf] %v1397
              $region184: #{gpt_forward.8} parent=178 // loop_footer
                %s1380 = sadd.s32 1, %s1376
              $region185: #{gpt_forward.8} parent=178 // loop_footer_branch
                %1375 = sbr.rel target = $region181
              $region186: #{gpt_forward.8} parent=178 // loop_exit
                _
            $region179: #{gpt_forward.8} parent=170 // pred_fallthru
              _
          $region171: #{gpt_forward.8} parent=166 // pred_fallthru
            _
          %1434 = vnop
        $region167: #{gpt_forward.8} parent=142 // pred_fallthru
          _
      $region143: #{gpt_forward.8} parent=5 // pred_fallthru
        _
      %p1435 = scmp.le.s32.totalorder 2, %s9
      // Predicated region
      $region205: #{gpt_forward.8} parent=5 // pred_check
        %p1436 = pneg %p1435
      $region206: #{gpt_forward.8} parent=5 // pred_check_branch
        %1438 = sbr.rel (%p1436) target = $region208
      $region207: #{gpt_forward.8} parent=5 // pred_region
        %s1439 = ssub.s32 %s9, 2
        // Predicated region
        $region209: #{gpt_forward.8} parent=207 // pred_check
          %p1440 = pneg %p143
        $region210: #{gpt_forward.8} parent=207 // pred_check_branch
          %1442 = sbr.rel (%p1440) target = $region212
        $region211: #{gpt_forward.8} parent=207 // pred_region
          %s1443 = sand.u32 %s128, 1
          %s1444 = sand.u32 %s128, 1
          %s1445 = smul.addr %s1444, 32
          %s1446 = scalar_lea.vmem [#allocation8], %s1445
        $region212: #{gpt_forward.8} parent=207 // pred_fallthru
          _
      $region208: #{gpt_forward.8} parent=5 // pred_fallthru
        _
    $region6: #{gpt_forward.8} parent=1 // loop_footer
      %s13 = sadd.s32 1, %s9
    $region7: #{gpt_forward.8} parent=1 // loop_footer_branch
      %8 = sbr.rel target = $region3
    $region8: #{gpt_forward.8} parent=1 // loop_exit
      _

// kernel: gpt_forward.13
$region0: #{gpt_forward.13}
  #allocation0 [shape = 'u32[]', space=smem, size = 0x4, offset = 0x4, fixed_abs, tag = 'smem constant byte address 0x4 - core index']
  #allocation1 [shape = 'u32[144,128]{1,0:T(1,128)}', space=vmem, size = 0x12000, scoped, tag = 'internal scratch']
  %s0 = inlined_call_operand.vmem [shape: f32[64,64], index: 0, kind: input, shape index: {}]
  %s1 = inlined_call_operand.vmem [shape: f32[1,64], index: 1, kind: input, shape index: {}]
  %s2 = inlined_call_operand.vmem [shape: f32[1,64], index: 2, kind: input, shape index: {}]
  %s3 = inlined_call_operand.vmem [shape: bf16[64,128], index: 3, kind: input, shape index: {}]
  %s4 = inlined_call_operand.hbm [shape: f32[64,128], index: 4, kind: output, shape index: {}]
  %s5 = sld [smem:[#allocation0]]
  $region49: #{gpt_forward.13} parent=0
    _
  %s7 = ssub.s32 1, %s5
  %s8 = scalar_select 0, %s7, %s5
  $region1: #{gpt_forward.13} parent=0
    #allocation2 [shape = 'u8[16384]{0}', space=vmem, size = 0x4000, scoped, tag = 'output window, operand 0']
    #allocation3 [shape = 's32[2]{0}', space=sflag, size = 0x8, scoped, tag = 'scoped memory for gpt_forward.13']
    %9 = vsyncpa [#allocation3], 0
    %s10 = scalar_lea.sflag [#allocation3], 1
    %11 = vsyncpa %s10, 0
    loop: start=0, step=1, limit=6
    $region2: #{gpt_forward.13} parent=1 // loop_pre_header
      _
    $region3: #{gpt_forward.13} parent=1 // loop_header
      %s13 = sphi 0, %s17
      %p14 = scmp.ge.s32.totalorder %s13, 6
      %s23 = sphi 0, %s25
      %s26 = sphi 0, %s23
      %s27 = sphi 0, %s26
      %s43 = sphi 0, %s27
      %s47 = sphi 0, %s47
      %s49 = sphi 0, %s47
      %s50 = sphi 0, %s49
      %s64 = sphi 0, %s50
      %s68 = sphi 0, %s68
      %s70 = sphi 0, %s68
      %s71 = sphi 0, %s70
      %s85 = sphi 0, %s71
      %s89 = sphi 0, %s89
      %s91 = sphi 0, %s89
      %s92 = sphi 0, %s91
      %s106 = sphi 0, %s92
      %s112 = sphi 0, %s114
      %s115 = sphi 0, %s112
      %s116 = sphi 0, %s115
      %s132 = sphi 0, %s116
    $region4: #{gpt_forward.13} parent=1 // loop_header_branch
      %16 = sbr.rel (%p14) target = $region8
    $region5: #{gpt_forward.13} parent=1 // loop_body
      %s18 = ssub.s32 %s13, 1
      %s19 = ssub.s32 %s13, 2
      %s20 = sadd.s32 %s13, 1
      %s21 = ssub.s32 %s13, %s20
      %p22 = scmp.eq.s32.totalorder %s21, 0
      %s24 = sadd.s32 %s23, 1
      %s25 = scalar_select %p22, %s23, %s24
      %p28 = pneg %p22
      %p29 = scmp.eq.s32.totalorder %s13, 3
      %p30 = por %p28, %p29
      %p31 = scmp.ne.s32.totalorder %s23, %s26
      %p32 = scmp.eq.s32.totalorder %s13, 0
      %p33 = por %p31, %p32
      %p34 = scmp.ne.s32.totalorder %s23, %s26
      %p35 = scmp.eq.s32.totalorder %s18, 3
      %p36 = por %p34, %p35
      %p37 = scmp.ne.s32.totalorder %s26, %s27
      %p38 = scmp.eq.s32.totalorder %s18, 0
      %p39 = por %p37, %p38
      %p40 = scmp.ne.s32.totalorder %s26, %s27
      %p41 = scmp.eq.s32.totalorder %s19, 3
      %p42 = por %p40, %p41
      %p44 = scmp.ne.s32.totalorder %s27, %s43
      %p45 = scmp.eq.s32.totalorder %s19, 0
      %p46 = por %p44, %p45
      %s48 = sadd.s32 %s47, 1
      %p51 = scmp.eq.s32.totalorder %s13, 3
      %p52 = scmp.ne.s32.totalorder %s47, %s49
      %p53 = scmp.eq.s32.totalorder %s13, 0
      %p54 = por %p52, %p53
      %p55 = scmp.ne.s32.totalorder %s47, %s49
      %p56 = scmp.eq.s32.totalorder %s18, 3
      %p57 = por %p55, %p56
      %p58 = scmp.ne.s32.totalorder %s49, %s50
      %p59 = scmp.eq.s32.totalorder %s18, 0
      %p60 = por %p58, %p59
      %p61 = scmp.ne.s32.totalorder %s49, %s50
      %p62 = scmp.eq.s32.totalorder %s19, 3
      %p63 = por %p61, %p62
      %p65 = scmp.ne.s32.totalorder %s50, %s64
      %p66 = scmp.eq.s32.totalorder %s19, 0
      %p67 = por %p65, %p66
      %s69 = sadd.s32 %s68, 1
      %p72 = scmp.eq.s32.totalorder %s13, 3
      %p73 = scmp.ne.s32.totalorder %s68, %s70
      %p74 = scmp.eq.s32.totalorder %s13, 0
      %p75 = por %p73, %p74
      %p76 = scmp.ne.s32.totalorder %s68, %s70
      %p77 = scmp.eq.s32.totalorder %s18, 3
      %p78 = por %p76, %p77
      %p79 = scmp.ne.s32.totalorder %s70, %s71
      %p80 = scmp.eq.s32.totalorder %s18, 0
      %p81 = por %p79, %p80
      %p82 = scmp.ne.s32.totalorder %s70, %s71
      %p83 = scmp.eq.s32.totalorder %s19, 3
      %p84 = por %p82, %p83
      %p86 = scmp.ne.s32.totalorder %s71, %s85
      %p87 = scmp.eq.s32.totalorder %s19, 0
      %p88 = por %p86, %p87
      %s90 = sadd.s32 %s89, 1
      %p93 = scmp.eq.s32.totalorder %s13, 3
      %p94 = scmp.ne.s32.totalorder %s89, %s91
      %p95 = scmp.eq.s32.totalorder %s13, 0
      %p96 = por %p94, %p95
      %p97 = scmp.ne.s32.totalorder %s89, %s91
      %p98 = scmp.eq.s32.totalorder %s18, 3
      %p99 = por %p97, %p98
      %p100 = scmp.ne.s32.totalorder %s91, %s92
      %p101 = scmp.eq.s32.totalorder %s18, 0
      %p102 = por %p100, %p101
      %p103 = scmp.ne.s32.totalorder %s91, %s92
      %p104 = scmp.eq.s32.totalorder %s19, 3
      %p105 = por %p103, %p104
      %p107 = scmp.ne.s32.totalorder %s92, %s106
      %p108 = scmp.eq.s32.totalorder %s19, 0
      %p109 = por %p107, %p108
      %s110 = ssub.s32 %s13, %s20
      %p111 = scmp.eq.s32.totalorder %s110, 0
      %s113 = sadd.s32 %s112, 1
      %s114 = scalar_select %p111, %s112, %s113
      %p117 = pneg %p111
      %p118 = scmp.eq.s32.totalorder %s13, 3
      %p119 = por %p117, %p118
      %p120 = scmp.ne.s32.totalorder %s112, %s115
      %p121 = scmp.eq.s32.totalorder %s13, 0
      %p122 = por %p120, %p121
      %p123 = scmp.ne.s32.totalorder %s112, %s115
      %p124 = scmp.eq.s32.totalorder %s18, 3
      %p125 = por %p123, %p124
      %p126 = scmp.ne.s32.totalorder %s115, %s116
      %p127 = scmp.eq.s32.totalorder %s18, 0
      %p128 = por %p126, %p127
      %p129 = scmp.ne.s32.totalorder %s115, %s116
      %p130 = scmp.eq.s32.totalorder %s19, 3
      %p131 = por %p129, %p130
      %p133 = scmp.ne.s32.totalorder %s116, %s132
      %p134 = scmp.eq.s32.totalorder %s19, 0
      %p135 = por %p133, %p134
      %p136 = scmp.le.s32.totalorder 1, %s13
      %p137 = scmp.lt.s32.totalorder %s13, 5
      %p138 = pnand %p136, %p137
      %p139 = pneg %p138
      // Predicated region
      $region9: #{gpt_forward.13} parent=5 // pred_check
        _
      $region10: #{gpt_forward.13} parent=5 // pred_check_branch
        %141 = sbr.rel (%p138) target = $region12
      $region11: #{gpt_forward.13} parent=5 // pred_region
        %s142 = ssub.s32 %s13, 1
        // Predicated region
        $region13: #{gpt_forward.13} parent=11 // pred_check
          %p143 = pneg %p60
        $region14: #{gpt_forward.13} parent=11 // pred_check_branch
          %145 = sbr.rel (%p143) target = $region16
        $region15: #{gpt_forward.13} parent=11 // pred_region
          _
        $region16: #{gpt_forward.13} parent=11 // pred_fallthru
          _
        // Predicated region
        $region17: #{gpt_forward.13} parent=11 // pred_check
          %p146 = pneg %p81
        $region18: #{gpt_forward.13} parent=11 // pred_check_branch
          %148 = sbr.rel (%p146) target = $region20
        $region19: #{gpt_forward.13} parent=11 // pred_region
          _
        $region20: #{gpt_forward.13} parent=11 // pred_fallthru
          _
        // Predicated region
        $region21: #{gpt_forward.13} parent=11 // pred_check
          %p149 = pneg %p102
        $region22: #{gpt_forward.13} parent=11 // pred_check_branch
          %151 = sbr.rel (%p149) target = $region24
        $region23: #{gpt_forward.13} parent=11 // pred_region
          _
        $region24: #{gpt_forward.13} parent=11 // pred_fallthru
          _
      $region12: #{gpt_forward.13} parent=5 // pred_fallthru
        _
      %p152 = scmp.lt.s32.totalorder %s13, 4
      // Predicated region
      $region25: #{gpt_forward.13} parent=5 // pred_check
        %p153 = pneg %p152
      $region26: #{gpt_forward.13} parent=5 // pred_check_branch
        %155 = sbr.rel (%p153) target = $region28
      $region27: #{gpt_forward.13} parent=5 // pred_region
        // Predicated region
        $region29: #{gpt_forward.13} parent=27 // pred_check
          %p156 = pneg %p33
        $region30: #{gpt_forward.13} parent=27 // pred_check_branch
          %158 = sbr.rel (%p156) target = $region32
        $region31: #{gpt_forward.13} parent=27 // pred_region
          %s159 = smul.u32 2, %s13
          %p160 = scmp.lt.s32.totalorder %s159, 7
          %s161 = scalar_select %p160, %s159, 7
          %s162 = smul.addr %s161, 8
          %s163 = scalar_lea.vmem %s0, %s162
          %s164 = smul.u32 2, %s13
        $region32: #{gpt_forward.13} parent=27 // pred_fallthru
          _
      $region28: #{gpt_forward.13} parent=5 // pred_fallthru
        _
      %p165 = scmp.le.s32.totalorder 1, %s13
      %p166 = scmp.lt.s32.totalorder %s13, 5
      %p167 = pnand %p165, %p166
      %p168 = pneg %p167
      // Predicated region
      $region33: #{gpt_forward.13} parent=5 // pred_check
        _
      $region34: #{gpt_forward.13} parent=5 // pred_check_branch
        %170 = sbr.rel (%p167) target = $region36
      $region35: #{gpt_forward.13} parent=5 // pred_region
        %s171 = ssub.s32 %s13, 1
        %s172 = smul.u32 2, %s18
        %p173 = scmp.lt.s32.totalorder %s172, 7
        %s174 = scalar_select %p173, %s172, 7
        %s175 = smul.addr %s174, 8
        %s176 = scalar_lea.vmem %s0, %s175
        %p177 = pneg %p39
        %p178 = pneg %p36
        %p179 = pneg %p60
        %p180 = pneg %p57
        %p181 = pneg %p81
        %p182 = pneg %p78
        %p183 = pneg %p102
        %p184 = pneg %p99
        %p185 = pneg %p128
        %p186 = pneg %p125
        %s187 = sand.u32 %s115, 1
        %s188 = scalar_lea.sflag [#allocation3], %s187
        %s189 = sand.u32 %s115, 1
        %s190 = smul.addr %s189, 16
        %s191 = scalar_lea.vmem [#allocation2], %s190
        %s192 = smul.u32 2, %s18
        %p193 = scmp.lt.s32.totalorder %s192, 7
        %s194 = scalar_select %p193, %s192, 7
        %s195 = smul.addr %s194, 8
        %s196 = scalar_lea.vmem %s0, %s195
        %s197 = smul.u32 2, %s18
        %s198 = smul.u32 2, %s18
        %v200 = vld [vmem:[%s196] sm:$0xff]
        %v201 = vld [vmem:[%s196 + $0x8] sm:$0xff]
        %v202 = vld [vmem:[%s1] sm:$0x1]
        %v203 = vld [vmem:[%s2] sm:$0x1]
        %vm204 = vcmask 523264
        %v205 = vsel %vm204, %v200, 0.0
        %206 = vadd.xlane.f32.xlu0 %v205
        %v207 = vpop.xlane.xlu0 %206
        %v208 = vsel %vm204, %v201, 0.0
        %209 = vadd.xlane.f32.xlu0 %v208
        %v210 = vpop.xlane.xlu0 %209
        %v211 = vrcp.pop 64.0
        %v212 = vmul.f32 %v207, %v211
        %v213 = vmul.f32 %v210, %v211
        %v214 = vsub.f32 %v200, %v212
        %v215 = vsub.f32 %v201, %v213
        %v216 = vmul.f32 %v214, %v214
        %v217 = vmul.f32 %v215, %v215
        %v218 = vsel %vm204, %v216, 0.0
        %219 = vadd.xlane.f32.xlu0 %v218
        %v220 = vpop.xlane.xlu0 %219
        %v221 = vsel %vm204, %v217, 0.0
        %222 = vadd.xlane.f32.xlu0 %v221
        %v223 = vpop.xlane.xlu0 %222
        %v224 = vmul.f32 %v220, %v211
        %v225 = vmul.f32 %v223, %v211
        %v226 = vadd.f32 %v224, 1e-05
        %v227 = vadd.f32 %v225, 1e-05
        %v228 = vrsqrt.pop %v226
        %v229 = vrsqrt.pop %v227
        %v230 = vmul.f32 %v214, %v228
        %v231 = vmul.f32 %v215, %v229
        %v233 = vlaneseq
        %v234 = vshrl.u32 %v233, 7
        %v235 = vsub.s32 0, %v234
        %v236 = vrot.slane %v202, %v235
        %v238 = vmul.f32 %v230, %v236
        %v239 = vmul.f32 %v231, %v236
        %v241 = vlaneseq
        %v242 = vshrl.u32 %v241, 7
        %v243 = vsub.s32 0, %v242
        %v244 = vrot.slane %v203, %v243
        %v246 = vadd.f32 %v238, %v244
        %v247 = vadd.f32 %v239, %v244
        %v248 = vpack.c.bf16 %v247, %v246
        %v249 = vld [vmem:[%s3] sm:$0xf]
        %v250 = vld [vmem:[%s3 + $0x4] sm:$0xf]
        %v251 = vld [vmem:[%s3 + $0x8] sm:$0xf]
        %v252 = vld [vmem:[%s3 + $0xc] sm:$0xf]
        %v253 = vld [vmem:[%s3 + $0x10] sm:$0xf]
        %v254 = vld [vmem:[%s3 + $0x14] sm:$0xf]
        %v255 = vld [vmem:[%s3 + $0x18] sm:$0xf]
        %v256 = vld [vmem:[%s3 + $0x1c] sm:$0xf]
        %v265 = vunpack.c.l.b16 %v249
        %v266 = vunpack.c.l.b16 %v250
        %v267 = vunpack.c.l.b16 %v251
        %v268 = vunpack.c.l.b16 %v252
        %v269 = vunpack.c.l.b16 %v253
        %v270 = vunpack.c.l.b16 %v254
        %v271 = vunpack.c.l.b16 %v255
        %v272 = vunpack.c.l.b16 %v256
        %v273 = vpack.c.b16 %v266, %v265
        %v274 = vpack.c.b16 %v268, %v267
        %v275 = vpack.c.b16 %v270, %v269
        %v276 = vpack.c.b16 %v272, %v271
        %v282 = vsel %vm204, %v248, 0
        %284 = vmatprep.subr.bf16.mxu0 0
        %285 = vmatpush1.bf16.msra.mxu0 %v273
        %286 = vmatprep.subr.bf16.mxu0 0
        %287 = vmatpush1.bf16.msra.mxu0 %v274
        %288 = vmatprep.subr.bf16.mxu0 0
        %289 = vmatpush1.bf16.msra.mxu0 %v275
        %290 = vmatprep.subr.bf16.mxu0 0
        %291 = vmatpush1.bf16.msra.mxu0 %v276
        %292 = vmatprep.subr.bf16.mxu0 0
        %293 = vmatpush1.bf16.msra.mxu0 0
        %294 = vmatprep.subr.bf16.mxu0 0
        %295 = vmatpush1.bf16.msra.mxu0 0
        %296 = vmatprep.subr.bf16.mxu0 0
        %297 = vmatpush1.bf16.msra.mxu0 0
        %298 = vmatprep.subr.bf16.mxu0 0
        %299 = vmatpush1.bf16.msra.mxu0 0
        %300 = vmatprep.subr.bf16.mxu0 0
        %301 = vmatpush1.bf16.msra.mxu0 0
        %302 = vmatprep.subr.bf16.mxu0 0
        %303 = vmatpush1.bf16.msra.mxu0 0
        %304 = vmatprep.subr.bf16.mxu0 0
        %305 = vmatpush1.bf16.msra.mxu0 0
        %306 = vmatprep.subr.bf16.mxu0 0
        %307 = vmatpush1.bf16.msra.mxu0 0
        %308 = vmatprep.subr.bf16.mxu0 0
        %309 = vmatpush1.bf16.msra.mxu0 0
        %310 = vmatprep.subr.bf16.mxu0 0
        %311 = vmatpush1.bf16.msra.mxu0 0
        %312 = vmatprep.subr.bf16.mxu0 0
        %313 = vmatpush1.bf16.msra.mxu0 0
        %314 = vmatprep.subr.bf16.mxu0 0
        %315 = vmatpush1.bf16.msra.mxu0 0
        %316 = vmatprep.mubr.bf16.mxu0 0
        %317 = vmatmul.mubr.bf16.gmra.mrb[0].mxu0 %v282
        %v318 = vpop.f32.mrb[0].mxu0
        %v319 = vadd.f32 0.0, %v318
        %v320 = vpop.f32.mrb[0].mxu0
        %v321 = vpop.f32.mrb[0].mxu0
        %v322 = vadd.f32 0.0, %v321
        %v323 = vpop.f32.mrb[0].mxu0
        %324 = vdwg.mxu0
        %325 = vst [vmem:[%s191] sm:$0xff] %v319
        %326 = vst [vmem:[%s191 + $0x8] sm:$0xff] %v322
        %s327 = sand.u32 %s115, 1
        %s328 = scalar_lea.sflag [#allocation3], %s327
        %s329 = sand.u32 %s115, 1
        %s330 = smul.addr %s329, 16
        %s331 = scalar_lea.vmem [#allocation2], %s330
        // Predicated region
        $region37: #{gpt_forward.13} parent=35 // pred_check
          %p332 = pneg %p125
        $region38: #{gpt_forward.13} parent=35 // pred_check_branch
          %334 = sbr.rel (%p332) target = $region40
        $region39: #{gpt_forward.13} parent=35 // pred_region
          %s335 = smul.u32 2, %s18
          %s337 = ssub.s32 256, 256
          %338 = vsyncadd %s328, %s337
          %s339 = smul.addr %s335, 128
          %s340 = scalar_lea.hbm %s4, %s339
          %s341 = sshll.u32 %s331, 4
          %s342 = int_to_ptr.vmem [resolvable:$true] %s341
          %347 = dma.vmem_to_hbm [thread:$0]  %s342, 256, %s340, %s328, 128, 128, 8
        $region40: #{gpt_forward.13} parent=35 // pred_fallthru
          _
      $region36: #{gpt_forward.13} parent=5 // pred_fallthru
        _
      %p348 = scmp.le.s32.totalorder 2, %s13
      // Predicated region
      $region41: #{gpt_forward.13} parent=5 // pred_check
        %p349 = pneg %p348
      $region42: #{gpt_forward.13} parent=5 // pred_check_branch
        %351 = sbr.rel (%p349) target = $region44
      $region43: #{gpt_forward.13} parent=5 // pred_region
        %s352 = ssub.s32 %s13, 2
        // Predicated region
        $region45: #{gpt_forward.13} parent=43 // pred_check
          %p353 = pneg %p131
        $region46: #{gpt_forward.13} parent=43 // pred_check_branch
          %355 = sbr.rel (%p353) target = $region48
        $region47: #{gpt_forward.13} parent=43 // pred_region
          %s356 = sand.u32 %s116, 1
          %s357 = scalar_lea.sflag [#allocation3], %s356
          %s358 = sand.u32 %s116, 1
          %s359 = smul.addr %s358, 16
          %s360 = scalar_lea.vmem [#allocation2], %s359
          %361 = dma.done %s357, 256
        $region48: #{gpt_forward.13} parent=43 // pred_fallthru
          _
      $region44: #{gpt_forward.13} parent=5 // pred_fallthru
        _
    $region6: #{gpt_forward.13} parent=1 // loop_footer
      %s17 = sadd.s32 1, %s13
    $region7: #{gpt_forward.13} parent=1 // loop_footer_branch
      %12 = sbr.rel target = $region3
    $region8: #{gpt_forward.13} parent=1 // loop_exit
      _
    %362 = vsyncpa [#allocation3], 1
    %s363 = scalar_lea.sflag [#allocation3], 1
    %364 = vsyncpa %s363, 1

// kernel: gpt_forward.9
$region0: #{gpt_forward.9}
  #allocation0 [shape = 'u32[]', space=smem, size = 0x4, offset = 0x4, fixed_abs, tag = 'smem constant byte address 0x4 - core index']
  #allocation1 [shape = 'u32[144,128]{1,0:T(1,128)}', space=vmem, size = 0x12000, scoped, tag = 'internal scratch']
  #allocation2 [shape = 'f32[16,64]{1,0:T(8,128)}', space=vmem, size = 0x2000, scoped, tag = 'scratch operand']
  #allocation3 [shape = 'bf16[16,64]{1,0:T(16,128)(2,1)}', space=vmem, size = 0x1000, scoped, tag = 'scratch operand']
  #allocation4 [shape = 'f32[16,64]{1,0:T(8,128)}', space=vmem, size = 0x2000, scoped, tag = 'scratch operand']
  %s0 = inlined_call_operand.vmem [shape: f32[64,64], index: 0, kind: input, shape index: {}, may-alias: {0,10}]
  %s1 = inlined_call_operand.vmem [shape: bf16[64,64], index: 1, kind: input, shape index: {}]
  %s2 = inlined_call_operand.vmem [shape: bf16[64,64], index: 2, kind: input, shape index: {}]
  %s3 = inlined_call_operand.vmem [shape: f32[1,64], index: 3, kind: input, shape index: {}]
  %s4 = inlined_call_operand.vmem [shape: f32[1,64], index: 4, kind: input, shape index: {}]
  %s5 = inlined_call_operand.vmem [shape: f32[1,64], index: 5, kind: input, shape index: {}]
  %s6 = inlined_call_operand.vmem [shape: bf16[64,256], index: 6, kind: input, shape index: {}]
  %s7 = inlined_call_operand.vmem [shape: f32[1,256], index: 7, kind: input, shape index: {}]
  %s8 = inlined_call_operand.vmem [shape: bf16[256,64], index: 8, kind: input, shape index: {}]
  %s9 = inlined_call_operand.vmem [shape: f32[1,64], index: 9, kind: input, shape index: {}]
  %s10 = inlined_call_operand.vmem [shape: f32[64,64], index: 10, kind: output, shape index: {}, may-alias: {0,10}]
  %s11 = sld [smem:[#allocation0]]
  $region122: #{gpt_forward.9} parent=0
    _
  %s13 = ssub.s32 1, %s11
  %s14 = scalar_select 0, %s13, %s11
  $region1: #{gpt_forward.9} parent=0
    #allocation5 [shape = 'u8[32768]{0}', space=vmem, size = 0x8000, scoped, tag = 'input window, operand 6']
    loop: start=0, step=1, limit=10
    $region2: #{gpt_forward.9} parent=1 // loop_pre_header
      _
    $region3: #{gpt_forward.9} parent=1 // loop_header
      %s16 = sphi 0, %s20
      %p17 = scmp.ge.s32.totalorder %s16, 10
      %s23 = sphi 0, %s35
      %s24 = sphi 0, %s31
      %s25 = sphi 0, %s23
      %s26 = sphi 0, %s24
      %s27 = sphi 0, %s25
      %s28 = sphi 0, %s26
      %s38 = sphi 0, %s40
      %s41 = sphi 0, %s38
      %s42 = sphi 0, %s41
      %s58 = sphi 0, %s42
      %s64 = sphi 0, %s66
      %s67 = sphi 0, %s64
      %s68 = sphi 0, %s67
      %s84 = sphi 0, %s68
      %s88 = sphi 0, %s88
      %s90 = sphi 0, %s88
      %s91 = sphi 0, %s90
      %s105 = sphi 0, %s91
      %s109 = sphi 0, %s109
      %s111 = sphi 0, %s109
      %s112 = sphi 0, %s111
      %s126 = sphi 0, %s112
      %s130 = sphi 0, %s130
      %s132 = sphi 0, %s130
      %s133 = sphi 0, %s132
      %s147 = sphi 0, %s133
      %s151 = sphi 0, %s151
      %s153 = sphi 0, %s151
      %s154 = sphi 0, %s153
      %s168 = sphi 0, %s154
      %s174 = sphi 0, %s176
      %s177 = sphi 0, %s174
      %s178 = sphi 0, %s177
      %s194 = sphi 0, %s178
      %s200 = sphi 0, %s202
      %s203 = sphi 0, %s200
      %s204 = sphi 0, %s203
      %s220 = sphi 0, %s204
      %s226 = sphi 0, %s228
      %s229 = sphi 0, %s226
      %s230 = sphi 0, %s229
      %s246 = sphi 0, %s230
      %s250 = sphi 0, %s250
      %s252 = sphi 0, %s250
      %s253 = sphi 0, %s252
      %s267 = sphi 0, %s253
      %s273 = sphi 0, %s275
      %s276 = sphi 0, %s273
      %s277 = sphi 0, %s276
      %s293 = sphi 0, %s277
    $region4: #{gpt_forward.9} parent=1 // loop_header_branch
      %19 = sbr.rel (%p17) target = $region8
    $region5: #{gpt_forward.9} parent=1 // loop_body
      %s21 = ssub.s32 %s16, 1
      %s22 = ssub.s32 %s16, 2
      %s29 = sadd.s32 1, %s24
      %p30 = scmp.ge.s32.totalorder %s29, 2
      %s31 = scalar_select %p30, 0, %s29
      %s32 = sadd.s32 1, %s23
      %s33 = scalar_select %p30, %s32, %s23
      %p34 = scmp.ge.s32.totalorder %s33, 4
      %s35 = scalar_select %p34, 0, %s33
      %s36 = ssub.s32 %s23, %s35
      %p37 = scmp.eq.s32.totalorder %s36, 0
      %s39 = sadd.s32 %s38, 1
      %s40 = scalar_select %p37, %s38, %s39
      %p43 = pneg %p37
      %p44 = scmp.eq.s32.totalorder %s16, 7
      %p45 = por %p43, %p44
      %p46 = scmp.ne.s32.totalorder %s38, %s41
      %p47 = scmp.eq.s32.totalorder %s16, 0
      %p48 = por %p46, %p47
      %p49 = scmp.ne.s32.totalorder %s38, %s41
      %p50 = scmp.eq.s32.totalorder %s21, 7
      %p51 = por %p49, %p50
      %p52 = scmp.ne.s32.totalorder %s41, %s42
      %p53 = scmp.eq.s32.totalorder %s21, 0
      %p54 = por %p52, %p53
      %p55 = scmp.ne.s32.totalorder %s41, %s42
      %p56 = scmp.eq.s32.totalorder %s22, 7
      %p57 = por %p55, %p56
      %p59 = scmp.ne.s32.totalorder %s42, %s58
      %p60 = scmp.eq.s32.totalorder %s22, 0
      %p61 = por %p59, %p60
      %s62 = ssub.s32 %s23, %s35
      %p63 = scmp.eq.s32.totalorder %s62, 0
      %s65 = sadd.s32 %s64, 1
      %s66 = scalar_select %p63, %s64, %s65
      %p69 = pneg %p63
      %p70 = scmp.eq.s32.totalorder %s16, 7
      %p71 = por %p69, %p70
      %p72 = scmp.ne.s32.totalorder %s64, %s67
      %p73 = scmp.eq.s32.totalorder %s16, 0
      %p74 = por %p72, %p73
      %p75 = scmp.ne.s32.totalorder %s64, %s67
      %p76 = scmp.eq.s32.totalorder %s21, 7
      %p77 = por %p75, %p76
      %p78 = scmp.ne.s32.totalorder %s67, %s68
      %p79 = scmp.eq.s32.totalorder %s21, 0
      %p80 = por %p78, %p79
      %p81 = scmp.ne.s32.totalorder %s67, %s68
      %p82 = scmp.eq.s32.totalorder %s22, 7
      %p83 = por %p81, %p82
      %p85 = scmp.ne.s32.totalorder %s68, %s84
      %p86 = scmp.eq.s32.totalorder %s22, 0
      %p87 = por %p85, %p86
      %s89 = sadd.s32 %s88, 1
      %p92 = scmp.eq.s32.totalorder %s16, 7
      %p93 = scmp.ne.s32.totalorder %s88, %s90
      %p94 = scmp.eq.s32.totalorder %s16, 0
      %p95 = por %p93, %p94
      %p96 = scmp.ne.s32.totalorder %s88, %s90
      %p97 = scmp.eq.s32.totalorder %s21, 7
      %p98 = por %p96, %p97
      %p99 = scmp.ne.s32.totalorder %s90, %s91
      %p100 = scmp.eq.s32.totalorder %s21, 0
      %p101 = por %p99, %p100
      %p102 = scmp.ne.s32.totalorder %s90, %s91
      %p103 = scmp.eq.s32.totalorder %s22, 7
      %p104 = por %p102, %p103
      %p106 = scmp.ne.s32.totalorder %s91, %s105
      %p107 = scmp.eq.s32.totalorder %s22, 0
      %p108 = por %p106, %p107
      %s110 = sadd.s32 %s109, 1
      %p113 = scmp.eq.s32.totalorder %s16, 7
      %p114 = scmp.ne.s32.totalorder %s109, %s111
      %p115 = scmp.eq.s32.totalorder %s16, 0
      %p116 = por %p114, %p115
      %p117 = scmp.ne.s32.totalorder %s109, %s111
      %p118 = scmp.eq.s32.totalorder %s21, 7
      %p119 = por %p117, %p118
      %p120 = scmp.ne.s32.totalorder %s111, %s112
      %p121 = scmp.eq.s32.totalorder %s21, 0
      %p122 = por %p120, %p121
      %p123 = scmp.ne.s32.totalorder %s111, %s112
      %p124 = scmp.eq.s32.totalorder %s22, 7
      %p125 = por %p123, %p124
      %p127 = scmp.ne.s32.totalorder %s112, %s126
      %p128 = scmp.eq.s32.totalorder %s22, 0
      %p129 = por %p127, %p128
      %s131 = sadd.s32 %s130, 1
      %p134 = scmp.eq.s32.totalorder %s16, 7
      %p135 = scmp.ne.s32.totalorder %s130, %s132
      %p136 = scmp.eq.s32.totalorder %s16, 0
      %p137 = por %p135, %p136
      %p138 = scmp.ne.s32.totalorder %s130, %s132
      %p139 = scmp.eq.s32.totalorder %s21, 7
      %p140 = por %p138, %p139
      %p141 = scmp.ne.s32.totalorder %s132, %s133
      %p142 = scmp.eq.s32.totalorder %s21, 0
      %p143 = por %p141, %p142
      %p144 = scmp.ne.s32.totalorder %s132, %s133
      %p145 = scmp.eq.s32.totalorder %s22, 7
      %p146 = por %p144, %p145
      %p148 = scmp.ne.s32.totalorder %s133, %s147
      %p149 = scmp.eq.s32.totalorder %s22, 0
      %p150 = por %p148, %p149
      %s152 = sadd.s32 %s151, 1
      %p155 = scmp.eq.s32.totalorder %s16, 7
      %p156 = scmp.ne.s32.totalorder %s151, %s153
      %p157 = scmp.eq.s32.totalorder %s16, 0
      %p158 = por %p156, %p157
      %p159 = scmp.ne.s32.totalorder %s151, %s153
      %p160 = scmp.eq.s32.totalorder %s21, 7
      %p161 = por %p159, %p160
      %p162 = scmp.ne.s32.totalorder %s153, %s154
      %p163 = scmp.eq.s32.totalorder %s21, 0
      %p164 = por %p162, %p163
      %p165 = scmp.ne.s32.totalorder %s153, %s154
      %p166 = scmp.eq.s32.totalorder %s22, 7
      %p167 = por %p165, %p166
      %p169 = scmp.ne.s32.totalorder %s154, %s168
      %p170 = scmp.eq.s32.totalorder %s22, 0
      %p171 = por %p169, %p170
      %s172 = ssub.s32 %s24, %s31
      %p173 = scmp.eq.s32.totalorder %s172, 0
      %s175 = sadd.s32 %s174, 1
      %s176 = scalar_select %p173, %s174, %s175
      %p179 = pneg %p173
      %p180 = scmp.eq.s32.totalorder %s16, 7
      %p181 = por %p179, %p180
      %p182 = scmp.ne.s32.totalorder %s174, %s177
      %p183 = scmp.eq.s32.totalorder %s16, 0
      %p184 = por %p182, %p183
      %p185 = scmp.ne.s32.totalorder %s174, %s177
      %p186 = scmp.eq.s32.totalorder %s21, 7
      %p187 = por %p185, %p186
      %p188 = scmp.ne.s32.totalorder %s177, %s178
      %p189 = scmp.eq.s32.totalorder %s21, 0
      %p190 = por %p188, %p189
      %p191 = scmp.ne.s32.totalorder %s177, %s178
      %p192 = scmp.eq.s32.totalorder %s22, 7
      %p193 = por %p191, %p192
      %p195 = scmp.ne.s32.totalorder %s178, %s194
      %p196 = scmp.eq.s32.totalorder %s22, 0
      %p197 = por %p195, %p196
      %s198 = ssub.s32 %s24, %s31
      %p199 = scmp.eq.s32.totalorder %s198, 0
      %s201 = sadd.s32 %s200, 1
      %s202 = scalar_select %p199, %s200, %s201
      %p205 = pneg %p199
      %p206 = scmp.eq.s32.totalorder %s16, 7
      %p207 = por %p205, %p206
      %p208 = scmp.ne.s32.totalorder %s200, %s203
      %p209 = scmp.eq.s32.totalorder %s16, 0
      %p210 = por %p208, %p209
      %p211 = scmp.ne.s32.totalorder %s200, %s203
      %p212 = scmp.eq.s32.totalorder %s21, 7
      %p213 = por %p211, %p212
      %p214 = scmp.ne.s32.totalorder %s203, %s204
      %p215 = scmp.eq.s32.totalorder %s21, 0
      %p216 = por %p214, %p215
      %p217 = scmp.ne.s32.totalorder %s203, %s204
      %p218 = scmp.eq.s32.totalorder %s22, 7
      %p219 = por %p217, %p218
      %p221 = scmp.ne.s32.totalorder %s204, %s220
      %p222 = scmp.eq.s32.totalorder %s22, 0
      %p223 = por %p221, %p222
      %s224 = ssub.s32 %s24, %s31
      %p225 = scmp.eq.s32.totalorder %s224, 0
      %s227 = sadd.s32 %s226, 1
      %s228 = scalar_select %p225, %s226, %s227
      %p231 = pneg %p225
      %p232 = scmp.eq.s32.totalorder %s16, 7
      %p233 = por %p231, %p232
      %p234 = scmp.ne.s32.totalorder %s226, %s229
      %p235 = scmp.eq.s32.totalorder %s16, 0
      %p236 = por %p234, %p235
      %p237 = scmp.ne.s32.totalorder %s226, %s229
      %p238 = scmp.eq.s32.totalorder %s21, 7
      %p239 = por %p237, %p238
      %p240 = scmp.ne.s32.totalorder %s229, %s230
      %p241 = scmp.eq.s32.totalorder %s21, 0
      %p242 = por %p240, %p241
      %p243 = scmp.ne.s32.totalorder %s229, %s230
      %p244 = scmp.eq.s32.totalorder %s22, 7
      %p245 = por %p243, %p244
      %p247 = scmp.ne.s32.totalorder %s230, %s246
      %p248 = scmp.eq.s32.totalorder %s22, 0
      %p249 = por %p247, %p248
      %s251 = sadd.s32 %s250, 1
      %p254 = scmp.eq.s32.totalorder %s16, 7
      %p255 = scmp.ne.s32.totalorder %s250, %s252
      %p256 = scmp.eq.s32.totalorder %s16, 0
      %p257 = por %p255, %p256
      %p258 = scmp.ne.s32.totalorder %s250, %s252
      %p259 = scmp.eq.s32.totalorder %s21, 7
      %p260 = por %p258, %p259
      %p261 = scmp.ne.s32.totalorder %s252, %s253
      %p262 = scmp.eq.s32.totalorder %s21, 0
      %p263 = por %p261, %p262
      %p264 = scmp.ne.s32.totalorder %s252, %s253
      %p265 = scmp.eq.s32.totalorder %s22, 7
      %p266 = por %p264, %p265
      %p268 = scmp.ne.s32.totalorder %s253, %s267
      %p269 = scmp.eq.s32.totalorder %s22, 0
      %p270 = por %p268, %p269
      %s271 = ssub.s32 %s23, %s35
      %p272 = scmp.eq.s32.totalorder %s271, 0
      %s274 = sadd.s32 %s273, 1
      %s275 = scalar_select %p272, %s273, %s274
      %p278 = pneg %p272
      %p279 = scmp.eq.s32.totalorder %s16, 7
      %p280 = por %p278, %p279
      %p281 = scmp.ne.s32.totalorder %s273, %s276
      %p282 = scmp.eq.s32.totalorder %s16, 0
      %p283 = por %p281, %p282
      %p284 = scmp.ne.s32.totalorder %s273, %s276
      %p285 = scmp.eq.s32.totalorder %s21, 7
      %p286 = por %p284, %p285
      %p287 = scmp.ne.s32.totalorder %s276, %s277
      %p288 = scmp.eq.s32.totalorder %s21, 0
      %p289 = por %p287, %p288
      %p290 = scmp.ne.s32.totalorder %s276, %s277
      %p291 = scmp.eq.s32.totalorder %s22, 7
      %p292 = por %p290, %p291
      %p294 = scmp.ne.s32.totalorder %s277, %s293
      %p295 = scmp.eq.s32.totalorder %s22, 0
      %p296 = por %p294, %p295
      %p297 = scmp.le.s32.totalorder 1, %s16
      %p298 = scmp.lt.s32.totalorder %s16, 9
      %p299 = pnand %p297, %p298
      %p300 = pneg %p299
      // Predicated region
      $region9: #{gpt_forward.9} parent=5 // pred_check
        _
      $region10: #{gpt_forward.9} parent=5 // pred_check_branch
        %302 = sbr.rel (%p299) target = $region12
      $region11: #{gpt_forward.9} parent=5 // pred_region
        %s303 = ssub.s32 %s16, 1
        // Predicated region
        $region13: #{gpt_forward.9} parent=11 // pred_check
          %p304 = pneg %p101
        $region14: #{gpt_forward.9} parent=11 // pred_check_branch
          %306 = sbr.rel (%p304) target = $region16
        $region15: #{gpt_forward.9} parent=11 // pred_region
          _
        $region16: #{gpt_forward.9} parent=11 // pred_fallthru
          _
        // Predicated region
        $region17: #{gpt_forward.9} parent=11 // pred_check
          %p307 = pneg %p122
        $region18: #{gpt_forward.9} parent=11 // pred_check_branch
          %309 = sbr.rel (%p307) target = $region20
        $region19: #{gpt_forward.9} parent=11 // pred_region
          _
        $region20: #{gpt_forward.9} parent=11 // pred_fallthru
          _
        // Predicated region
        $region21: #{gpt_forward.9} parent=11 // pred_check
          %p310 = pneg %p143
        $region22: #{gpt_forward.9} parent=11 // pred_check_branch
          %312 = sbr.rel (%p310) target = $region24
        $region23: #{gpt_forward.9} parent=11 // pred_region
          _
        $region24: #{gpt_forward.9} parent=11 // pred_fallthru
          _
        // Predicated region
        $region25: #{gpt_forward.9} parent=11 // pred_check
          %p313 = pneg %p164
        $region26: #{gpt_forward.9} parent=11 // pred_check_branch
          %315 = sbr.rel (%p313) target = $region28
        $region27: #{gpt_forward.9} parent=11 // pred_region
          _
        $region28: #{gpt_forward.9} parent=11 // pred_fallthru
          _
        // Predicated region
        $region29: #{gpt_forward.9} parent=11 // pred_check
          %p316 = pneg %p263
        $region30: #{gpt_forward.9} parent=11 // pred_check_branch
          %318 = sbr.rel (%p316) target = $region32
        $region31: #{gpt_forward.9} parent=11 // pred_region
          _
        $region32: #{gpt_forward.9} parent=11 // pred_fallthru
          _
      $region12: #{gpt_forward.9} parent=5 // pred_fallthru
        _
      %p319 = scmp.lt.s32.totalorder %s16, 8
      // Predicated region
      $region33: #{gpt_forward.9} parent=5 // pred_check
        %p320 = pneg %p319
      $region34: #{gpt_forward.9} parent=5 // pred_check_branch
        %322 = sbr.rel (%p320) target = $region36
      $region35: #{gpt_forward.9} parent=5 // pred_region
        // Predicated region
        $region37: #{gpt_forward.9} parent=35 // pred_check
          %p323 = pneg %p48
        $region38: #{gpt_forward.9} parent=35 // pred_check_branch
          %325 = sbr.rel (%p323) target = $region40
        $region39: #{gpt_forward.9} parent=35 // pred_region
          %s326 = smul.u32 2, %s23
          %p327 = scmp.lt.s32.totalorder %s326, 7
          %s328 = scalar_select %p327, %s326, 7
          %s329 = smul.addr %s328, 8
          %s330 = scalar_lea.vmem %s0, %s329
          %s331 = smul.u32 2, %s23
        $region40: #{gpt_forward.9} parent=35 // pred_fallthru
          _
        // Predicated region
        $region41: #{gpt_forward.9} parent=35 // pred_check
          %p332 = pneg %p74
        $region42: #{gpt_forward.9} parent=35 // pred_check_branch
          %334 = sbr.rel (%p332) target = $region44
        $region43: #{gpt_forward.9} parent=35 // pred_region
          %s335 = smul.u32 2, %s23
          %p336 = scmp.lt.s32.totalorder %s335, 7
          %s337 = scalar_select %p336, %s335, 7
          %s338 = smul.addr %s337, 4
          %s339 = scalar_lea.vmem %s1, %s338
          %s340 = smul.u32 2, %s23
        $region44: #{gpt_forward.9} parent=35 // pred_fallthru
          _
        // Predicated region
        $region45: #{gpt_forward.9} parent=35 // pred_check
          %p341 = pneg %p184
        $region46: #{gpt_forward.9} parent=35 // pred_check_branch
          %343 = sbr.rel (%p341) target = $region48
        $region47: #{gpt_forward.9} parent=35 // pred_region
          %s344 = sand.u32 %s174, 1
          %s345 = sand.u32 %s174, 1
          %s346 = smul.addr %s345, 32
          %s347 = scalar_lea.vmem [#allocation5], %s346
          %s348 = smul.addr %s24, 4
          %s349 = scalar_lea.vmem %s6, %s348
          // Predicated region
          $region49: #{gpt_forward.9} parent=47 // pred_check
            _
          $region50: #{gpt_forward.9} parent=47 // pred_check_branch
            %351 = sbr.rel (0) target = $region52
          $region51: #{gpt_forward.9} parent=47 // pred_region
            // Predicated region
            $region53: #{gpt_forward.9} parent=51 // pred_check
              _
            $region54: #{gpt_forward.9} parent=51 // pred_check_branch
              %353 = sbr.rel target = $region56
            $region55: #{gpt_forward.9} parent=51 // pred_region
              // Predicated region
              $region68: #{gpt_forward.9} parent=55 // pred_check
                _
              $region69: #{gpt_forward.9} parent=55 // pred_check_branch
                %382 = sbr.rel (0) target = $region71
              $region70: #{gpt_forward.9} parent=55 // pred_region
                loop: start=0, step=1, limit=1
                $region72: #{gpt_forward.9} parent=70 // loop_pre_header
                  _
                $region73: #{gpt_forward.9} parent=70 // loop_header
                  %s384 = sphi 0, %s388
                  %p385 = scmp.ge.s32.totalorder %s384, 1
                  %s389 = sphi %s349, %s349
                  %s390 = sphi %s347, %s347
                $region74: #{gpt_forward.9} parent=70 // loop_header_branch
                  %387 = sbr.rel (%p385) target = $region78
                $region75: #{gpt_forward.9} parent=70 // loop_body
                  _
                $region76: #{gpt_forward.9} parent=70 // loop_footer
                  %s388 = sadd.s32 1, %s384
                $region77: #{gpt_forward.9} parent=70 // loop_footer_branch
                  %383 = sbr.rel target = $region73
                $region78: #{gpt_forward.9} parent=70 // loop_exit
                  _
                loop: start=0, step=1, limit=1
                $region79: #{gpt_forward.9} parent=70 // loop_pre_header
                  _
                $region80: #{gpt_forward.9} parent=70 // loop_header
                  %s393 = sphi 0, %s397
                  %p394 = scmp.ge.s32.totalorder %s393, 1
                  %s398 = sphi %s349, %s349
                  %s399 = sphi %s347, %s347
                $region81: #{gpt_forward.9} parent=70 // loop_header_branch
                  %396 = sbr.rel (%p394) target = $region85
                $region82: #{gpt_forward.9} parent=70 // loop_body
                  %v400 = vld [vmem:[%s398] sm:$0xf]
                  %401 = vst [vmem:[%s399] sm:$0xf] %v400
                  %v402 = vld [vmem:[%s398 + $0x8] sm:$0xf]
                  %403 = vst [vmem:[%s399 + $0x4] sm:$0xf] %v402
                  %v404 = vld [vmem:[%s398 + $0x10] sm:$0xf]
                  %405 = vst [vmem:[%s399 + $0x8] sm:$0xf] %v404
                  %v406 = vld [vmem:[%s398 + $0x18] sm:$0xf]
                  %407 = vst [vmem:[%s399 + $0xc] sm:$0xf] %v406
                  %v408 = vld [vmem:[%s398 + $0x20] sm:$0xf]
                  %409 = vst [vmem:[%s399 + $0x10] sm:$0xf] %v408
                  %v410 = vld [vmem:[%s398 + $0x28] sm:$0xf]
                  %411 = vst [vmem:[%s399 + $0x14] sm:$0xf] %v410
                  %v412 = vld [vmem:[%s398 + $0x30] sm:$0xf]
                  %413 = vst [vmem:[%s399 + $0x18] sm:$0xf] %v412
                  %v414 = vld [vmem:[%s398 + $0x38] sm:$0xf]
                  %415 = vst [vmem:[%s399 + $0x1c] sm:$0xf] %v414
                $region83: #{gpt_forward.9} parent=70 // loop_footer
                  %s397 = sadd.s32 1, %s393
                $region84: #{gpt_forward.9} parent=70 // loop_footer_branch
                  %392 = sbr.rel target = $region80
                $region85: #{gpt_forward.9} parent=70 // loop_exit
                  _
              $region71: #{gpt_forward.9} parent=55 // pred_fallthru
                _
            $region56: #{gpt_forward.9} parent=51 // pred_fallthru
              _
            // Predicated region
            $region57: #{gpt_forward.9} parent=51 // pred_check
              _
            $region58: #{gpt_forward.9} parent=51 // pred_check_branch
              %355 = sbr.rel (0) target = $region60
            $region59: #{gpt_forward.9} parent=51 // pred_region
              loop: start=0, step=1, limit=1
              $region61: #{gpt_forward.9} parent=59 // loop_pre_header
                _
              $region62: #{gpt_forward.9} parent=59 // loop_header
                %s358 = sphi 0, %s362
                %p359 = scmp.ge.s32.totalorder %s358, 1
                %s363 = sphi %s349, %s349
                %s364 = sphi %s347, %s347
              $region63: #{gpt_forward.9} parent=59 // loop_header_branch
                %361 = sbr.rel (%p359) target = $region67
              $region64: #{gpt_forward.9} parent=59 // loop_body
                %v365 = vld [vmem:[%s363] sm:$0xf]
                %366 = vst [vmem:[%s364] sm:$0xf] %v365
                %v367 = vld [vmem:[%s363 + $0x8] sm:$0xf]
                %368 = vst [vmem:[%s364 + $0x4] sm:$0xf] %v367
                %v369 = vld [vmem:[%s363 + $0x10] sm:$0xf]
                %370 = vst [vmem:[%s364 + $0x8] sm:$0xf] %v369
                %v371 = vld [vmem:[%s363 + $0x18] sm:$0xf]
                %372 = vst [vmem:[%s364 + $0xc] sm:$0xf] %v371
                %v373 = vld [vmem:[%s363 + $0x20] sm:$0xf]
                %374 = vst [vmem:[%s364 + $0x10] sm:$0xf] %v373
                %v375 = vld [vmem:[%s363 + $0x28] sm:$0xf]
                %376 = vst [vmem:[%s364 + $0x14] sm:$0xf] %v375
                %v377 = vld [vmem:[%s363 + $0x30] sm:$0xf]
                %378 = vst [vmem:[%s364 + $0x18] sm:$0xf] %v377
                %v379 = vld [vmem:[%s363 + $0x38] sm:$0xf]
                %380 = vst [vmem:[%s364 + $0x1c] sm:$0xf] %v379
              $region65: #{gpt_forward.9} parent=59 // loop_footer
                %s362 = sadd.s32 1, %s358
              $region66: #{gpt_forward.9} parent=59 // loop_footer_branch
                %357 = sbr.rel target = $region62
              $region67: #{gpt_forward.9} parent=59 // loop_exit
                _
            $region60: #{gpt_forward.9} parent=51 // pred_fallthru
              _
          $region52: #{gpt_forward.9} parent=47 // pred_fallthru
            _
          %416 = vnop
        $region48: #{gpt_forward.9} parent=35 // pred_fallthru
          _
        // Predicated region
        $region86: #{gpt_forward.9} parent=35 // pred_check
          %p417 = pneg %p210
        $region87: #{gpt_forward.9} parent=35 // pred_check_branch
          %419 = sbr.rel (%p417) target = $region89
        $region88: #{gpt_forward.9} parent=35 // pred_region
          %p420 = scmp.lt.s32.totalorder %s24, 1
          %s421 = scalar_select %p420, %s24, 1
          %s422 = scalar_lea.vmem %s7, %s421
        $region89: #{gpt_forward.9} parent=35 // pred_fallthru
          _
        // Predicated region
        $region90: #{gpt_forward.9} parent=35 // pred_check
          %p423 = pneg %p236
        $region91: #{gpt_forward.9} parent=35 // pred_check_branch
          %425 = sbr.rel (%p423) target = $region93
        $region92: #{gpt_forward.9} parent=35 // pred_region
          %s426 = smul.u32 16, %s24
          %p427 = scmp.lt.s32.totalorder %s426, 31
          %s428 = scalar_select %p427, %s426, 31
          %s429 = smul.addr %s428, 4
          %s430 = scalar_lea.vmem %s8, %s429
          %s431 = smul.u32 16, %s24
        $region93: #{gpt_forward.9} parent=35 // pred_fallthru
          _
      $region36: #{gpt_forward.9} parent=5 // pred_fallthru
        _
      %p432 = scmp.le.s32.totalorder 1, %s16
      %p433 = scmp.lt.s32.totalorder %s16, 9
      %p434 = pnand %p432, %p433
      %p435 = pneg %p434
      // Predicated region
      $region94: #{gpt_forward.9} parent=5 // pred_check
        _
      $region95: #{gpt_forward.9} parent=5 // pred_check_branch
        %437 = sbr.rel (%p434) target = $region97
      $region96: #{gpt_forward.9} parent=5 // pred_region
        %s438 = ssub.s32 %s16, 1
        %s439 = sand.u32 %s177, 1
        %s440 = sand.u32 %s177, 1
        %s441 = smul.addr %s440, 32
        %s442 = scalar_lea.vmem [#allocation5], %s441
        // Predicated region
        $region98: #{gpt_forward.9} parent=96 // pred_check
          %p443 = pneg %p190
        $region99: #{gpt_forward.9} parent=96 // pred_check_branch
          %445 = sbr.rel (%p443) target = $region101
        $region100: #{gpt_forward.9} parent=96 // pred_region
          _
        $region101: #{gpt_forward.9} parent=96 // pred_fallthru
          _
        %s446 = smul.u32 2, %s25
        %p447 = scmp.lt.s32.totalorder %s446, 7
        %s448 = scalar_select %p447, %s446, 7
        %s449 = smul.addr %s448, 8
        %s450 = scalar_lea.vmem %s0, %s449
        %p451 = pneg %p54
        %p452 = pneg %p51
        %s453 = smul.u32 2, %s25
        %p454 = scmp.lt.s32.totalorder %s453, 7
        %s455 = scalar_select %p454, %s453, 7
        %s456 = smul.addr %s455, 4
        %s457 = scalar_lea.vmem %s1, %s456
        %p458 = pneg %p80
        %p459 = pneg %p77
        %p460 = pneg %p101
        %p461 = pneg %p98
        %p462 = pneg %p122
        %p463 = pneg %p119
        %p464 = pneg %p143
        %p465 = pneg %p140
        %p466 = pneg %p164
        %p467 = pneg %p161
        %s468 = sand.u32 %s177, 1
        %s469 = sand.u32 %s177, 1
        %s470 = smul.addr %s469, 32
        %s471 = scalar_lea.vmem [#allocation5], %s470
        %p472 = pneg %p190
        %p473 = pneg %p187
        %p474 = scmp.lt.s32.totalorder %s26, 1
        %s475 = scalar_select %p474, %s26, 1
        %s476 = scalar_lea.vmem %s7, %s475
        %p477 = pneg %p216
        %p478 = pneg %p213
        %s479 = smul.u32 16, %s26
        %p480 = scmp.lt.s32.totalorder %s479, 31
        %s481 = scalar_select %p480, %s479, 31
        %s482 = smul.addr %s481, 4
        %s483 = scalar_lea.vmem %s8, %s482
        %p484 = pneg %p242
        %p485 = pneg %p239
        %p486 = pneg %p263
        %p487 = pneg %p260
        %p488 = pneg %p289
        %p489 = pneg %p286
        %s490 = smul.u32 2, %s25
        %p491 = scmp.lt.s32.totalorder %s490, 7
        %s492 = scalar_select %p491, %s490, 7
        %s493 = smul.addr %s492, 8
        %s494 = scalar_lea.vmem %s10, %s493
        %s495 = smul.u32 2, %s25
        %p496 = scmp.lt.s32.totalorder %s495, 7
        %s497 = scalar_select %p496, %s495, 7
        %s498 = smul.addr %s497, 8
        %s499 = scalar_lea.vmem %s0, %s498
        %s500 = smul.u32 2, %s25
        %s501 = smul.u32 2, %s25
        %p502 = scmp.lt.s32.totalorder %s501, 7
        %s503 = scalar_select %p502, %s501, 7
        %s504 = smul.addr %s503, 4
        %s505 = scalar_lea.vmem %s1, %s504
        %s506 = smul.u32 2, %s25
        %p507 = scmp.lt.s32.totalorder %s26, 1
        %s508 = scalar_select %p507, %s26, 1
        %s509 = scalar_lea.vmem %s7, %s508
        %s510 = smul.u32 16, %s26
        %p511 = scmp.lt.s32.totalorder %s510, 31
        %s512 = scalar_select %p511, %s510, 31
        %s513 = smul.addr %s512, 4
        %s514 = scalar_lea.vmem %s8, %s513
        %s515 = smul.u32 16, %s26
        %s516 = smul.u32 2, %s25
        %p517 = scmp.lt.s32.totalorder %s516, 7
        %s518 = scalar_select %p517, %s516, 7
        %s519 = smul.addr %s518, 8
        %s520 = scalar_lea.vmem %s10, %s519
        %s521 = smul.u32 2, %s25
        %p523 = scmp.eq.s32.totalorder %s26, 0
        // Predicated region
        $region102: #{gpt_forward.9} parent=96 // pred_check
          %p524 = pneg %p523
        $region103: #{gpt_forward.9} parent=96 // pred_check_branch
          %526 = sbr.rel (%p524) target = $region105
        $region104: #{gpt_forward.9} parent=96 // pred_region
          %v527 = vld [vmem:[%s505] sm:$0xf]
          %v528 = vld [vmem:[%s505 + $0x4] sm:$0xf]
          %v529 = vld [vmem:[%s2] sm:$0xf]
          %v530 = vld [vmem:[%s2 + $0x4] sm:$0xf]
          %v531 = vld [vmem:[%s2 + $0x8] sm:$0xf]
          %v532 = vld [vmem:[%s2 + $0xc] sm:$0xf]
          %v533 = vld [vmem:[%s2 + $0x10] sm:$0xf]
          %v534 = vld [vmem:[%s2 + $0x14] sm:$0xf]
          %v535 = vld [vmem:[%s2 + $0x18] sm:$0xf]
          %v536 = vld [vmem:[%s2 + $0x1c] sm:$0xf]
          %v537 = vld [vmem:[%s3] sm:$0x1]
          %v539 = vlaneseq
          %v540 = vshrl.u32 %v539, 7
          %v541 = vsub.s32 0, %v540
          %v542 = vrot.slane %v537, %v541
          %v546 = vunpack.c.l.b16 %v527
          %v547 = vunpack.c.l.b16 %v528
          %v548 = vpack.c.b16 %v547, %v546
          %v557 = vunpack.c.l.b16 %v529
          %v558 = vunpack.c.l.b16 %v530
          %v559 = vunpack.c.l.b16 %v531
          %v560 = vunpack.c.l.b16 %v532
          %v561 = vunpack.c.l.b16 %v533
          %v562 = vunpack.c.l.b16 %v534
          %v563 = vunpack.c.l.b16 %v535
          %v564 = vunpack.c.l.b16 %v536
          %v565 = vpack.c.b16 %v558, %v557
          %v566 = vpack.c.b16 %v560, %v559
          %v567 = vpack.c.b16 %v562, %v561
          %v568 = vpack.c.b16 %v564, %v563
          %vm573 = vcmask 523264
          %v575 = vsel %vm573, %v548, 0
          %577 = vmatprep.subr.bf16.mxu0 0
          %578 = vmatpush1.bf16.msra.mxu0 %v565
          %579 = vmatprep.subr.bf16.mxu0 0
          %580 = vmatpush1.bf16.msra.mxu0 %v566
          %581 = vmatprep.subr.bf16.mxu0 0
          %582 = vmatpush1.bf16.msra.mxu0 %v567
          %583 = vmatprep.subr.bf16.mxu0 0
          %584 = vmatpush1.bf16.msra.mxu0 %v568
          %585 = vmatprep.subr.bf16.mxu0 0
          %586 = vmatpush1.bf16.msra.mxu0 0
          %587 = vmatprep.subr.bf16.mxu0 0
          %588 = vmatpush1.bf16.msra.mxu0 0
          %589 = vmatprep.subr.bf16.mxu0 0
          %590 = vmatpush1.bf16.msra.mxu0 0
          %591 = vmatprep.subr.bf16.mxu0 0
          %592 = vmatpush1.bf16.msra.mxu0 0
          %593 = vmatprep.subr.bf16.mxu0 0
          %594 = vmatpush1.bf16.msra.mxu0 0
          %595 = vmatprep.subr.bf16.mxu0 0
          %596 = vmatpush1.bf16.msra.mxu0 0
          %597 = vmatprep.subr.bf16.mxu0 0
          %598 = vmatpush1.bf16.msra.mxu0 0
          %599 = vmatprep.subr.bf16.mxu0 0
          %600 = vmatpush1.bf16.msra.mxu0 0
          %601 = vmatprep.subr.bf16.mxu0 0
          %602 = vmatpush1.bf16.msra.mxu0 0
          %603 = vmatprep.subr.bf16.mxu0 0
          %604 = vmatpush1.bf16.msra.mxu0 0
          %605 = vmatprep.subr.bf16.mxu0 0
          %606 = vmatpush1.bf16.msra.mxu0 0
          %607 = vmatprep.subr.bf16.mxu0 0
          %608 = vmatpush1.bf16.msra.mxu0 0
          %609 = vmatprep.mubr.bf16.mxu0 0
          %610 = vmatmul.mubr.bf16.gmra.mrb[0].mxu0 %v575
          %v611 = vpop.f32.mrb[0].mxu0
          %v612 = vadd.f32 %v542, %v611
          %v613 = vpop.f32.mrb[0].mxu0
          %v614 = vpop.f32.mrb[0].mxu0
          %v615 = vadd.f32 %v542, %v614
          %v616 = vpop.f32.mrb[0].mxu0
          %617 = vdwg.mxu0
          %v618 = vld [vmem:[%s499] sm:$0xff]
          %v619 = vld [vmem:[%s499 + $0x8] sm:$0xff]
          %v620 = vadd.f32 %v618, %v612
          %v621 = vadd.f32 %v619, %v615
          %622 = vst.msk [vmem:[#allocation2] sm:$0xff] %vm573, %v620
          %623 = vst.msk [vmem:[#allocation2 + $0x8] sm:$0xff] %vm573, %v621
          %v624 = vld [vmem:[%s4] sm:$0x1]
          %v625 = vld [vmem:[%s5] sm:$0x1]
          %v626 = vsel %vm573, %v620, 0.0
          %627 = vadd.xlane.f32.xlu0 %v626
          %v628 = vpop.xlane.xlu0 %627
          %v629 = vsel %vm573, %v621, 0.0
          %630 = vadd.xlane.f32.xlu0 %v629
          %v631 = vpop.xlane.xlu0 %630
          %v632 = vrcp.pop 64.0
          %v633 = vmul.f32 %v628, %v632
          %v634 = vmul.f32 %v631, %v632
          %v635 = vsub.f32 %v620, %v633
          %v636 = vsub.f32 %v621, %v634
          %v637 = vmul.f32 %v635, %v635
          %v638 = vmul.f32 %v636, %v636
          %v639 = vsel %vm573, %v637, 0.0
          %640 = vadd.xlane.f32.xlu0 %v639
          %v641 = vpop.xlane.xlu0 %640
          %v642 = vsel %vm573, %v638, 0.0
          %643 = vadd.xlane.f32.xlu0 %v642
          %v644 = vpop.xlane.xlu0 %643
          %v645 = vmul.f32 %v641, %v632
          %v646 = vmul.f32 %v644, %v632
          %v647 = vadd.f32 %v645, 1e-05
          %v648 = vadd.f32 %v646, 1e-05
          %v649 = vrsqrt.pop %v647
          %v650 = vrsqrt.pop %v648
          %v651 = vmul.f32 %v635, %v649
          %v652 = vmul.f32 %v636, %v650
          %v654 = vlaneseq
          %v655 = vshrl.u32 %v654, 7
          %v656 = vsub.s32 0, %v655
          %v657 = vrot.slane %v624, %v656
          %v659 = vmul.f32 %v651, %v657
          %v660 = vmul.f32 %v652, %v657
          %v662 = vlaneseq
          %v663 = vshrl.u32 %v662, 7
          %v664 = vsub.s32 0, %v663
          %v665 = vrot.slane %v625, %v664
          %v667 = vadd.f32 %v659, %v665
          %v668 = vadd.f32 %v660, %v665
          %v669 = vpack.c.bf16 %v668, %v667
          %670 = vst.msk [vmem:[#allocation3] sm:$0xff] %vm573, %v669
          %671 = vst.msk [vmem:[#allocation4] sm:$0xff] %vm573, 0.0
          %672 = vst.msk [vmem:[#allocation4 + $0x8] sm:$0xff] %vm573, 0.0
        $region105: #{gpt_forward.9} parent=96 // pred_fallthru
          _
        %v673 = vld [vmem:[#allocation3] sm:$0xff]
        %v674 = vld [vmem:[%s442] sm:$0xf]
        %v675 = vld [vmem:[%s442 + $0x4] sm:$0xf]
        %v676 = vld [vmem:[%s442 + $0x8] sm:$0xf]
        %v677 = vld [vmem:[%s442 + $0xc] sm:$0xf]
        %v678 = vld [vmem:[%s442 + $0x10] sm:$0xf]
        %v679 = vld [vmem:[%s442 + $0x14] sm:$0xf]
        %v680 = vld [vmem:[%s442 + $0x18] sm:$0xf]
        %v681 = vld [vmem:[%s442 + $0x1c] sm:$0xf]
        %v682 = vld [vmem:[%s509] sm:$0x1]
        %v684 = vlaneseq
        %v685 = vshrl.u32 %v684, 7
        %v686 = vsub.s32 0, %v685
        %v687 = vrot.slane %v682, %v686
        %v697 = vunpack.c.l.b16 %v674
        %v698 = vunpack.c.l.b16 %v675
        %v699 = vunpack.c.l.b16 %v676
        %v700 = vunpack.c.l.b16 %v677
        %v701 = vunpack.c.l.b16 %v678
        %v702 = vunpack.c.l.b16 %v679
        %v703 = vunpack.c.l.b16 %v680
        %v704 = vunpack.c.l.b16 %v681
        %v705 = vpack.c.b16 %v698, %v697
        %v706 = vpack.c.b16 %v700, %v699
        %v707 = vpack.c.b16 %v702, %v701
        %v708 = vpack.c.b16 %v704, %v703
        %vm713 = vcmask 523264
        %v715 = vsel %vm713, %v673, 0
        %717 = vmatprep.subr.bf16.mxu0 0
        %718 = vmatpush1.bf16.msra.mxu0 %v705
        %719 = vmatprep.subr.bf16.mxu0 0
        %720 = vmatpush1.bf16.msra.mxu0 %v706
        %721 = vmatprep.subr.bf16.mxu0 0
        %722 = vmatpush1.bf16.msra.mxu0 %v707
        %723 = vmatprep.subr.bf16.mxu0 0
        %724 = vmatpush1.bf16.msra.mxu0 %v708
        %725 = vmatprep.subr.bf16.mxu0 0
        %726 = vmatpush1.bf16.msra.mxu0 0
        %727 = vmatprep.subr.bf16.mxu0 0
        %728 = vmatpush1.bf16.msra.mxu0 0
        %729 = vmatprep.subr.bf16.mxu0 0
        %730 = vmatpush1.bf16.msra.mxu0 0
        %731 = vmatprep.subr.bf16.mxu0 0
        %732 = vmatpush1.bf16.msra.mxu0 0
        %733 = vmatprep.subr.bf16.mxu0 0
        %734 = vmatpush1.bf16.msra.mxu0 0
        %735 = vmatprep.subr.bf16.mxu0 0
        %736 = vmatpush1.bf16.msra.mxu0 0
        %737 = vmatprep.subr.bf16.mxu0 0
        %738 = vmatpush1.bf16.msra.mxu0 0
        %739 = vmatprep.subr.bf16.mxu0 0
        %740 = vmatpush1.bf16.msra.mxu0 0
        %741 = vmatprep.subr.bf16.mxu0 0
        %742 = vmatpush1.bf16.msra.mxu0 0
        %743 = vmatprep.subr.bf16.mxu0 0
        %744 = vmatpush1.bf16.msra.mxu0 0
        %745 = vmatprep.subr.bf16.mxu0 0
        %746 = vmatpush1.bf16.msra.mxu0 0
        %747 = vmatprep.subr.bf16.mxu0 0
        %748 = vmatpush1.bf16.msra.mxu0 0
        %749 = vmatprep.mubr.bf16.mxu0 0
        %750 = vmatmul.mubr.bf16.gmra.mrb[0].mxu0 %v715
        %v751 = vpop.f32.mrb[0].mxu0
        %v752 = vadd.f32 %v687, %v751
        %v753 = vpop.f32.mrb[0].mxu0
        %v754 = vpop.f32.mrb[0].mxu0
        %v755 = vadd.f32 %v687, %v754
        %v756 = vpop.f32.mrb[0].mxu0
        %757 = vdwg.mxu0
        %v758 = vmul.f32 %v752, 0.5
        %v759 = vmul.f32 %v755, 0.5
        %v760 = vmul.f32 %v752, 0.70710677
        %v761 = vmul.f32 %v755, 0.70710677
        %vm762 = vcmp.ge.f32.partialorder %v760, 0.0
        %vm763 = vcmp.ge.f32.partialorder %v761, 0.0
        %v764 = vsel %vm762, 1.0, -1.0
        %v765 = vsel %vm763, 1.0, -1.0
        %v766 = vand.u32 2147483647, %v760
        %v767 = vand.u32 2147483647, %v761
        %v768 = vmul.f32 %v766, 0.3275911
        %v769 = vmul.f32 %v767, 0.3275911
        %v770 = vadd.f32 %v768, 1.0
        %v771 = vadd.f32 %v769, 1.0
        %v772 = vrcp.pop %v770
        %v773 = vmul.f32 1.0, %v772
        %v774 = vrcp.pop %v771
        %v775 = vmul.f32 1.0, %v774
        %v776 = vmul.f32 %v773, 1.0614054
        %v777 = vmul.f32 %v775, 1.0614054
        %v778 = vadd.f32 %v776, -1.4531521
        %v779 = vadd.f32 %v777, -1.4531521
        %v780 = vmul.f32 %v778, %v773
        %v781 = vmul.f32 %v779, %v775
        %v782 = vadd.f32 %v780, 1.4214138
        %v783 = vadd.f32 %v781, 1.4214138
        %v784 = vmul.f32 %v782, %v773
        %v785 = vmul.f32 %v783, %v775
        %v786 = vadd.f32 %v784, -0.28449672
        %v787 = vadd.f32 %v785, -0.28449672
        %v788 = vmul.f32 %v786, %v773
        %v789 = vmul.f32 %v787, %v775
        %v790 = vadd.f32 %v788, 0.2548296
        %v791 = vadd.f32 %v789, 0.2548296
        %v792 = vmul.f32 %v790, %v773
        %v793 = vmul.f32 %v791, %v775
        %v794 = vsub.f32 0.0, %v766
        %v795 = vsub.f32 0.0, %v767
        %v796 = vmul.f32 %v794, %v766
        %v797 = vmul.f32 %v795, %v767
        %v798 = vmul.f32 %v796, 1.442695
        %v799 = vpow.pop %v798
        %v800 = vmul.f32 %v797, 1.442695
        %v801 = vpow.pop %v800
        %v802 = vmul.f32 %v792, %v799
        %v803 = vmul.f32 %v793, %v801
        %v804 = vsub.f32 1.0, %v802
        %v805 = vsub.f32 1.0, %v803
        %v806 = vmul.f32 %v764, %v804
        %v807 = vmul.f32 %v765, %v805
        %v808 = vadd.f32 %v806, 1.0
        %v809 = vadd.f32 %v807, 1.0
        %v810 = vmul.f32 %v758, %v808
        %v811 = vmul.f32 %v759, %v809
        %v812 = vld [vmem:[#allocation4] sm:$0xff]
        %v813 = vld [vmem:[#allocation4 + $0x8] sm:$0xff]
        %v814 = vpack.c.bf16 %v811, %v810
        %v815 = vld [vmem:[%s514] sm:$0xf]
        %v816 = vld [vmem:[%s514 + $0x4] sm:$0xf]
        %v817 = vld [vmem:[%s514 + $0x8] sm:$0xf]
        %v818 = vld [vmem:[%s514 + $0xc] sm:$0xf]
        %v819 = vld [vmem:[%s514 + $0x10] sm:$0xf]
        %v820 = vld [vmem:[%s514 + $0x14] sm:$0xf]
        %v821 = vld [vmem:[%s514 + $0x18] sm:$0xf]
        %v822 = vld [vmem:[%s514 + $0x1c] sm:$0xf]
        %v823 = vld [vmem:[%s514 + $0x20] sm:$0xf]
        %v824 = vld [vmem:[%s514 + $0x24] sm:$0xf]
        %v825 = vld [vmem:[%s514 + $0x28] sm:$0xf]
        %v826 = vld [vmem:[%s514 + $0x2c] sm:$0xf]
        %v827 = vld [vmem:[%s514 + $0x30] sm:$0xf]
        %v828 = vld [vmem:[%s514 + $0x34] sm:$0xf]
        %v829 = vld [vmem:[%s514 + $0x38] sm:$0xf]
        %v830 = vld [vmem:[%s514 + $0x3c] sm:$0xf]
        %v847 = vunpack.c.l.b16 %v815
        %v848 = vunpack.c.l.b16 %v816
        %v849 = vunpack.c.l.b16 %v817
        %v850 = vunpack.c.l.b16 %v818
        %v851 = vunpack.c.l.b16 %v819
        %v852 = vunpack.c.l.b16 %v820
        %v853 = vunpack.c.l.b16 %v821
        %v854 = vunpack.c.l.b16 %v822
        %v855 = vunpack.c.l.b16 %v823
        %v856 = vunpack.c.l.b16 %v824
        %v857 = vunpack.c.l.b16 %v825
        %v858 = vunpack.c.l.b16 %v826
        %v859 = vunpack.c.l.b16 %v827
        %v860 = vunpack.c.l.b16 %v828
        %v861 = vunpack.c.l.b16 %v829
        %v862 = vunpack.c.l.b16 %v830
        %v863 = vpack.c.b16 %v848, %v847
        %v864 = vpack.c.b16 %v850, %v849
        %v865 = vpack.c.b16 %v852, %v851
        %v866 = vpack.c.b16 %v854, %v853
        %v867 = vpack.c.b16 %v856, %v855
        %v868 = vpack.c.b16 %v858, %v857
        %v869 = vpack.c.b16 %v860, %v859
        %v870 = vpack.c.b16 %v862, %v861
        %879 = vmatprep.subr.bf16.mxu0 0
        %880 = vmatpush1.bf16.msra.mxu0 %v863
        %881 = vmatprep.subr.bf16.mxu0 0
        %882 = vmatpush1.bf16.msra.mxu0 %v864
        %883 = vmatprep.subr.bf16.mxu0 0
        %884 = vmatpush1.bf16.msra.mxu0 %v865
        %885 = vmatprep.subr.bf16.mxu0 0
        %886 = vmatpush1.bf16.msra.mxu0 %v866
        %887 = vmatprep.subr.bf16.mxu0 0
        %888 = vmatpush1.bf16.msra.mxu0 %v867
        %889 = vmatprep.subr.bf16.mxu0 0
        %890 = vmatpush1.bf16.msra.mxu0 %v868
        %891 = vmatprep.subr.bf16.mxu0 0
        %892 = vmatpush1.bf16.msra.mxu0 %v869
        %893 = vmatprep.subr.bf16.mxu0 0
        %894 = vmatpush1.bf16.msra.mxu0 %v870
        %895 = vmatprep.subr.bf16.mxu0 0
        %896 = vmatpush1.bf16.msra.mxu0 0
        %897 = vmatprep.subr.bf16.mxu0 0
        %898 = vmatpush1.bf16.msra.mxu0 0
        %899 = vmatprep.subr.bf16.mxu0 0
        %900 = vmatpush1.bf16.msra.mxu0 0
        %901 = vmatprep.subr.bf16.mxu0 0
        %902 = vmatpush1.bf16.msra.mxu0 0
        %903 = vmatprep.subr.bf16.mxu0 0
        %904 = vmatpush1.bf16.msra.mxu0 0
        %905 = vmatprep.subr.bf16.mxu0 0
        %906 = vmatpush1.bf16.msra.mxu0 0
        %907 = vmatprep.subr.bf16.mxu0 0
        %908 = vmatpush1.bf16.msra.mxu0 0
        %909 = vmatprep.subr.bf16.mxu0 0
        %910 = vmatpush1.bf16.msra.mxu0 0
        %911 = vmatprep.mubr.bf16.mxu0 0
        %912 = vmatmul.mubr.bf16.gmra.mrb[0].mxu0 %v814
        %v913 = vpop.f32.mrb[0].mxu0
        %v914 = vadd.f32 0.0, %v913
        %v915 = vpop.f32.mrb[0].mxu0
        %v916 = vpop.f32.mrb[0].mxu0
        %v917 = vadd.f32 0.0, %v916
        %v918 = vpop.f32.mrb[0].mxu0
        %919 = vdwg.mxu0
        %v920 = vadd.f32 %v812, %v914
        %v921 = vadd.f32 %v813, %v917
        %922 = vst.msk [vmem:[#allocation4] sm:$0xff] %vm713, %v920
        %923 = vst.msk [vmem:[#allocation4 + $0x8] sm:$0xff] %vm713, %v921
        %p924 = scmp.eq.s32.totalorder %s26, 1
        // Predicated region
        $region106: #{gpt_forward.9} parent=96 // pred_check
          %p925 = pneg %p924
        $region107: #{gpt_forward.9} parent=96 // pred_check_branch
          %927 = sbr.rel (%p925) target = $region109
        $region108: #{gpt_forward.9} parent=96 // pred_region
          %v928 = vld [vmem:[#allocation2] sm:$0xff]
          %v929 = vld [vmem:[#allocation2 + $0x8] sm:$0xff]
          %v930 = vld [vmem:[#allocation4] sm:$0xff]
          %v931 = vld [vmem:[#allocation4 + $0x8] sm:$0xff]
          %v932 = vadd.f32 %v928, %v930
          %v933 = vadd.f32 %v929, %v931
          %v934 = vld [vmem:[%s9] sm:$0x1]
          %v936 = vlaneseq
          %v937 = vshrl.u32 %v936, 7
          %v938 = vsub.s32 0, %v937
          %v939 = vrot.slane %v934, %v938
          %v941 = vadd.f32 %v932, %v939
          %v942 = vadd.f32 %v933, %v939
          %943 = vst.msk [vmem:[%s520] sm:$0xff] %vm713, %v941
          %944 = vst.msk [vmem:[%s520 + $0x8] sm:$0xff] %vm713, %v942
        $region109: #{gpt_forward.9} parent=96 // pred_fallthru
          _
        %s945 = smul.u32 2, %s25
        %p946 = scmp.lt.s32.totalorder %s945, 7
        %s947 = scalar_select %p946, %s945, 7
        %s948 = smul.addr %s947, 8
        %s949 = scalar_lea.vmem %s10, %s948
        // Predicated region
        $region110: #{gpt_forward.9} parent=96 // pred_check
          %p950 = pneg %p286
        $region111: #{gpt_forward.9} parent=96 // pred_check_branch
          %952 = sbr.rel (%p950) target = $region113
        $region112: #{gpt_forward.9} parent=96 // pred_region
          %s953 = smul.u32 2, %s25
        $region113: #{gpt_forward.9} parent=96 // pred_fallthru
          _
      $region97: #{gpt_forward.9} parent=5 // pred_fallthru
        _
      %p954 = scmp.le.s32.totalorder 2, %s16
      // Predicated region
      $region114: #{gpt_forward.9} parent=5 // pred_check
        %p955 = pneg %p954
      $region115: #{gpt_forward.9} parent=5 // pred_check_branch
        %957 = sbr.rel (%p955) target = $region117
      $region116: #{gpt_forward.9} parent=5 // pred_region
        %s958 = ssub.s32 %s16, 2
        // Predicated region
        $region118: #{gpt_forward.9} parent=116 // pred_check
          %p959 = pneg %p292
        $region119: #{gpt_forward.9} parent=116 // pred_check_branch
          %961 = sbr.rel (%p959) target = $region121
        $region120: #{gpt_forward.9} parent=116 // pred_region
          %s962 = smul.u32 2, %s27
          %p963 = scmp.lt.s32.totalorder %s962, 7
          %s964 = scalar_select %p963, %s962, 7
          %s965 = smul.addr %s964, 8
          %s966 = scalar_lea.vmem %s10, %s965
        $region121: #{gpt_forward.9} parent=116 // pred_fallthru
          _
      $region117: #{gpt_forward.9} parent=5 // pred_fallthru
        _
    $region6: #{gpt_forward.9} parent=1 // loop_footer
      %s20 = sadd.s32 1, %s16
    $region7: #{gpt_forward.9} parent=1 // loop_footer_branch
      %15 = sbr.rel target = $region3
    $region8: #{gpt_forward.9} parent=1 // loop_exit
      _

</llo_original>
